<compile_context>
chip_gen: v6e
topology: v6e:2x2x1
jax: 0.10.0
libtpu: 0.0.40
codegen_flags: <defaults>
</compile_context>

<pallas_src>
import functools

import jax
import jax.numpy as jnp
from jax import lax
from jax.experimental import pallas as pl
from jax.experimental.pallas import tpu as pltpu

BN_EPS = 1e-5
LANE = 128


def _round_up(x, m):
    return (x + m - 1) // m * m


# --------------------------------------------------------------------------
# pass 1: conv1 (3x3, stride folded via phase decomposition) and, if present,
#         the 1x1 projection conv.  Emits raw conv outputs + per-image stats.
# --------------------------------------------------------------------------
def _make_pass1_kernel(stride, Ho, Wo, Cinp, Coutp, has_proj):
    M = Ho * Wo

    def tap(xph_ref, kh, kw):
        p = (kh % stride) * stride + (kw % stride)
        r0, c0 = kh // stride, kw // stride
        return xph_ref[p, 0, r0:r0 + Ho, c0:c0 + Wo, :]        # (Ho, Wo, Cinp) bf16

    def stats_block(acc):
        s = jnp.sum(acc, axis=0, keepdims=True)
        sq = jnp.sum(acc * acc, axis=0, keepdims=True)
        z = jnp.zeros((6, Coutp), jnp.float32)
        return jnp.concatenate([s, sq, z], axis=0).reshape(1, 8, Coutp)

    def kernel(xph_ref, w1_ref, *rest):
        if has_proj:
            ws_ref, h1_ref, s1_ref, sc_ref, ss_ref = rest
        else:
            h1_ref, s1_ref = rest

        # ---- conv1: gather 9 taps, concat on the K axis, single MXU matmul
        taps = [tap(xph_ref, kh, kw) for kh in range(3) for kw in range(3)]
        cols = jnp.concatenate(taps, axis=-1)                  # (Ho, Wo, 9*Cinp) bf16
        # reshape in f32 (layout-clean: Wo % 8 == 0, 128 lanes), cast back for MXU
        cols = cols.astype(jnp.float32).reshape(M, 9 * Cinp).astype(jnp.bfloat16)
        acc = jnp.dot(cols, w1_ref[...], preferred_element_type=jnp.float32)

        h1_ref[...] = acc.reshape(1, Ho, Wo, Coutp)
        s1_ref[...] = stats_block(acc)

        if has_proj:
            # 1x1 conv, stride s  ==  matmul on the centre tap
            ctr = tap(xph_ref, 1, 1)
            ctr = ctr.astype(jnp.float32).reshape(M, Cinp).astype(jnp.bfloat16)
            accs = jnp.dot(ctr, ws_ref[...], preferred_element_type=jnp.float32)
            sc_ref[...] = accs.reshape(1, Ho, Wo, Coutp)
            ss_ref[...] = stats_block(accs)

    return kernel


# --------------------------------------------------------------------------
# pass 2: BN1 (precomputed scale/shift) + ReLU, halo-only spatial pad, conv2.
# --------------------------------------------------------------------------
def _make_pass2_kernel(Ho, Wo, Coutp):
    M = Ho * Wo

    def kernel(h1_ref, sc1_ref, sh1_ref, w2_ref, h2_ref, s2_ref, h1p_ref):
        # BN1 + ReLU in f32
        act = jnp.maximum(h1_ref[...] * sc1_ref[...] + sh1_ref[...], 0.0)

        # zero ONLY the halo, then write the interior
        zrow = jnp.zeros((1, 1, Wo + 2, Coutp), jnp.float32)
        zcol = jnp.zeros((1, Ho, 1, Coutp), jnp.float32)
        h1p_ref[:, 0:1, :, :] = zrow
        h1p_ref[:, Ho + 1:Ho + 2, :, :] = zrow
        h1p_ref[:, 1:Ho + 1, 0:1, :] = zcol
        h1p_ref[:, 1:Ho + 1, Wo + 1:Wo + 2, :] = zcol
        h1p_ref[:, 1:Ho + 1, 1:Wo + 1, :] = act

        # conv2: one im2col concat + one MXU matmul
        taps = [h1p_ref[:, kh:kh + Ho, kw:kw + Wo, :]
                for kh in range(3) for kw in range(3)]
        cols = jnp.concatenate(taps, axis=-1).reshape(M, 9 * Coutp)
        acc = jnp.dot(cols.astype(jnp.bfloat16), w2_ref[...],
                      preferred_element_type=jnp.float32)

        h2_ref[...] = acc.reshape(1, Ho, Wo, Coutp)
        s = jnp.sum(acc, axis=0, keepdims=True)
        sq = jnp.sum(acc * acc, axis=0, keepdims=True)
        s2_ref[...] = jnp.concatenate(
            [s, sq, jnp.zeros((6, Coutp), jnp.float32)], axis=0).reshape(1, 8, Coutp)

    return kernel


# --------------------------------------------------------------------------
# pass 3: BN2 + shortcut BN + residual add + ReLU (pure elementwise, lane-dense)
# --------------------------------------------------------------------------
def _pass3_kernel(h2_ref, short_ref, sc2_ref, sh2_ref, scs_ref, shs_ref, o_ref):
    left = h2_ref[...] * sc2_ref[...] + sh2_ref[...]
    short = short_ref[...] * scs_ref[...] + shs_ref[...]
    o_ref[...] = jnp.maximum(left + short, 0.0)


# --------------------------------------------------------------------------
# wrapper
# --------------------------------------------------------------------------
@functools.partial(jax.jit, static_argnames=("stride",))
def res_block_forward(x_nchw, params, stride):
    """Pallas ResBlock forward. x_nchw: [N, Cin, H, W] f32 -> [N, Cout, Ho, Wo]."""
    N, Cin, H, W = x_nchw.shape
    Cout = params["w1"].shape[0]
    has_proj = (stride != 1) or (Cin != Cout)
    Ho = (H + 2 - 3) // stride + 1
    Wo = (W + 2 - 3) // stride + 1
    Mtot = N * Ho * Wo
    Cinp = _round_up(Cin, LANE)
    Coutp = _round_up(Cout, LANE)
    ss = stride * stride

    # ---- single layout conversion: NCHW -> NHWC, lane-pad channels to 128
    x = jnp.transpose(x_nchw, (0, 2, 3, 1)).astype(jnp.float32)
    x = jnp.pad(x, ((0, 0), (0, 0), (0, 0), (0, Cinp - Cin)))
    xpad = jnp.pad(x, ((0, 0), (1, 1), (1, 1), (0, 0)))

    # ---- phase decomposition: stride-s conv taps become contiguous slices
    Hps = Ho + 2 // stride
    Wps = Wo + 2 // stride
    phases = []
    for ph in range(stride):
        for pw in range(stride):
            xp = xpad[:, ph::stride, pw::stride, :]
            xp = xp[:, :min(xp.shape[1], Hps), :min(xp.shape[2], Wps), :]
            xp = jnp.pad(xp, ((0, 0), (0, Hps - xp.shape[1]),
                              (0, Wps - xp.shape[2]), (0, 0)))
            phases.append(xp)
    x_phase = jnp.stack(phases, axis=0).astype(jnp.bfloat16)   # [ss,N,Hps,Wps,Cinp]

    # ---- parameters: OIHW -> [9*Cin_pad, Cout_pad] bf16 (taps folded onto K)
    def fold_w(w, cin, cinp):
        hwio = jnp.transpose(w, (2, 3, 1, 0)).astype(jnp.float32)
        hwio = jnp.pad(hwio, ((0, 0), (0, 0), (0, cinp - cin), (0, Coutp - Cout)))
        return hwio.reshape(9 * cinp, Coutp).astype(jnp.bfloat16)

    def pad_vec(v):
        return jnp.pad(v.astype(jnp.float32), (0, Coutp - Cout))

    w1f = fold_w(params["w1"], Cin, Cinp)
    w2f = fold_w(params["w2"], Cout, Coutp)
    g1, b1 = pad_vec(params["g1"]), pad_vec(params["b1"])
    g2, b2 = pad_vec(params["g2"]), pad_vec(params["b2"])

    cparams = pltpu.CompilerParams(
        dimension_semantics=("parallel",),          # shards across v7x's 2 TCs
        vmem_limit_bytes=48 * 1024 * 1024)          # explicit budget (< v7x 64MiB)

    # ---- block specs (all lane-dense: last dim = 128)
    xph_spec = pl.BlockSpec((ss, 1, Hps, Wps, Cinp), lambda n: (0, n, 0, 0, 0))
    h_spec = pl.BlockSpec((1, Ho, Wo, Coutp), lambda n: (n, 0, 0, 0))
    st_spec = pl.BlockSpec((1, 8, Coutp), lambda n: (n, 0, 0))
    vec_spec = pl.BlockSpec((1, Coutp), lambda n: (0, 0))
    w1_spec = pl.BlockSpec((9 * Cinp, Coutp), lambda n: (0, 0))
    w2_spec = pl.BlockSpec((9 * Coutp, Coutp), lambda n: (0, 0))
    ws_spec = pl.BlockSpec((Cinp, Coutp), lambda n: (0, 0))

    # ---- pass 1: conv1 (+ shortcut conv) raw + per-image stats
    p1_inputs = [x_phase, w1f]
    p1_in_specs = [xph_spec, w1_spec]
    p1_out_shape = [jax.ShapeDtypeStruct((N, Ho, Wo, Coutp), jnp.float32),
                    jax.ShapeDtypeStruct((N, 8, Coutp), jnp.float32)]
    p1_out_specs = [h_spec, st_spec]
    if has_proj:
        ws = jnp.transpose(params["ws"].reshape(Cout, Cin), (1, 0)).astype(jnp.float32)
        ws = jnp.pad(ws, ((0, Cinp - Cin), (0, Coutp - Cout))).astype(jnp.bfloat16)
        p1_inputs.append(ws)
        p1_in_specs.append(ws_spec)
        p1_out_shape += [jax.ShapeDtypeStruct((N, Ho, Wo, Coutp), jnp.float32),
                         jax.ShapeDtypeStruct((N, 8, Coutp), jnp.float32)]
        p1_out_specs += [h_spec, st_spec]

    p1_out = pl.pallas_call(
        _make_pass1_kernel(stride, Ho, Wo, Cinp, Coutp, has_proj),
        grid=(N,), in_specs=p1_in_specs, out_specs=p1_out_specs,
        out_shape=p1_out_shape, compiler_params=cparams)(*p1_inputs)
    if has_proj:
        h1_raw, st1, sraw, sts = p1_out
    else:
        h1_raw, st1 = p1_out

    # ---- global BN affine (training-mode batch stats, biased variance)
    def bn_affine(stats, gamma, beta):
        tot = jnp.sum(stats, axis=0)                 # [8, Coutp]
        mean = tot[0] / Mtot
        var = jnp.maximum(tot[1] / Mtot - mean * mean, 0.0)
        scale = gamma * lax.rsqrt(var + BN_EPS)
        shift = beta - mean * scale
        return scale.reshape(1, Coutp), shift.reshape(1, Coutp)

    sc1, sh1 = bn_affine(st1, g1, b1)

    # ---- pass 2: BN1 + ReLU + conv2 raw + stats
    h2_raw, st2 = pl.pallas_call(
        _make_pass2_kernel(Ho, Wo, Coutp),
        grid=(N,),
        in_specs=[h_spec, vec_spec, vec_spec, w2_spec],
        out_specs=[h_spec, st_spec],
        out_shape=[jax.ShapeDtypeStruct((N, Ho, Wo, Coutp), jnp.float32),
                   jax.ShapeDtypeStruct((N, 8, Coutp), jnp.float32)],
        scratch_shapes=[pltpu.VMEM((1, Ho + 2, Wo + 2, Coutp), jnp.float32)],
        compiler_params=cparams)(h1_raw, sc1, sh1, w2f)
    sc2, sh2 = bn_affine(st2, g2, b2)

    # ---- shortcut branch affine
    if has_proj:
        scs, shs = bn_affine(sts, pad_vec(params["gs"]), pad_vec(params["bs"]))
        short = sraw
    else:
        short = x                                     # identity (Ho=H, Wo=W, Cinp=Coutp)
        scs = jnp.ones((1, Coutp), jnp.float32)
        shs = jnp.zeros((1, Coutp), jnp.float32)

    # ---- pass 3: BN2 + shortcut BN + add + ReLU
    out_full = pl.pallas_call(
        _pass3_kernel,
        grid=(N,),
        in_specs=[h_spec, h_spec, vec_spec, vec_spec, vec_spec, vec_spec],
        out_specs=h_spec,
        out_shape=jax.ShapeDtypeStruct((N, Ho, Wo, Coutp), jnp.float32),
        compiler_params=cparams)(h2_raw, short, sc2, sh2, scs, shs)

    out = out_full[:, :, :, :Cout]
    return jnp.transpose(out, (0, 3, 1, 2))           # back to NCHW


# ----------------------------- reference (pure JAX, f32) ---------------------
def res_block_reference(x_nchw, params, stride):
    def conv(x, w, s, pad):
        return lax.conv_general_dilated(
            x, w, (s, s), [(pad, pad), (pad, pad)],
            dimension_numbers=("NCHW", "OIHW", "NCHW"))

    def bn(x, g, b):
        mean = jnp.mean(x, axis=(0, 2, 3), keepdims=True)
        var = jnp.mean(jnp.square(x - mean), axis=(0, 2, 3), keepdims=True)
        return ((x - mean) / jnp.sqrt(var + BN_EPS)) * g.reshape(1, -1, 1, 1) \
            + b.reshape(1, -1, 1, 1)

    Cin = x_nchw.shape[1]
    Cout = params["w1"].shape[0]
    out = jax.nn.relu(bn(conv(x_nchw, params["w1"], stride, 1),
                         params["g1"], params["b1"]))
    out = bn(conv(out, params["w2"], 1, 1), params["g2"], params["b2"])
    if stride != 1 or Cin != Cout:
        sc = bn(conv(x_nchw, params["ws"], stride, 0), params["gs"], params["bs"])
    else:
        sc = x_nchw
    return jax.nn.relu(out + sc)


# ----------------------------- deterministic params --------------------------
def init_params(key, cin, cout, stride):
    ks = jax.random.split(key, 9)
    p = {
        "w1": 0.1 * jax.random.normal(ks[0], (cout, cin, 3, 3), jnp.float32),
        "g1": 1.0 + 0.1 * jax.random.normal(ks[1], (cout,), jnp.float32),
        "b1": 0.1 * jax.random.normal(ks[2], (cout,), jnp.float32),
        "w2": 0.1 * jax.random.normal(ks[3], (cout, cout, 3, 3), jnp.float32),
        "g2": 1.0 + 0.1 * jax.random.normal(ks[4], (cout,), jnp.float32),
        "b2": 0.1 * jax.random.normal(ks[5], (cout,), jnp.float32),
    }
    if stride != 1 or cin != cout:
        p["ws"] = 0.1 * jax.random.normal(ks[6], (cout, cin, 1, 1), jnp.float32)
        p["gs"] = 1.0 + 0.1 * jax.random.normal(ks[7], (cout,), jnp.float32)
        p["bs"] = 0.1 * jax.random.normal(ks[8], (cout,), jnp.float32)
    return p


if __name__ == "__main__":
    key = jax.random.PRNGKey(0)
    kx, kp1, kp2 = jax.random.split(key, 3)
    x = jax.random.normal(kx, (2, 4, 16, 16), jnp.float32)

    # bf16 MXU operands vs. f32 reference -> tolerance reflects bf16 rounding.
    MAX_TOL, MEAN_TOL = 1e-1, 2.5e-2

    # Case 1: projection shortcut (stride=2, inchannel=4 -> outchannel=8)
    params_proj = init_params(kp1, 4, 8, stride=2)
    out_p = jax.block_until_ready(res_block_forward(x, params_proj, stride=2))
    ref_p = res_block_reference(x, params_proj, 2)
    assert out_p.shape == (2, 8, 8, 8)
    err = jnp.abs(out_p - ref_p)
    assert float(jnp.max(err)) < MAX_TOL and float(jnp.mean(err)) < MEAN_TOL

    # Case 2: identity shortcut (stride=1, inchannel == outchannel == 4)
    params_id = init_params(kp2, 4, 4, stride=1)
    out_i = jax.block_until_ready(res_block_forward(x, params_id, stride=1))
    ref_i = res_block_reference(x, params_id, 1)
    assert out_i.shape == (2, 4, 16, 16)
    err = jnp.abs(out_i - ref_i)
    assert float(jnp.max(err)) < MAX_TOL and float(jnp.mean(err)) < MEAN_TOL

    print("KERNEL_OK")
</pallas_src>

<mosaic_0001>
module attributes {stable_mosaic.version = 11 : i64} {
  func.func @kernel(%arg0: i32, %arg1: memref<4x1x9x9x128xbf16, #tpu.memory_space<vmem>>, %arg2: memref<1152x128xbf16, #tpu.memory_space<vmem>>, %arg3: memref<128x128xbf16, #tpu.memory_space<vmem>>, %arg4: memref<1x8x8x128xf32, #tpu.memory_space<vmem>>, %arg5: memref<1x8x128xf32, #tpu.memory_space<vmem>>, %arg6: memref<1x8x8x128xf32, #tpu.memory_space<vmem>>, %arg7: memref<1x8x128xf32, #tpu.memory_space<vmem>>) attributes {dimension_semantics = [#tpu.dimension_semantics<parallel>], iteration_bounds = array<i64: 2>, scalar_prefetch = 0 : i64, scratch_operands = 0 : i64, tpu.core_type = #tpu.core_type<tc>, window_params = [{transform_indices = @transform_0, window_bounds = array<i64: 4, 1, 9, 9, 128>}, {pipeline_mode = #tpu.pipeline_mode<synchronous>, transform_indices = @transform_1, window_bounds = array<i64: 1152, 128>}, {pipeline_mode = #tpu.pipeline_mode<synchronous>, transform_indices = @transform_2, window_bounds = array<i64: 128, 128>}, {transform_indices = @transform_3, window_bounds = array<i64: 1, 8, 8, 128>}, {transform_indices = @transform_4, window_bounds = array<i64: 1, 8, 128>}, {transform_indices = @transform_5, window_bounds = array<i64: 1, 8, 8, 128>}, {transform_indices = @transform_6, window_bounds = array<i64: 1, 8, 128>}]} {
    %c0 = arith.constant 0 : index
    %c0_0 = arith.constant 0 : index
    %c0_1 = arith.constant 0 : index
    %c0_2 = arith.constant 0 : index
    %c0_3 = arith.constant 0 : index
    %0 = vector.load %arg1[%c0, %c0_0, %c0_1, %c0_2, %c0_3] : memref<4x1x9x9x128xbf16, #tpu.memory_space<vmem>>, vector<1x1x8x8x128xbf16>
    %1 = vector.shape_cast %0 : vector<1x1x8x8x128xbf16> to vector<8x8x128xbf16>
    %c1 = arith.constant 1 : index
    %c0_4 = arith.constant 0 : index
    %c0_5 = arith.constant 0 : index
    %c0_6 = arith.constant 0 : index
    %c0_7 = arith.constant 0 : index
    %2 = vector.load %arg1[%c1, %c0_4, %c0_5, %c0_6, %c0_7] : memref<4x1x9x9x128xbf16, #tpu.memory_space<vmem>>, vector<1x1x8x8x128xbf16>
    %3 = vector.shape_cast %2 : vector<1x1x8x8x128xbf16> to vector<8x8x128xbf16>
    %c0_8 = arith.constant 0 : index
    %c0_9 = arith.constant 0 : index
    %c0_10 = arith.constant 0 : index
    %c1_11 = arith.constant 1 : index
    %c0_12 = arith.constant 0 : index
    %4 = vector.load %arg1[%c0_8, %c0_9, %c0_10, %c1_11, %c0_12] : memref<4x1x9x9x128xbf16, #tpu.memory_space<vmem>>, vector<1x1x8x8x128xbf16>
    %5 = vector.shape_cast %4 : vector<1x1x8x8x128xbf16> to vector<8x8x128xbf16>
    %c2 = arith.constant 2 : index
    %c0_13 = arith.constant 0 : index
    %c0_14 = arith.constant 0 : index
    %c0_15 = arith.constant 0 : index
    %c0_16 = arith.constant 0 : index
    %6 = vector.load %arg1[%c2, %c0_13, %c0_14, %c0_15, %c0_16] : memref<4x1x9x9x128xbf16, #tpu.memory_space<vmem>>, vector<1x1x8x8x128xbf16>
    %7 = vector.shape_cast %6 : vector<1x1x8x8x128xbf16> to vector<8x8x128xbf16>
    %c3 = arith.constant 3 : index
    %c0_17 = arith.constant 0 : index
    %c0_18 = arith.constant 0 : index
    %c0_19 = arith.constant 0 : index
    %c0_20 = arith.constant 0 : index
    %8 = vector.load %arg1[%c3, %c0_17, %c0_18, %c0_19, %c0_20] : memref<4x1x9x9x128xbf16, #tpu.memory_space<vmem>>, vector<1x1x8x8x128xbf16>
    %9 = vector.shape_cast %8 : vector<1x1x8x8x128xbf16> to vector<8x8x128xbf16>
    %c2_21 = arith.constant 2 : index
    %c0_22 = arith.constant 0 : index
    %c0_23 = arith.constant 0 : index
    %c1_24 = arith.constant 1 : index
    %c0_25 = arith.constant 0 : index
    %10 = vector.load %arg1[%c2_21, %c0_22, %c0_23, %c1_24, %c0_25] : memref<4x1x9x9x128xbf16, #tpu.memory_space<vmem>>, vector<1x1x8x8x128xbf16>
    %11 = vector.shape_cast %10 : vector<1x1x8x8x128xbf16> to vector<8x8x128xbf16>
    %c0_26 = arith.constant 0 : index
    %c0_27 = arith.constant 0 : index
    %c1_28 = arith.constant 1 : index
    %c0_29 = arith.constant 0 : index
    %c0_30 = arith.constant 0 : index
    %12 = vector.load %arg1[%c0_26, %c0_27, %c1_28, %c0_29, %c0_30] : memref<4x1x9x9x128xbf16, #tpu.memory_space<vmem>>, vector<1x1x8x8x128xbf16>
    %13 = vector.shape_cast %12 : vector<1x1x8x8x128xbf16> to vector<8x8x128xbf16>
    %c1_31 = arith.constant 1 : index
    %c0_32 = arith.constant 0 : index
    %c1_33 = arith.constant 1 : index
    %c0_34 = arith.constant 0 : index
    %c0_35 = arith.constant 0 : index
    %14 = vector.load %arg1[%c1_31, %c0_32, %c1_33, %c0_34, %c0_35] : memref<4x1x9x9x128xbf16, #tpu.memory_space<vmem>>, vector<1x1x8x8x128xbf16>
    %15 = vector.shape_cast %14 : vector<1x1x8x8x128xbf16> to vector<8x8x128xbf16>
    %c0_36 = arith.constant 0 : index
    %c0_37 = arith.constant 0 : index
    %c1_38 = arith.constant 1 : index
    %c1_39 = arith.constant 1 : index
    %c0_40 = arith.constant 0 : index
    %16 = vector.load %arg1[%c0_36, %c0_37, %c1_38, %c1_39, %c0_40] : memref<4x1x9x9x128xbf16, #tpu.memory_space<vmem>>, vector<1x1x8x8x128xbf16>
    %17 = vector.shape_cast %16 : vector<1x1x8x8x128xbf16> to vector<8x8x128xbf16>
    %18 = tpu.concatenate %1, %3, %5, %7, %9, %11, %13, %15, %17 in 2 : vector<8x8x128xbf16>, vector<8x8x128xbf16>, vector<8x8x128xbf16>, vector<8x8x128xbf16>, vector<8x8x128xbf16>, vector<8x8x128xbf16>, vector<8x8x128xbf16>, vector<8x8x128xbf16>, vector<8x8x128xbf16> -> vector<8x8x1152xbf16>
    %19 = arith.extf %18 : vector<8x8x1152xbf16> to vector<8x8x1152xf32>
    %20 = vector.shape_cast %19 : vector<8x8x1152xf32> to vector<64x1152xf32>
    %21 = arith.truncf %20 : vector<64x1152xf32> to vector<64x1152xbf16>
    %c0_41 = arith.constant 0 : index
    %c0_42 = arith.constant 0 : index
    %22 = vector.load %arg2[%c0_41, %c0_42] : memref<1152x128xbf16, #tpu.memory_space<vmem>>, vector<1152x128xbf16>
    %cst = arith.constant dense<0.000000e+00> : vector<64x128xf32>
    %23 = tpu.matmul %21, %22, %cst {dimension_numbers = #tpu.dot_dimension_numbers<[1], [0], [0], [1], [0, 0, 1, 1], [], []>} : vector<64x1152xbf16>, vector<1152x128xbf16>, vector<64x128xf32> -> vector<64x128xf32>
    %24 = vector.shape_cast %23 : vector<64x128xf32> to vector<1x8x8x128xf32>
    %c0_43 = arith.constant 0 : index
    %c0_44 = arith.constant 0 : index
    %c0_45 = arith.constant 0 : index
    %c0_46 = arith.constant 0 : index
    %25 = vector.load %arg4[%c0_43, %c0_44, %c0_45, %c0_46] : memref<1x8x8x128xf32, #tpu.memory_space<vmem>>, vector<1x8x8x128xf32>
    tpu.vector_store %arg4[%c0_43, %c0_44, %c0_45, %c0_46], %24 {strides = array<i32>} : memref<1x8x8x128xf32, #tpu.memory_space<vmem>>, vector<1x8x8x128xf32>,
    %cst_47 = arith.constant dense<0.000000e+00> : vector<128xf32>
    %26 = vector.multi_reduction <add>, %23, %cst_47 [0] : vector<64x128xf32> to vector<128xf32>
    %27 = vector.shape_cast %26 : vector<128xf32> to vector<1x128xf32>
    %28 = arith.mulf %23, %23 : vector<64x128xf32>
    %cst_48 = arith.constant dense<0.000000e+00> : vector<128xf32>
    %29 = vector.multi_reduction <add>, %28, %cst_48 [0] : vector<64x128xf32> to vector<128xf32>
    %30 = vector.shape_cast %29 : vector<128xf32> to vector<1x128xf32>
    %cst_49 = arith.constant 0.000000e+00 : f32
    %31 = vector.broadcast %cst_49 : f32 to vector<6x128xf32>
    %32 = tpu.concatenate %27, %30, %31 in 0 : vector<1x128xf32>, vector<1x128xf32>, vector<6x128xf32> -> vector<8x128xf32>
    %33 = vector.shape_cast %32 : vector<8x128xf32> to vector<1x8x128xf32>
    %c0_50 = arith.constant 0 : index
    %c0_51 = arith.constant 0 : index
    %c0_52 = arith.constant 0 : index
    %34 = vector.load %arg5[%c0_50, %c0_51, %c0_52] : memref<1x8x128xf32, #tpu.memory_space<vmem>>, vector<1x8x128xf32>
    tpu.vector_store %arg5[%c0_50, %c0_51, %c0_52], %33 {strides = array<i32>} : memref<1x8x128xf32, #tpu.memory_space<vmem>>, vector<1x8x128xf32>,
    %c3_53 = arith.constant 3 : index
    %c0_54 = arith.constant 0 : index
    %c0_55 = arith.constant 0 : index
    %c0_56 = arith.constant 0 : index
    %c0_57 = arith.constant 0 : index
    %35 = vector.load %arg1[%c3_53, %c0_54, %c0_55, %c0_56, %c0_57] : memref<4x1x9x9x128xbf16, #tpu.memory_space<vmem>>, vector<1x1x8x8x128xbf16>
    %36 = vector.shape_cast %35 : vector<1x1x8x8x128xbf16> to vector<8x8x128xbf16>
    %37 = arith.extf %36 : vector<8x8x128xbf16> to vector<8x8x128xf32>
    %38 = vector.shape_cast %37 : vector<8x8x128xf32> to vector<64x128xf32>
    %39 = arith.truncf %38 : vector<64x128xf32> to vector<64x128xbf16>
    %c0_58 = arith.constant 0 : index
    %c0_59 = arith.constant 0 : index
    %40 = vector.load %arg3[%c0_58, %c0_59] : memref<128x128xbf16, #tpu.memory_space<vmem>>, vector<128x128xbf16>
    %cst_60 = arith.constant dense<0.000000e+00> : vector<64x128xf32>
    %41 = tpu.matmul %39, %40, %cst_60 {dimension_numbers = #tpu.dot_dimension_numbers<[1], [0], [0], [1], [0, 0, 1, 1], [], []>} : vector<64x128xbf16>, vector<128x128xbf16>, vector<64x128xf32> -> vector<64x128xf32>
    %42 = vector.shape_cast %41 : vector<64x128xf32> to vector<1x8x8x128xf32>
    %c0_61 = arith.constant 0 : index
    %c0_62 = arith.constant 0 : index
    %c0_63 = arith.constant 0 : index
    %c0_64 = arith.constant 0 : index
    %43 = vector.load %arg6[%c0_61, %c0_62, %c0_63, %c0_64] : memref<1x8x8x128xf32, #tpu.memory_space<vmem>>, vector<1x8x8x128xf32>
    tpu.vector_store %arg6[%c0_61, %c0_62, %c0_63, %c0_64], %42 {strides = array<i32>} : memref<1x8x8x128xf32, #tpu.memory_space<vmem>>, vector<1x8x8x128xf32>,
    %cst_65 = arith.constant dense<0.000000e+00> : vector<128xf32>
    %44 = vector.multi_reduction <add>, %41, %cst_65 [0] : vector<64x128xf32> to vector<128xf32>
    %45 = vector.shape_cast %44 : vector<128xf32> to vector<1x128xf32>
    %46 = arith.mulf %41, %41 : vector<64x128xf32>
    %cst_66 = arith.constant dense<0.000000e+00> : vector<128xf32>
    %47 = vector.multi_reduction <add>, %46, %cst_66 [0] : vector<64x128xf32> to vector<128xf32>
    %48 = vector.shape_cast %47 : vector<128xf32> to vector<1x128xf32>
    %cst_67 = arith.constant 0.000000e+00 : f32
    %49 = vector.broadcast %cst_67 : f32 to vector<6x128xf32>
    %50 = tpu.concatenate %45, %48, %49 in 0 : vector<1x128xf32>, vector<1x128xf32>, vector<6x128xf32> -> vector<8x128xf32>
    %51 = vector.shape_cast %50 : vector<8x128xf32> to vector<1x8x128xf32>
    %c0_68 = arith.constant 0 : index
    %c0_69 = arith.constant 0 : index
    %c0_70 = arith.constant 0 : index
    %52 = vector.load %arg7[%c0_68, %c0_69, %c0_70] : memref<1x8x128xf32, #tpu.memory_space<vmem>>, vector<1x8x128xf32>
    tpu.vector_store %arg7[%c0_68, %c0_69, %c0_70], %51 {strides = array<i32>} : memref<1x8x128xf32, #tpu.memory_space<vmem>>, vector<1x8x128xf32>,
    return
  }
  func.func @transform_0(%arg0: i32) -> (i32, i32, i32, i32, i32) {
    %c0_i32 = arith.constant 0 : i32
    %c0_i32_0 = arith.constant 0 : i32
    %c0_i32_1 = arith.constant 0 : i32
    %c0_i32_2 = arith.constant 0 : i32
    %c0_i32_3 = arith.constant 0 : i32
    return %c0_i32, %arg0, %c0_i32_0, %c0_i32_1, %c0_i32_2 : i32, i32, i32, i32, i32
  }
  func.func @transform_1(%arg0: i32) -> (i32, i32) {
    %c0_i32 = arith.constant 0 : i32
    %c0_i32_0 = arith.constant 0 : i32
    %c0_i32_1 = arith.constant 0 : i32
    return %c0_i32, %c0_i32_0 : i32, i32
  }
  func.func @transform_2(%arg0: i32) -> (i32, i32) {
    %c0_i32 = arith.constant 0 : i32
    %c0_i32_0 = arith.constant 0 : i32
    %c0_i32_1 = arith.constant 0 : i32
    return %c0_i32, %c0_i32_0 : i32, i32
  }
  func.func @transform_3(%arg0: i32) -> (i32, i32, i32, i32) {
    %c0_i32 = arith.constant 0 : i32
    %c0_i32_0 = arith.constant 0 : i32
    %c0_i32_1 = arith.constant 0 : i32
    %c0_i32_2 = arith.constant 0 : i32
    return %arg0, %c0_i32, %c0_i32_0, %c0_i32_1 : i32, i32, i32, i32
  }
  func.func @transform_4(%arg0: i32) -> (i32, i32, i32) {
    %c0_i32 = arith.constant 0 : i32
    %c0_i32_0 = arith.constant 0 : i32
    %c0_i32_1 = arith.constant 0 : i32
    return %arg0, %c0_i32, %c0_i32_0 : i32, i32, i32
  }
  func.func @transform_5(%arg0: i32) -> (i32, i32, i32, i32) {
    %c0_i32 = arith.constant 0 : i32
    %c0_i32_0 = arith.constant 0 : i32
    %c0_i32_1 = arith.constant 0 : i32
    %c0_i32_2 = arith.constant 0 : i32
    return %arg0, %c0_i32, %c0_i32_0, %c0_i32_1 : i32, i32, i32, i32
  }
  func.func @transform_6(%arg0: i32) -> (i32, i32, i32) {
    %c0_i32 = arith.constant 0 : i32
    %c0_i32_0 = arith.constant 0 : i32
    %c0_i32_1 = arith.constant 0 : i32
    return %arg0, %c0_i32, %c0_i32_0 : i32, i32, i32
  }
}

module attributes {stable_mosaic.version = 11 : i64} {
  func.func @kernel(%arg0: i32, %arg1: memref<1x8x8x128xf32, #tpu.memory_space<vmem>>, %arg2: memref<1x128xf32, #tpu.memory_space<vmem>>, %arg3: memref<1x128xf32, #tpu.memory_space<vmem>>, %arg4: memref<1152x128xbf16, #tpu.memory_space<vmem>>, %arg5: memref<1x8x8x128xf32, #tpu.memory_space<vmem>>, %arg6: memref<1x8x128xf32, #tpu.memory_space<vmem>>, %arg7: memref<1x10x10x128xf32, #tpu.memory_space<vmem>>) attributes {dimension_semantics = [#tpu.dimension_semantics<parallel>], iteration_bounds = array<i64: 2>, scalar_prefetch = 0 : i64, scratch_operands = 1 : i64, tpu.core_type = #tpu.core_type<tc>, window_params = [{transform_indices = @transform_0, window_bounds = array<i64: 1, 8, 8, 128>}, {pipeline_mode = #tpu.pipeline_mode<synchronous>, transform_indices = @transform_1, window_bounds = array<i64: 1, 128>}, {pipeline_mode = #tpu.pipeline_mode<synchronous>, transform_indices = @transform_2, window_bounds = array<i64: 1, 128>}, {pipeline_mode = #tpu.pipeline_mode<synchronous>, transform_indices = @transform_3, window_bounds = array<i64: 1152, 128>}, {transform_indices = @transform_4, window_bounds = array<i64: 1, 8, 8, 128>}, {transform_indices = @transform_5, window_bounds = array<i64: 1, 8, 128>}]} {
    %c0 = arith.constant 0 : index
    %c0_0 = arith.constant 0 : index
    %c0_1 = arith.constant 0 : index
    %c0_2 = arith.constant 0 : index
    %0 = vector.load %arg1[%c0, %c0_0, %c0_1, %c0_2] : memref<1x8x8x128xf32, #tpu.memory_space<vmem>>, vector<1x8x8x128xf32>
    %c0_3 = arith.constant 0 : index
    %c0_4 = arith.constant 0 : index
    %1 = vector.load %arg2[%c0_3, %c0_4] : memref<1x128xf32, #tpu.memory_space<vmem>>, vector<1x128xf32>
    %2 = vector.shape_cast %1 : vector<1x128xf32> to vector<1x1x1x128xf32>
    %3 = vector.broadcast %2 : vector<1x1x1x128xf32> to vector<1x8x8x128xf32>
    %4 = arith.mulf %0, %3 : vector<1x8x8x128xf32>
    %c0_5 = arith.constant 0 : index
    %c0_6 = arith.constant 0 : index
    %5 = vector.load %arg3[%c0_5, %c0_6] : memref<1x128xf32, #tpu.memory_space<vmem>>, vector<1x128xf32>
    %6 = vector.shape_cast %5 : vector<1x128xf32> to vector<1x1x1x128xf32>
    %7 = vector.broadcast %6 : vector<1x1x1x128xf32> to vector<1x8x8x128xf32>
    %8 = arith.addf %4, %7 : vector<1x8x8x128xf32>
    %cst = arith.constant 0.000000e+00 : f32
    %9 = vector.broadcast %cst : f32 to vector<1x8x8x128xf32>
    %10 = arith.maximumf %8, %9 : vector<1x8x8x128xf32>
    %cst_7 = arith.constant 0.000000e+00 : f32
    %11 = vector.broadcast %cst_7 : f32 to vector<1x1x10x128xf32>
    %cst_8 = arith.constant 0.000000e+00 : f32
    %12 = vector.broadcast %cst_8 : f32 to vector<1x8x1x128xf32>
    %c0_9 = arith.constant 0 : index
    %c0_10 = arith.constant 0 : index
    %c0_11 = arith.constant 0 : index
    %c0_12 = arith.constant 0 : index
    %13 = vector.load %arg7[%c0_9, %c0_10, %c0_11, %c0_12] : memref<1x10x10x128xf32, #tpu.memory_space<vmem>>, vector<1x1x10x128xf32>
    tpu.vector_store %arg7[%c0_9, %c0_10, %c0_11, %c0_12], %11 {strides = array<i32>} : memref<1x10x10x128xf32, #tpu.memory_space<vmem>>, vector<1x1x10x128xf32>,
    %c0_13 = arith.constant 0 : index
    %c9 = arith.constant 9 : index
    %c0_14 = arith.constant 0 : index
    %c0_15 = arith.constant 0 : index
    %14 = vector.load %arg7[%c0_13, %c9, %c0_14, %c0_15] : memref<1x10x10x128xf32, #tpu.memory_space<vmem>>, vector<1x1x10x128xf32>
    tpu.vector_store %arg7[%c0_13, %c9, %c0_14, %c0_15], %11 {strides = array<i32>} : memref<1x10x10x128xf32, #tpu.memory_space<vmem>>, vector<1x1x10x128xf32>,
    %c0_16 = arith.constant 0 : index
    %c1 = arith.constant 1 : index
    %c0_17 = arith.constant 0 : index
    %c0_18 = arith.constant 0 : index
    %15 = vector.load %arg7[%c0_16, %c1, %c0_17, %c0_18] : memref<1x10x10x128xf32, #tpu.memory_space<vmem>>, vector<1x8x1x128xf32>
    tpu.vector_store %arg7[%c0_16, %c1, %c0_17, %c0_18], %12 {strides = array<i32>} : memref<1x10x10x128xf32, #tpu.memory_space<vmem>>, vector<1x8x1x128xf32>,
    %c0_19 = arith.constant 0 : index
    %c1_20 = arith.constant 1 : index
    %c9_21 = arith.constant 9 : index
    %c0_22 = arith.constant 0 : index
    %16 = vector.load %arg7[%c0_19, %c1_20, %c9_21, %c0_22] : memref<1x10x10x128xf32, #tpu.memory_space<vmem>>, vector<1x8x1x128xf32>
    tpu.vector_store %arg7[%c0_19, %c1_20, %c9_21, %c0_22], %12 {strides = array<i32>} : memref<1x10x10x128xf32, #tpu.memory_space<vmem>>, vector<1x8x1x128xf32>,
    %c0_23 = arith.constant 0 : index
    %c1_24 = arith.constant 1 : index
    %c1_25 = arith.constant 1 : index
    %c0_26 = arith.constant 0 : index
    %17 = vector.load %arg7[%c0_23, %c1_24, %c1_25, %c0_26] : memref<1x10x10x128xf32, #tpu.memory_space<vmem>>, vector<1x8x8x128xf32>
    tpu.vector_store %arg7[%c0_23, %c1_24, %c1_25, %c0_26], %10 {strides = array<i32>} : memref<1x10x10x128xf32, #tpu.memory_space<vmem>>, vector<1x8x8x128xf32>,
    %c0_27 = arith.constant 0 : index
    %c0_28 = arith.constant 0 : index
    %c0_29 = arith.constant 0 : index
    %c0_30 = arith.constant 0 : index
    %18 = vector.load %arg7[%c0_27, %c0_28, %c0_29, %c0_30] : memref<1x10x10x128xf32, #tpu.memory_space<vmem>>, vector<1x8x8x128xf32>
    %c0_31 = arith.constant 0 : index
    %c0_32 = arith.constant 0 : index
    %c1_33 = arith.constant 1 : index
    %c0_34 = arith.constant 0 : index
    %19 = vector.load %arg7[%c0_31, %c0_32, %c1_33, %c0_34] : memref<1x10x10x128xf32, #tpu.memory_space<vmem>>, vector<1x8x8x128xf32>
    %c0_35 = arith.constant 0 : index
    %c0_36 = arith.constant 0 : index
    %c2 = arith.constant 2 : index
    %c0_37 = arith.constant 0 : index
    %20 = vector.load %arg7[%c0_35, %c0_36, %c2, %c0_37] : memref<1x10x10x128xf32, #tpu.memory_space<vmem>>, vector<1x8x8x128xf32>
    %c0_38 = arith.constant 0 : index
    %c1_39 = arith.constant 1 : index
    %c0_40 = arith.constant 0 : index
    %c0_41 = arith.constant 0 : index
    %21 = vector.load %arg7[%c0_38, %c1_39, %c0_40, %c0_41] : memref<1x10x10x128xf32, #tpu.memory_space<vmem>>, vector<1x8x8x128xf32>
    %c0_42 = arith.constant 0 : index
    %c1_43 = arith.constant 1 : index
    %c1_44 = arith.constant 1 : index
    %c0_45 = arith.constant 0 : index
    %22 = vector.load %arg7[%c0_42, %c1_43, %c1_44, %c0_45] : memref<1x10x10x128xf32, #tpu.memory_space<vmem>>, vector<1x8x8x128xf32>
    %c0_46 = arith.constant 0 : index
    %c1_47 = arith.constant 1 : index
    %c2_48 = arith.constant 2 : index
    %c0_49 = arith.constant 0 : index
    %23 = vector.load %arg7[%c0_46, %c1_47, %c2_48, %c0_49] : memref<1x10x10x128xf32, #tpu.memory_space<vmem>>, vector<1x8x8x128xf32>
    %c0_50 = arith.constant 0 : index
    %c2_51 = arith.constant 2 : index
    %c0_52 = arith.constant 0 : index
    %c0_53 = arith.constant 0 : index
    %24 = vector.load %arg7[%c0_50, %c2_51, %c0_52, %c0_53] : memref<1x10x10x128xf32, #tpu.memory_space<vmem>>, vector<1x8x8x128xf32>
    %c0_54 = arith.constant 0 : index
    %c2_55 = arith.constant 2 : index
    %c1_56 = arith.constant 1 : index
    %c0_57 = arith.constant 0 : index
    %25 = vector.load %arg7[%c0_54, %c2_55, %c1_56, %c0_57] : memref<1x10x10x128xf32, #tpu.memory_space<vmem>>, vector<1x8x8x128xf32>
    %c0_58 = arith.constant 0 : index
    %c2_59 = arith.constant 2 : index
    %c2_60 = arith.constant 2 : index
    %c0_61 = arith.constant 0 : index
    %26 = vector.load %arg7[%c0_58, %c2_59, %c2_60, %c0_61] : memref<1x10x10x128xf32, #tpu.memory_space<vmem>>, vector<1x8x8x128xf32>
    %27 = tpu.concatenate %18, %19, %20, %21, %22, %23, %24, %25, %26 in 3 : vector<1x8x8x128xf32>, vector<1x8x8x128xf32>, vector<1x8x8x128xf32>, vector<1x8x8x128xf32>, vector<1x8x8x128xf32>, vector<1x8x8x128xf32>, vector<1x8x8x128xf32>, vector<1x8x8x128xf32>, vector<1x8x8x128xf32> -> vector<1x8x8x1152xf32>
    %28 = vector.shape_cast %27 : vector<1x8x8x1152xf32> to vector<64x1152xf32>
    %29 = arith.truncf %28 : vector<64x1152xf32> to vector<64x1152xbf16>
    %c0_62 = arith.constant 0 : index
    %c0_63 = arith.constant 0 : index
    %30 = vector.load %arg4[%c0_62, %c0_63] : memref<1152x128xbf16, #tpu.memory_space<vmem>>, vector<1152x128xbf16>
    %cst_64 = arith.constant dense<0.000000e+00> : vector<64x128xf32>
    %31 = tpu.matmul %29, %30, %cst_64 {dimension_numbers = #tpu.dot_dimension_numbers<[1], [0], [0], [1], [0, 0, 1, 1], [], []>} : vector<64x1152xbf16>, vector<1152x128xbf16>, vector<64x128xf32> -> vector<64x128xf32>
    %32 = vector.shape_cast %31 : vector<64x128xf32> to vector<1x8x8x128xf32>
    %c0_65 = arith.constant 0 : index
    %c0_66 = arith.constant 0 : index
    %c0_67 = arith.constant 0 : index
    %c0_68 = arith.constant 0 : index
    %33 = vector.load %arg5[%c0_65, %c0_66, %c0_67, %c0_68] : memref<1x8x8x128xf32, #tpu.memory_space<vmem>>, vector<1x8x8x128xf32>
    tpu.vector_store %arg5[%c0_65, %c0_66, %c0_67, %c0_68], %32 {strides = array<i32>} : memref<1x8x8x128xf32, #tpu.memory_space<vmem>>, vector<1x8x8x128xf32>,
    %cst_69 = arith.constant dense<0.000000e+00> : vector<128xf32>
    %34 = vector.multi_reduction <add>, %31, %cst_69 [0] : vector<64x128xf32> to vector<128xf32>
    %35 = vector.shape_cast %34 : vector<128xf32> to vector<1x128xf32>
    %36 = arith.mulf %31, %31 : vector<64x128xf32>
    %cst_70 = arith.constant dense<0.000000e+00> : vector<128xf32>
    %37 = vector.multi_reduction <add>, %36, %cst_70 [0] : vector<64x128xf32> to vector<128xf32>
    %38 = vector.shape_cast %37 : vector<128xf32> to vector<1x128xf32>
    %cst_71 = arith.constant 0.000000e+00 : f32
    %39 = vector.broadcast %cst_71 : f32 to vector<6x128xf32>
    %40 = tpu.concatenate %35, %38, %39 in 0 : vector<1x128xf32>, vector<1x128xf32>, vector<6x128xf32> -> vector<8x128xf32>
    %41 = vector.shape_cast %40 : vector<8x128xf32> to vector<1x8x128xf32>
    %c0_72 = arith.constant 0 : index
    %c0_73 = arith.constant 0 : index
    %c0_74 = arith.constant 0 : index
    %42 = vector.load %arg6[%c0_72, %c0_73, %c0_74] : memref<1x8x128xf32, #tpu.memory_space<vmem>>, vector<1x8x128xf32>
    tpu.vector_store %arg6[%c0_72, %c0_73, %c0_74], %41 {strides = array<i32>} : memref<1x8x128xf32, #tpu.memory_space<vmem>>, vector<1x8x128xf32>,
    return
  }
  func.func @transform_0(%arg0: i32) -> (i32, i32, i32, i32) {
    %c0_i32 = arith.constant 0 : i32
    %c0_i32_0 = arith.constant 0 : i32
    %c0_i32_1 = arith.constant 0 : i32
    %c0_i32_2 = arith.constant 0 : i32
    return %arg0, %c0_i32, %c0_i32_0, %c0_i32_1 : i32, i32, i32, i32
  }
  func.func @transform_1(%arg0: i32) -> (i32, i32) {
    %c0_i32 = arith.constant 0 : i32
    %c0_i32_0 = arith.constant 0 : i32
    %c0_i32_1 = arith.constant 0 : i32
    return %c0_i32, %c0_i32_0 : i32, i32
  }
  func.func @transform_2(%arg0: i32) -> (i32, i32) {
    %c0_i32 = arith.constant 0 : i32
    %c0_i32_0 = arith.constant 0 : i32
    %c0_i32_1 = arith.constant 0 : i32
    return %c0_i32, %c0_i32_0 : i32, i32
  }
  func.func @transform_3(%arg0: i32) -> (i32, i32) {
    %c0_i32 = arith.constant 0 : i32
    %c0_i32_0 = arith.constant 0 : i32
    %c0_i32_1 = arith.constant 0 : i32
    return %c0_i32, %c0_i32_0 : i32, i32
  }
  func.func @transform_4(%arg0: i32) -> (i32, i32, i32, i32) {
    %c0_i32 = arith.constant 0 : i32
    %c0_i32_0 = arith.constant 0 : i32
    %c0_i32_1 = arith.constant 0 : i32
    %c0_i32_2 = arith.constant 0 : i32
    return %arg0, %c0_i32, %c0_i32_0, %c0_i32_1 : i32, i32, i32, i32
  }
  func.func @transform_5(%arg0: i32) -> (i32, i32, i32) {
    %c0_i32 = arith.constant 0 : i32
    %c0_i32_0 = arith.constant 0 : i32
    %c0_i32_1 = arith.constant 0 : i32
    return %arg0, %c0_i32, %c0_i32_0 : i32, i32, i32
  }
}

module attributes {stable_mosaic.version = 11 : i64} {
  func.func @_pass3_kernel(%arg0: i32, %arg1: memref<1x8x8x128xf32, #tpu.memory_space<vmem>>, %arg2: memref<1x8x8x128xf32, #tpu.memory_space<vmem>>, %arg3: memref<1x128xf32, #tpu.memory_space<vmem>>, %arg4: memref<1x128xf32, #tpu.memory_space<vmem>>, %arg5: memref<1x128xf32, #tpu.memory_space<vmem>>, %arg6: memref<1x128xf32, #tpu.memory_space<vmem>>, %arg7: memref<1x8x8x128xf32, #tpu.memory_space<vmem>>) attributes {dimension_semantics = [#tpu.dimension_semantics<parallel>], iteration_bounds = array<i64: 2>, scalar_prefetch = 0 : i64, scratch_operands = 0 : i64, tpu.core_type = #tpu.core_type<tc>, window_params = [{transform_indices = @transform_0, window_bounds = array<i64: 1, 8, 8, 128>}, {transform_indices = @transform_1, window_bounds = array<i64: 1, 8, 8, 128>}, {pipeline_mode = #tpu.pipeline_mode<synchronous>, transform_indices = @transform_2, window_bounds = array<i64: 1, 128>}, {pipeline_mode = #tpu.pipeline_mode<synchronous>, transform_indices = @transform_3, window_bounds = array<i64: 1, 128>}, {pipeline_mode = #tpu.pipeline_mode<synchronous>, transform_indices = @transform_4, window_bounds = array<i64: 1, 128>}, {pipeline_mode = #tpu.pipeline_mode<synchronous>, transform_indices = @transform_5, window_bounds = array<i64: 1, 128>}, {transform_indices = @transform_6, window_bounds = array<i64: 1, 8, 8, 128>}]} {
    %c0 = arith.constant 0 : index
    %c0_0 = arith.constant 0 : index
    %c0_1 = arith.constant 0 : index
    %c0_2 = arith.constant 0 : index
    %0 = vector.load %arg1[%c0, %c0_0, %c0_1, %c0_2] : memref<1x8x8x128xf32, #tpu.memory_space<vmem>>, vector<1x8x8x128xf32>
    %c0_3 = arith.constant 0 : index
    %c0_4 = arith.constant 0 : index
    %1 = vector.load %arg3[%c0_3, %c0_4] : memref<1x128xf32, #tpu.memory_space<vmem>>, vector<1x128xf32>
    %2 = vector.shape_cast %1 : vector<1x128xf32> to vector<1x1x1x128xf32>
    %3 = vector.broadcast %2 : vector<1x1x1x128xf32> to vector<1x8x8x128xf32>
    %4 = arith.mulf %0, %3 : vector<1x8x8x128xf32>
    %c0_5 = arith.constant 0 : index
    %c0_6 = arith.constant 0 : index
    %5 = vector.load %arg4[%c0_5, %c0_6] : memref<1x128xf32, #tpu.memory_space<vmem>>, vector<1x128xf32>
    %6 = vector.shape_cast %5 : vector<1x128xf32> to vector<1x1x1x128xf32>
    %7 = vector.broadcast %6 : vector<1x1x1x128xf32> to vector<1x8x8x128xf32>
    %8 = arith.addf %4, %7 : vector<1x8x8x128xf32>
    %c0_7 = arith.constant 0 : index
    %c0_8 = arith.constant 0 : index
    %c0_9 = arith.constant 0 : index
    %c0_10 = arith.constant 0 : index
    %9 = vector.load %arg2[%c0_7, %c0_8, %c0_9, %c0_10] : memref<1x8x8x128xf32, #tpu.memory_space<vmem>>, vector<1x8x8x128xf32>
    %c0_11 = arith.constant 0 : index
    %c0_12 = arith.constant 0 : index
    %10 = vector.load %arg5[%c0_11, %c0_12] : memref<1x128xf32, #tpu.memory_space<vmem>>, vector<1x128xf32>
    %11 = vector.shape_cast %10 : vector<1x128xf32> to vector<1x1x1x128xf32>
    %12 = vector.broadcast %11 : vector<1x1x1x128xf32> to vector<1x8x8x128xf32>
    %13 = arith.mulf %9, %12 : vector<1x8x8x128xf32>
    %c0_13 = arith.constant 0 : index
    %c0_14 = arith.constant 0 : index
    %14 = vector.load %arg6[%c0_13, %c0_14] : memref<1x128xf32, #tpu.memory_space<vmem>>, vector<1x128xf32>
    %15 = vector.shape_cast %14 : vector<1x128xf32> to vector<1x1x1x128xf32>
    %16 = vector.broadcast %15 : vector<1x1x1x128xf32> to vector<1x8x8x128xf32>
    %17 = arith.addf %13, %16 : vector<1x8x8x128xf32>
    %18 = arith.addf %8, %17 : vector<1x8x8x128xf32>
    %cst = arith.constant 0.000000e+00 : f32
    %19 = vector.broadcast %cst : f32 to vector<1x8x8x128xf32>
    %20 = arith.maximumf %18, %19 : vector<1x8x8x128xf32>
    %c0_15 = arith.constant 0 : index
    %c0_16 = arith.constant 0 : index
    %c0_17 = arith.constant 0 : index
    %c0_18 = arith.constant 0 : index
    %21 = vector.load %arg7[%c0_15, %c0_16, %c0_17, %c0_18] : memref<1x8x8x128xf32, #tpu.memory_space<vmem>>, vector<1x8x8x128xf32>
    tpu.vector_store %arg7[%c0_15, %c0_16, %c0_17, %c0_18], %20 {strides = array<i32>} : memref<1x8x8x128xf32, #tpu.memory_space<vmem>>, vector<1x8x8x128xf32>,
    return
  }
  func.func @transform_0(%arg0: i32) -> (i32, i32, i32, i32) {
    %c0_i32 = arith.constant 0 : i32
    %c0_i32_0 = arith.constant 0 : i32
    %c0_i32_1 = arith.constant 0 : i32
    %c0_i32_2 = arith.constant 0 : i32
    return %arg0, %c0_i32, %c0_i32_0, %c0_i32_1 : i32, i32, i32, i32
  }
  func.func @transform_1(%arg0: i32) -> (i32, i32, i32, i32) {
    %c0_i32 = arith.constant 0 : i32
    %c0_i32_0 = arith.constant 0 : i32
    %c0_i32_1 = arith.constant 0 : i32
    %c0_i32_2 = arith.constant 0 : i32
    return %arg0, %c0_i32, %c0_i32_0, %c0_i32_1 : i32, i32, i32, i32
  }
  func.func @transform_2(%arg0: i32) -> (i32, i32) {
    %c0_i32 = arith.constant 0 : i32
    %c0_i32_0 = arith.constant 0 : i32
    %c0_i32_1 = arith.constant 0 : i32
    return %c0_i32, %c0_i32_0 : i32, i32
  }
  func.func @transform_3(%arg0: i32) -> (i32, i32) {
    %c0_i32 = arith.constant 0 : i32
    %c0_i32_0 = arith.constant 0 : i32
    %c0_i32_1 = arith.constant 0 : i32
    return %c0_i32, %c0_i32_0 : i32, i32
  }
  func.func @transform_4(%arg0: i32) -> (i32, i32) {
    %c0_i32 = arith.constant 0 : i32
    %c0_i32_0 = arith.constant 0 : i32
    %c0_i32_1 = arith.constant 0 : i32
    return %c0_i32, %c0_i32_0 : i32, i32
  }
  func.func @transform_5(%arg0: i32) -> (i32, i32) {
    %c0_i32 = arith.constant 0 : i32
    %c0_i32_0 = arith.constant 0 : i32
    %c0_i32_1 = arith.constant 0 : i32
    return %c0_i32, %c0_i32_0 : i32, i32
  }
  func.func @transform_6(%arg0: i32) -> (i32, i32, i32, i32) {
    %c0_i32 = arith.constant 0 : i32
    %c0_i32_0 = arith.constant 0 : i32
    %c0_i32_1 = arith.constant 0 : i32
    %c0_i32_2 = arith.constant 0 : i32
    return %arg0, %c0_i32, %c0_i32_0, %c0_i32_1 : i32, i32, i32, i32
  }
}

</mosaic_0001>

<llo_original>
// kernel: res_block_forward.5
$region0: #{res_block_forward.5}
  #allocation0 [shape = 'u32[]', space=smem, size = 0x4, offset = 0x4, fixed_abs, tag = 'smem constant byte address 0x4 - core index']
  #allocation1 [shape = 'u32[144,128]{1,0:T(1,128)}', space=vmem, size = 0x12000, scoped, tag = 'internal scratch']
  %s0 = inlined_call_operand.vmem [shape: f32[2,8,8,128], index: 0, kind: input, shape index: {}]
  %s1 = inlined_call_operand.vmem [shape: f32[2,8,8,128], index: 1, kind: input, shape index: {}]
  %s2 = inlined_call_operand.vmem [shape: f32[1,128], index: 2, kind: input, shape index: {}]
  %s3 = inlined_call_operand.vmem [shape: f32[1,128], index: 3, kind: input, shape index: {}]
  %s4 = inlined_call_operand.vmem [shape: f32[1,128], index: 4, kind: input, shape index: {}]
  %s5 = inlined_call_operand.vmem [shape: f32[1,128], index: 5, kind: input, shape index: {}]
  %s6 = inlined_call_operand.vmem [shape: f32[2,8,8,128], index: 6, kind: output, shape index: {}]
  %s7 = sld [smem:[#allocation0]]
  $region57: #{res_block_forward.5} parent=0
    _
  %s9 = ssub.s32 1, %s7
  %s10 = scalar_select 0, %s9, %s7
  loop: start=0, step=1, limit=4
  $region2: #{res_block_forward.5} parent=0 // loop_pre_header
    _
  $region3: #{res_block_forward.5} parent=0 // loop_header
    %s12 = sphi 0, %s16
    %p13 = scmp.ge.s32.totalorder %s12, 4
    %s22 = sphi 0, %s24
    %s25 = sphi 0, %s22
    %s26 = sphi 0, %s25
    %s42 = sphi 0, %s26
    %s48 = sphi 0, %s50
    %s51 = sphi 0, %s48
    %s52 = sphi 0, %s51
    %s68 = sphi 0, %s52
    %s72 = sphi 0, %s72
    %s74 = sphi 0, %s72
    %s75 = sphi 0, %s74
    %s89 = sphi 0, %s75
    %s93 = sphi 0, %s93
    %s95 = sphi 0, %s93
    %s96 = sphi 0, %s95
    %s110 = sphi 0, %s96
    %s114 = sphi 0, %s114
    %s116 = sphi 0, %s114
    %s117 = sphi 0, %s116
    %s131 = sphi 0, %s117
    %s135 = sphi 0, %s135
    %s137 = sphi 0, %s135
    %s138 = sphi 0, %s137
    %s152 = sphi 0, %s138
    %s158 = sphi 0, %s160
    %s161 = sphi 0, %s158
    %s162 = sphi 0, %s161
    %s178 = sphi 0, %s162
  $region4: #{res_block_forward.5} parent=0 // loop_header_branch
    %15 = sbr.rel (%p13) target = $region8
  $region5: #{res_block_forward.5} parent=0 // loop_body
    %s17 = ssub.s32 %s12, 1
    %s18 = ssub.s32 %s12, 2
    %s19 = sadd.s32 %s12, 1
    %s20 = ssub.s32 %s12, %s19
    %p21 = scmp.eq.s32.totalorder %s20, 0
    %s23 = sadd.s32 %s22, 1
    %s24 = scalar_select %p21, %s22, %s23
    %p27 = pneg %p21
    %p28 = scmp.eq.s32.totalorder %s12, 1
    %p29 = por %p27, %p28
    %p30 = scmp.ne.s32.totalorder %s22, %s25
    %p31 = scmp.eq.s32.totalorder %s12, 0
    %p32 = por %p30, %p31
    %p33 = scmp.ne.s32.totalorder %s22, %s25
    %p34 = scmp.eq.s32.totalorder %s17, 1
    %p35 = por %p33, %p34
    %p36 = scmp.ne.s32.totalorder %s25, %s26
    %p37 = scmp.eq.s32.totalorder %s17, 0
    %p38 = por %p36, %p37
    %p39 = scmp.ne.s32.totalorder %s25, %s26
    %p40 = scmp.eq.s32.totalorder %s18, 1
    %p41 = por %p39, %p40
    %p43 = scmp.ne.s32.totalorder %s26, %s42
    %p44 = scmp.eq.s32.totalorder %s18, 0
    %p45 = por %p43, %p44
    %s46 = ssub.s32 %s12, %s19
    %p47 = scmp.eq.s32.totalorder %s46, 0
    %s49 = sadd.s32 %s48, 1
    %s50 = scalar_select %p47, %s48, %s49
    %p53 = pneg %p47
    %p54 = scmp.eq.s32.totalorder %s12, 1
    %p55 = por %p53, %p54
    %p56 = scmp.ne.s32.totalorder %s48, %s51
    %p57 = scmp.eq.s32.totalorder %s12, 0
    %p58 = por %p56, %p57
    %p59 = scmp.ne.s32.totalorder %s48, %s51
    %p60 = scmp.eq.s32.totalorder %s17, 1
    %p61 = por %p59, %p60
    %p62 = scmp.ne.s32.totalorder %s51, %s52
    %p63 = scmp.eq.s32.totalorder %s17, 0
    %p64 = por %p62, %p63
    %p65 = scmp.ne.s32.totalorder %s51, %s52
    %p66 = scmp.eq.s32.totalorder %s18, 1
    %p67 = por %p65, %p66
    %p69 = scmp.ne.s32.totalorder %s52, %s68
    %p70 = scmp.eq.s32.totalorder %s18, 0
    %p71 = por %p69, %p70
    %s73 = sadd.s32 %s72, 1
    %p76 = scmp.eq.s32.totalorder %s12, 1
    %p77 = scmp.ne.s32.totalorder %s72, %s74
    %p78 = scmp.eq.s32.totalorder %s12, 0
    %p79 = por %p77, %p78
    %p80 = scmp.ne.s32.totalorder %s72, %s74
    %p81 = scmp.eq.s32.totalorder %s17, 1
    %p82 = por %p80, %p81
    %p83 = scmp.ne.s32.totalorder %s74, %s75
    %p84 = scmp.eq.s32.totalorder %s17, 0
    %p85 = por %p83, %p84
    %p86 = scmp.ne.s32.totalorder %s74, %s75
    %p87 = scmp.eq.s32.totalorder %s18, 1
    %p88 = por %p86, %p87
    %p90 = scmp.ne.s32.totalorder %s75, %s89
    %p91 = scmp.eq.s32.totalorder %s18, 0
    %p92 = por %p90, %p91
    %s94 = sadd.s32 %s93, 1
    %p97 = scmp.eq.s32.totalorder %s12, 1
    %p98 = scmp.ne.s32.totalorder %s93, %s95
    %p99 = scmp.eq.s32.totalorder %s12, 0
    %p100 = por %p98, %p99
    %p101 = scmp.ne.s32.totalorder %s93, %s95
    %p102 = scmp.eq.s32.totalorder %s17, 1
    %p103 = por %p101, %p102
    %p104 = scmp.ne.s32.totalorder %s95, %s96
    %p105 = scmp.eq.s32.totalorder %s17, 0
    %p106 = por %p104, %p105
    %p107 = scmp.ne.s32.totalorder %s95, %s96
    %p108 = scmp.eq.s32.totalorder %s18, 1
    %p109 = por %p107, %p108
    %p111 = scmp.ne.s32.totalorder %s96, %s110
    %p112 = scmp.eq.s32.totalorder %s18, 0
    %p113 = por %p111, %p112
    %s115 = sadd.s32 %s114, 1
    %p118 = scmp.eq.s32.totalorder %s12, 1
    %p119 = scmp.ne.s32.totalorder %s114, %s116
    %p120 = scmp.eq.s32.totalorder %s12, 0
    %p121 = por %p119, %p120
    %p122 = scmp.ne.s32.totalorder %s114, %s116
    %p123 = scmp.eq.s32.totalorder %s17, 1
    %p124 = por %p122, %p123
    %p125 = scmp.ne.s32.totalorder %s116, %s117
    %p126 = scmp.eq.s32.totalorder %s17, 0
    %p127 = por %p125, %p126
    %p128 = scmp.ne.s32.totalorder %s116, %s117
    %p129 = scmp.eq.s32.totalorder %s18, 1
    %p130 = por %p128, %p129
    %p132 = scmp.ne.s32.totalorder %s117, %s131
    %p133 = scmp.eq.s32.totalorder %s18, 0
    %p134 = por %p132, %p133
    %s136 = sadd.s32 %s135, 1
    %p139 = scmp.eq.s32.totalorder %s12, 1
    %p140 = scmp.ne.s32.totalorder %s135, %s137
    %p141 = scmp.eq.s32.totalorder %s12, 0
    %p142 = por %p140, %p141
    %p143 = scmp.ne.s32.totalorder %s135, %s137
    %p144 = scmp.eq.s32.totalorder %s17, 1
    %p145 = por %p143, %p144
    %p146 = scmp.ne.s32.totalorder %s137, %s138
    %p147 = scmp.eq.s32.totalorder %s17, 0
    %p148 = por %p146, %p147
    %p149 = scmp.ne.s32.totalorder %s137, %s138
    %p150 = scmp.eq.s32.totalorder %s18, 1
    %p151 = por %p149, %p150
    %p153 = scmp.ne.s32.totalorder %s138, %s152
    %p154 = scmp.eq.s32.totalorder %s18, 0
    %p155 = por %p153, %p154
    %s156 = ssub.s32 %s12, %s19
    %p157 = scmp.eq.s32.totalorder %s156, 0
    %s159 = sadd.s32 %s158, 1
    %s160 = scalar_select %p157, %s158, %s159
    %p163 = pneg %p157
    %p164 = scmp.eq.s32.totalorder %s12, 1
    %p165 = por %p163, %p164
    %p166 = scmp.ne.s32.totalorder %s158, %s161
    %p167 = scmp.eq.s32.totalorder %s12, 0
    %p168 = por %p166, %p167
    %p169 = scmp.ne.s32.totalorder %s158, %s161
    %p170 = scmp.eq.s32.totalorder %s17, 1
    %p171 = por %p169, %p170
    %p172 = scmp.ne.s32.totalorder %s161, %s162
    %p173 = scmp.eq.s32.totalorder %s17, 0
    %p174 = por %p172, %p173
    %p175 = scmp.ne.s32.totalorder %s161, %s162
    %p176 = scmp.eq.s32.totalorder %s18, 1
    %p177 = por %p175, %p176
    %p179 = scmp.ne.s32.totalorder %s162, %s178
    %p180 = scmp.eq.s32.totalorder %s18, 0
    %p181 = por %p179, %p180
    %p182 = scmp.le.s32.totalorder 1, %s12
    %p183 = scmp.lt.s32.totalorder %s12, 3
    %p184 = pnand %p182, %p183
    %p185 = pneg %p184
    // Predicated region
    $region9: #{res_block_forward.5} parent=5 // pred_check
      _
    $region10: #{res_block_forward.5} parent=5 // pred_check_branch
      %187 = sbr.rel (%p184) target = $region12
    $region11: #{res_block_forward.5} parent=5 // pred_region
      %s188 = ssub.s32 %s12, 1
      // Predicated region
      $region13: #{res_block_forward.5} parent=11 // pred_check
        %p189 = pneg %p85
      $region14: #{res_block_forward.5} parent=11 // pred_check_branch
        %191 = sbr.rel (%p189) target = $region16
      $region15: #{res_block_forward.5} parent=11 // pred_region
        _
      $region16: #{res_block_forward.5} parent=11 // pred_fallthru
        _
      // Predicated region
      $region17: #{res_block_forward.5} parent=11 // pred_check
        %p192 = pneg %p106
      $region18: #{res_block_forward.5} parent=11 // pred_check_branch
        %194 = sbr.rel (%p192) target = $region20
      $region19: #{res_block_forward.5} parent=11 // pred_region
        _
      $region20: #{res_block_forward.5} parent=11 // pred_fallthru
        _
      // Predicated region
      $region21: #{res_block_forward.5} parent=11 // pred_check
        %p195 = pneg %p127
      $region22: #{res_block_forward.5} parent=11 // pred_check_branch
        %197 = sbr.rel (%p195) target = $region24
      $region23: #{res_block_forward.5} parent=11 // pred_region
        _
      $region24: #{res_block_forward.5} parent=11 // pred_fallthru
        _
      // Predicated region
      $region25: #{res_block_forward.5} parent=11 // pred_check
        %p198 = pneg %p148
      $region26: #{res_block_forward.5} parent=11 // pred_check_branch
        %200 = sbr.rel (%p198) target = $region28
      $region27: #{res_block_forward.5} parent=11 // pred_region
        _
      $region28: #{res_block_forward.5} parent=11 // pred_fallthru
        _
    $region12: #{res_block_forward.5} parent=5 // pred_fallthru
      _
    %p201 = scmp.lt.s32.totalorder %s12, 2
    // Predicated region
    $region29: #{res_block_forward.5} parent=5 // pred_check
      %p202 = pneg %p201
    $region30: #{res_block_forward.5} parent=5 // pred_check_branch
      %204 = sbr.rel (%p202) target = $region32
    $region31: #{res_block_forward.5} parent=5 // pred_region
      // Predicated region
      $region33: #{res_block_forward.5} parent=31 // pred_check
        %p205 = pneg %p32
      $region34: #{res_block_forward.5} parent=31 // pred_check_branch
        %207 = sbr.rel (%p205) target = $region36
      $region35: #{res_block_forward.5} parent=31 // pred_region
        %p208 = scmp.lt.s32.totalorder %s12, 1
        %s209 = scalar_select %p208, %s12, 1
        %s210 = smul.addr %s209, 8
        %s211 = smul.addr %s210, 8
        %s212 = scalar_lea.vmem %s0, %s211
      $region36: #{res_block_forward.5} parent=31 // pred_fallthru
        _
      // Predicated region
      $region37: #{res_block_forward.5} parent=31 // pred_check
        %p213 = pneg %p58
      $region38: #{res_block_forward.5} parent=31 // pred_check_branch
        %215 = sbr.rel (%p213) target = $region40
      $region39: #{res_block_forward.5} parent=31 // pred_region
        %p216 = scmp.lt.s32.totalorder %s12, 1
        %s217 = scalar_select %p216, %s12, 1
        %s218 = smul.addr %s217, 8
        %s219 = smul.addr %s218, 8
        %s220 = scalar_lea.vmem %s1, %s219
      $region40: #{res_block_forward.5} parent=31 // pred_fallthru
        _
    $region32: #{res_block_forward.5} parent=5 // pred_fallthru
      _
    %p221 = scmp.le.s32.totalorder 1, %s12
    %p222 = scmp.lt.s32.totalorder %s12, 3
    %p223 = pnand %p221, %p222
    %p224 = pneg %p223
    // Predicated region
    $region41: #{res_block_forward.5} parent=5 // pred_check
      _
    $region42: #{res_block_forward.5} parent=5 // pred_check_branch
      %226 = sbr.rel (%p223) target = $region44
    $region43: #{res_block_forward.5} parent=5 // pred_region
      %s227 = ssub.s32 %s12, 1
      %p228 = scmp.lt.s32.totalorder %s17, 1
      %s229 = scalar_select %p228, %s17, 1
      %s230 = smul.addr %s229, 8
      %s231 = smul.addr %s230, 8
      %s232 = scalar_lea.vmem %s0, %s231
      %p233 = pneg %p38
      %p234 = pneg %p35
      %p235 = scmp.lt.s32.totalorder %s17, 1
      %s236 = scalar_select %p235, %s17, 1
      %s237 = smul.addr %s236, 8
      %s238 = smul.addr %s237, 8
      %s239 = scalar_lea.vmem %s1, %s238
      %p240 = pneg %p64
      %p241 = pneg %p61
      %p242 = pneg %p85
      %p243 = pneg %p82
      %p244 = pneg %p106
      %p245 = pneg %p103
      %p246 = pneg %p127
      %p247 = pneg %p124
      %p248 = pneg %p148
      %p249 = pneg %p145
      %p250 = pneg %p174
      %p251 = pneg %p171
      %p252 = scmp.lt.s32.totalorder %s17, 1
      %s253 = scalar_select %p252, %s17, 1
      %s254 = smul.addr %s253, 8
      %s255 = smul.addr %s254, 8
      %s256 = scalar_lea.vmem %s6, %s255
      %p257 = scmp.lt.s32.totalorder %s17, 1
      %s258 = scalar_select %p257, %s17, 1
      %s259 = smul.addr %s258, 8
      %s260 = smul.addr %s259, 8
      %s261 = scalar_lea.vmem %s0, %s260
      %p262 = scmp.lt.s32.totalorder %s17, 1
      %s263 = scalar_select %p262, %s17, 1
      %s264 = smul.addr %s263, 8
      %s265 = smul.addr %s264, 8
      %s266 = scalar_lea.vmem %s1, %s265
      %p267 = scmp.lt.s32.totalorder %s17, 1
      %s268 = scalar_select %p267, %s17, 1
      %s269 = smul.addr %s268, 8
      %s270 = smul.addr %s269, 8
      %s271 = scalar_lea.vmem %s6, %s270
      %v272 = vld [vmem:[%s261] sm:$0xff]
      %v273 = vld [vmem:[%s261 + $0x8] sm:$0xff]
      %v274 = vld [vmem:[%s261 + $0x10] sm:$0xff]
      %v275 = vld [vmem:[%s261 + $0x18] sm:$0xff]
      %v276 = vld [vmem:[%s261 + $0x20] sm:$0xff]
      %v277 = vld [vmem:[%s261 + $0x28] sm:$0xff]
      %v278 = vld [vmem:[%s261 + $0x30] sm:$0xff]
      %v279 = vld [vmem:[%s261 + $0x38] sm:$0xff]
      %v280 = vld [vmem:[%s2] sm:$0x1]
      %v282 = vlaneseq
      %v283 = vshrl.u32 %v282, 7
      %v284 = vsub.s32 0, %v283
      %v285 = vrot.slane %v280, %v284
      %v287 = vmul.f32 %v272, %v285
      %v288 = vmul.f32 %v273, %v285
      %v289 = vmul.f32 %v274, %v285
      %v290 = vmul.f32 %v275, %v285
      %v291 = vmul.f32 %v276, %v285
      %v292 = vmul.f32 %v277, %v285
      %v293 = vmul.f32 %v278, %v285
      %v294 = vmul.f32 %v279, %v285
      %v295 = vld [vmem:[%s3] sm:$0x1]
      %v297 = vlaneseq
      %v298 = vshrl.u32 %v297, 7
      %v299 = vsub.s32 0, %v298
      %v300 = vrot.slane %v295, %v299
      %v302 = vadd.f32 %v287, %v300
      %v303 = vadd.f32 %v288, %v300
      %v304 = vadd.f32 %v289, %v300
      %v305 = vadd.f32 %v290, %v300
      %v306 = vadd.f32 %v291, %v300
      %v307 = vadd.f32 %v292, %v300
      %v308 = vadd.f32 %v293, %v300
      %v309 = vadd.f32 %v294, %v300
      %v310 = vld [vmem:[%s266] sm:$0xff]
      %v311 = vld [vmem:[%s266 + $0x8] sm:$0xff]
      %v312 = vld [vmem:[%s266 + $0x10] sm:$0xff]
      %v313 = vld [vmem:[%s266 + $0x18] sm:$0xff]
      %v314 = vld [vmem:[%s266 + $0x20] sm:$0xff]
      %v315 = vld [vmem:[%s266 + $0x28] sm:$0xff]
      %v316 = vld [vmem:[%s266 + $0x30] sm:$0xff]
      %v317 = vld [vmem:[%s266 + $0x38] sm:$0xff]
      %v318 = vld [vmem:[%s4] sm:$0x1]
      %v320 = vlaneseq
      %v321 = vshrl.u32 %v320, 7
      %v322 = vsub.s32 0, %v321
      %v323 = vrot.slane %v318, %v322
      %v325 = vmul.f32 %v310, %v323
      %v326 = vmul.f32 %v311, %v323
      %v327 = vmul.f32 %v312, %v323
      %v328 = vmul.f32 %v313, %v323
      %v329 = vmul.f32 %v314, %v323
      %v330 = vmul.f32 %v315, %v323
      %v331 = vmul.f32 %v316, %v323
      %v332 = vmul.f32 %v317, %v323
      %v333 = vld [vmem:[%s5] sm:$0x1]
      %v335 = vlaneseq
      %v336 = vshrl.u32 %v335, 7
      %v337 = vsub.s32 0, %v336
      %v338 = vrot.slane %v333, %v337
      %v340 = vadd.f32 %v325, %v338
      %v341 = vadd.f32 %v326, %v338
      %v342 = vadd.f32 %v327, %v338
      %v343 = vadd.f32 %v328, %v338
      %v344 = vadd.f32 %v329, %v338
      %v345 = vadd.f32 %v330, %v338
      %v346 = vadd.f32 %v331, %v338
      %v347 = vadd.f32 %v332, %v338
      %v348 = vadd.f32 %v302, %v340
      %v349 = vadd.f32 %v303, %v341
      %v350 = vadd.f32 %v304, %v342
      %v351 = vadd.f32 %v305, %v343
      %v352 = vadd.f32 %v306, %v344
      %v353 = vadd.f32 %v307, %v345
      %v354 = vadd.f32 %v308, %v346
      %v355 = vadd.f32 %v309, %v347
      %v356 = vmax.f32 %v348, 0.0
      %v357 = vmax.f32 %v349, 0.0
      %v358 = vmax.f32 %v350, 0.0
      %v359 = vmax.f32 %v351, 0.0
      %v360 = vmax.f32 %v352, 0.0
      %v361 = vmax.f32 %v353, 0.0
      %v362 = vmax.f32 %v354, 0.0
      %v363 = vmax.f32 %v355, 0.0
      %364 = vst [vmem:[%s271] sm:$0xff] %v356
      %365 = vst [vmem:[%s271 + $0x8] sm:$0xff] %v357
      %366 = vst [vmem:[%s271 + $0x10] sm:$0xff] %v358
      %367 = vst [vmem:[%s271 + $0x18] sm:$0xff] %v359
      %368 = vst [vmem:[%s271 + $0x20] sm:$0xff] %v360
      %369 = vst [vmem:[%s271 + $0x28] sm:$0xff] %v361
      %370 = vst [vmem:[%s271 + $0x30] sm:$0xff] %v362
      %371 = vst [vmem:[%s271 + $0x38] sm:$0xff] %v363
      %p372 = scmp.lt.s32.totalorder %s17, 1
      %s373 = scalar_select %p372, %s17, 1
      %s374 = smul.addr %s373, 8
      %s375 = smul.addr %s374, 8
      %s376 = scalar_lea.vmem %s6, %s375
      // Predicated region
      $region45: #{res_block_forward.5} parent=43 // pred_check
        %p377 = pneg %p171
      $region46: #{res_block_forward.5} parent=43 // pred_check_branch
        %379 = sbr.rel (%p377) target = $region48
      $region47: #{res_block_forward.5} parent=43 // pred_region
        _
      $region48: #{res_block_forward.5} parent=43 // pred_fallthru
        _
    $region44: #{res_block_forward.5} parent=5 // pred_fallthru
      _
    %p380 = scmp.le.s32.totalorder 2, %s12
    // Predicated region
    $region49: #{res_block_forward.5} parent=5 // pred_check
      %p381 = pneg %p380
    $region50: #{res_block_forward.5} parent=5 // pred_check_branch
      %383 = sbr.rel (%p381) target = $region52
    $region51: #{res_block_forward.5} parent=5 // pred_region
      %s384 = ssub.s32 %s12, 2
      // Predicated region
      $region53: #{res_block_forward.5} parent=51 // pred_check
        %p385 = pneg %p177
      $region54: #{res_block_forward.5} parent=51 // pred_check_branch
        %387 = sbr.rel (%p385) target = $region56
      $region55: #{res_block_forward.5} parent=51 // pred_region
        %p388 = scmp.lt.s32.totalorder %s18, 1
        %s389 = scalar_select %p388, %s18, 1
        %s390 = smul.addr %s389, 8
        %s391 = smul.addr %s390, 8
        %s392 = scalar_lea.vmem %s6, %s391
      $region56: #{res_block_forward.5} parent=51 // pred_fallthru
        _
    $region52: #{res_block_forward.5} parent=5 // pred_fallthru
      _
  $region6: #{res_block_forward.5} parent=0 // loop_footer
    %s16 = sadd.s32 1, %s12
  $region7: #{res_block_forward.5} parent=0 // loop_footer_branch
    %11 = sbr.rel target = $region3
  $region8: #{res_block_forward.5} parent=0 // loop_exit
    _

// kernel: res_block_forward.3
$region0: #{res_block_forward.3}
  #allocation0 [shape = 'u32[]', space=smem, size = 0x4, offset = 0x4, fixed_abs, tag = 'smem constant byte address 0x4 - core index']
  #allocation1 [shape = 'u32[144,128]{1,0:T(1,128)}', space=vmem, size = 0x12000, scoped, tag = 'internal scratch']
  %s0 = inlined_call_operand.vmem [shape: bf16[4,2,9,9,128], index: 0, kind: input, shape index: {}]
  %s1 = inlined_call_operand.vmem [shape: bf16[1152,128], index: 1, kind: input, shape index: {}]
  %s2 = inlined_call_operand.vmem [shape: bf16[128,128], index: 2, kind: input, shape index: {}]
  %s3 = inlined_call_operand.vmem [shape: f32[2,8,8,128], index: 3, kind: output, shape index: {0}]
  %s4 = inlined_call_operand.vmem [shape: f32[2,8,128], index: 4, kind: output, shape index: {1}]
  %s5 = inlined_call_operand.vmem [shape: f32[2,8,8,128], index: 5, kind: output, shape index: {2}]
  %s6 = inlined_call_operand.vmem [shape: f32[2,8,128], index: 6, kind: output, shape index: {3}]
  %7 = xla_tuple %s3, %s4, %s5, %s6
  %s8 = sld [smem:[#allocation0]]
  $region110: #{res_block_forward.3} parent=0
    _
  %s10 = ssub.s32 1, %s8
  %s11 = scalar_select 0, %s10, %s8
  $region1: #{res_block_forward.3} parent=0
    #allocation2 [shape = 'u8[294912]{0}', space=vmem, size = 0x48000, scoped, tag = 'input window, operand 0']
    loop: start=0, step=1, limit=4
    $region2: #{res_block_forward.3} parent=1 // loop_pre_header
      _
    $region3: #{res_block_forward.3} parent=1 // loop_header
      %s13 = sphi 0, %s17
      %p14 = scmp.ge.s32.totalorder %s13, 4
      %s23 = sphi 0, %s25
      %s26 = sphi 0, %s23
      %s27 = sphi 0, %s26
      %s43 = sphi 0, %s27
      %s47 = sphi 0, %s47
      %s49 = sphi 0, %s47
      %s50 = sphi 0, %s49
      %s64 = sphi 0, %s50
      %s68 = sphi 0, %s68
      %s70 = sphi 0, %s68
      %s71 = sphi 0, %s70
      %s85 = sphi 0, %s71
      %s91 = sphi 0, %s93
      %s94 = sphi 0, %s91
      %s95 = sphi 0, %s94
      %s111 = sphi 0, %s95
      %s117 = sphi 0, %s119
      %s120 = sphi 0, %s117
      %s121 = sphi 0, %s120
      %s137 = sphi 0, %s121
      %s143 = sphi 0, %s145
      %s146 = sphi 0, %s143
      %s147 = sphi 0, %s146
      %s163 = sphi 0, %s147
      %s169 = sphi 0, %s171
      %s172 = sphi 0, %s169
      %s173 = sphi 0, %s172
      %s189 = sphi 0, %s173
    $region4: #{res_block_forward.3} parent=1 // loop_header_branch
      %16 = sbr.rel (%p14) target = $region8
    $region5: #{res_block_forward.3} parent=1 // loop_body
      %s18 = ssub.s32 %s13, 1
      %s19 = ssub.s32 %s13, 2
      %s20 = sadd.s32 %s13, 1
      %s21 = ssub.s32 %s13, %s20
      %p22 = scmp.eq.s32.totalorder %s21, 0
      %s24 = sadd.s32 %s23, 1
      %s25 = scalar_select %p22, %s23, %s24
      %p28 = pneg %p22
      %p29 = scmp.eq.s32.totalorder %s13, 1
      %p30 = por %p28, %p29
      %p31 = scmp.ne.s32.totalorder %s23, %s26
      %p32 = scmp.eq.s32.totalorder %s13, 0
      %p33 = por %p31, %p32
      %p34 = scmp.ne.s32.totalorder %s23, %s26
      %p35 = scmp.eq.s32.totalorder %s18, 1
      %p36 = por %p34, %p35
      %p37 = scmp.ne.s32.totalorder %s26, %s27
      %p38 = scmp.eq.s32.totalorder %s18, 0
      %p39 = por %p37, %p38
      %p40 = scmp.ne.s32.totalorder %s26, %s27
      %p41 = scmp.eq.s32.totalorder %s19, 1
      %p42 = por %p40, %p41
      %p44 = scmp.ne.s32.totalorder %s27, %s43
      %p45 = scmp.eq.s32.totalorder %s19, 0
      %p46 = por %p44, %p45
      %s48 = sadd.s32 %s47, 1
      %p51 = scmp.eq.s32.totalorder %s13, 1
      %p52 = scmp.ne.s32.totalorder %s47, %s49
      %p53 = scmp.eq.s32.totalorder %s13, 0
      %p54 = por %p52, %p53
      %p55 = scmp.ne.s32.totalorder %s47, %s49
      %p56 = scmp.eq.s32.totalorder %s18, 1
      %p57 = por %p55, %p56
      %p58 = scmp.ne.s32.totalorder %s49, %s50
      %p59 = scmp.eq.s32.totalorder %s18, 0
      %p60 = por %p58, %p59
      %p61 = scmp.ne.s32.totalorder %s49, %s50
      %p62 = scmp.eq.s32.totalorder %s19, 1
      %p63 = por %p61, %p62
      %p65 = scmp.ne.s32.totalorder %s50, %s64
      %p66 = scmp.eq.s32.totalorder %s19, 0
      %p67 = por %p65, %p66
      %s69 = sadd.s32 %s68, 1
      %p72 = scmp.eq.s32.totalorder %s13, 1
      %p73 = scmp.ne.s32.totalorder %s68, %s70
      %p74 = scmp.eq.s32.totalorder %s13, 0
      %p75 = por %p73, %p74
      %p76 = scmp.ne.s32.totalorder %s68, %s70
      %p77 = scmp.eq.s32.totalorder %s18, 1
      %p78 = por %p76, %p77
      %p79 = scmp.ne.s32.totalorder %s70, %s71
      %p80 = scmp.eq.s32.totalorder %s18, 0
      %p81 = por %p79, %p80
      %p82 = scmp.ne.s32.totalorder %s70, %s71
      %p83 = scmp.eq.s32.totalorder %s19, 1
      %p84 = por %p82, %p83
      %p86 = scmp.ne.s32.totalorder %s71, %s85
      %p87 = scmp.eq.s32.totalorder %s19, 0
      %p88 = por %p86, %p87
      %s89 = ssub.s32 %s13, %s20
      %p90 = scmp.eq.s32.totalorder %s89, 0
      %s92 = sadd.s32 %s91, 1
      %s93 = scalar_select %p90, %s91, %s92
      %p96 = pneg %p90
      %p97 = scmp.eq.s32.totalorder %s13, 1
      %p98 = por %p96, %p97
      %p99 = scmp.ne.s32.totalorder %s91, %s94
      %p100 = scmp.eq.s32.totalorder %s13, 0
      %p101 = por %p99, %p100
      %p102 = scmp.ne.s32.totalorder %s91, %s94
      %p103 = scmp.eq.s32.totalorder %s18, 1
      %p104 = por %p102, %p103
      %p105 = scmp.ne.s32.totalorder %s94, %s95
      %p106 = scmp.eq.s32.totalorder %s18, 0
      %p107 = por %p105, %p106
      %p108 = scmp.ne.s32.totalorder %s94, %s95
      %p109 = scmp.eq.s32.totalorder %s19, 1
      %p110 = por %p108, %p109
      %p112 = scmp.ne.s32.totalorder %s95, %s111
      %p113 = scmp.eq.s32.totalorder %s19, 0
      %p114 = por %p112, %p113
      %s115 = ssub.s32 %s13, %s20
      %p116 = scmp.eq.s32.totalorder %s115, 0
      %s118 = sadd.s32 %s117, 1
      %s119 = scalar_select %p116, %s117, %s118
      %p122 = pneg %p116
      %p123 = scmp.eq.s32.totalorder %s13, 1
      %p124 = por %p122, %p123
      %p125 = scmp.ne.s32.totalorder %s117, %s120
      %p126 = scmp.eq.s32.totalorder %s13, 0
      %p127 = por %p125, %p126
      %p128 = scmp.ne.s32.totalorder %s117, %s120
      %p129 = scmp.eq.s32.totalorder %s18, 1
      %p130 = por %p128, %p129
      %p131 = scmp.ne.s32.totalorder %s120, %s121
      %p132 = scmp.eq.s32.totalorder %s18, 0
      %p133 = por %p131, %p132
      %p134 = scmp.ne.s32.totalorder %s120, %s121
      %p135 = scmp.eq.s32.totalorder %s19, 1
      %p136 = por %p134, %p135
      %p138 = scmp.ne.s32.totalorder %s121, %s137
      %p139 = scmp.eq.s32.totalorder %s19, 0
      %p140 = por %p138, %p139
      %s141 = ssub.s32 %s13, %s20
      %p142 = scmp.eq.s32.totalorder %s141, 0
      %s144 = sadd.s32 %s143, 1
      %s145 = scalar_select %p142, %s143, %s144
      %p148 = pneg %p142
      %p149 = scmp.eq.s32.totalorder %s13, 1
      %p150 = por %p148, %p149
      %p151 = scmp.ne.s32.totalorder %s143, %s146
      %p152 = scmp.eq.s32.totalorder %s13, 0
      %p153 = por %p151, %p152
      %p154 = scmp.ne.s32.totalorder %s143, %s146
      %p155 = scmp.eq.s32.totalorder %s18, 1
      %p156 = por %p154, %p155
      %p157 = scmp.ne.s32.totalorder %s146, %s147
      %p158 = scmp.eq.s32.totalorder %s18, 0
      %p159 = por %p157, %p158
      %p160 = scmp.ne.s32.totalorder %s146, %s147
      %p161 = scmp.eq.s32.totalorder %s19, 1
      %p162 = por %p160, %p161
      %p164 = scmp.ne.s32.totalorder %s147, %s163
      %p165 = scmp.eq.s32.totalorder %s19, 0
      %p166 = por %p164, %p165
      %s167 = ssub.s32 %s13, %s20
      %p168 = scmp.eq.s32.totalorder %s167, 0
      %s170 = sadd.s32 %s169, 1
      %s171 = scalar_select %p168, %s169, %s170
      %p174 = pneg %p168
      %p175 = scmp.eq.s32.totalorder %s13, 1
      %p176 = por %p174, %p175
      %p177 = scmp.ne.s32.totalorder %s169, %s172
      %p178 = scmp.eq.s32.totalorder %s13, 0
      %p179 = por %p177, %p178
      %p180 = scmp.ne.s32.totalorder %s169, %s172
      %p181 = scmp.eq.s32.totalorder %s18, 1
      %p182 = por %p180, %p181
      %p183 = scmp.ne.s32.totalorder %s172, %s173
      %p184 = scmp.eq.s32.totalorder %s18, 0
      %p185 = por %p183, %p184
      %p186 = scmp.ne.s32.totalorder %s172, %s173
      %p187 = scmp.eq.s32.totalorder %s19, 1
      %p188 = por %p186, %p187
      %p190 = scmp.ne.s32.totalorder %s173, %s189
      %p191 = scmp.eq.s32.totalorder %s19, 0
      %p192 = por %p190, %p191
      %p193 = scmp.le.s32.totalorder 1, %s13
      %p194 = scmp.lt.s32.totalorder %s13, 3
      %p195 = pnand %p193, %p194
      %p196 = pneg %p195
      // Predicated region
      $region9: #{res_block_forward.3} parent=5 // pred_check
        _
      $region10: #{res_block_forward.3} parent=5 // pred_check_branch
        %198 = sbr.rel (%p195) target = $region12
      $region11: #{res_block_forward.3} parent=5 // pred_region
        %s199 = ssub.s32 %s13, 1
        // Predicated region
        $region13: #{res_block_forward.3} parent=11 // pred_check
          %p200 = pneg %p60
        $region14: #{res_block_forward.3} parent=11 // pred_check_branch
          %202 = sbr.rel (%p200) target = $region16
        $region15: #{res_block_forward.3} parent=11 // pred_region
          _
        $region16: #{res_block_forward.3} parent=11 // pred_fallthru
          _
        // Predicated region
        $region17: #{res_block_forward.3} parent=11 // pred_check
          %p203 = pneg %p81
        $region18: #{res_block_forward.3} parent=11 // pred_check_branch
          %205 = sbr.rel (%p203) target = $region20
        $region19: #{res_block_forward.3} parent=11 // pred_region
          _
        $region20: #{res_block_forward.3} parent=11 // pred_fallthru
          _
      $region12: #{res_block_forward.3} parent=5 // pred_fallthru
        _
      %p206 = scmp.lt.s32.totalorder %s13, 2
      // Predicated region
      $region21: #{res_block_forward.3} parent=5 // pred_check
        %p207 = pneg %p206
      $region22: #{res_block_forward.3} parent=5 // pred_check_branch
        %209 = sbr.rel (%p207) target = $region24
      $region23: #{res_block_forward.3} parent=5 // pred_region
        // Predicated region
        $region25: #{res_block_forward.3} parent=23 // pred_check
          %p210 = pneg %p33
        $region26: #{res_block_forward.3} parent=23 // pred_check_branch
          %212 = sbr.rel (%p210) target = $region28
        $region27: #{res_block_forward.3} parent=23 // pred_region
          %s213 = sand.u32 %s23, 1
          %s214 = sand.u32 %s23, 1
          %s215 = smul.addr %s214, 288
          %s216 = scalar_lea.vmem [#allocation2], %s215
          %s217 = smul.addr %s13, 18
          %s218 = smul.addr %s217, 4
          %s219 = scalar_lea.vmem %s0, %s218
          // Predicated region
          $region29: #{res_block_forward.3} parent=27 // pred_check
            _
          $region30: #{res_block_forward.3} parent=27 // pred_check_branch
            %221 = sbr.rel (0) target = $region32
          $region31: #{res_block_forward.3} parent=27 // pred_region
            // Predicated region
            $region33: #{res_block_forward.3} parent=31 // pred_check
              _
            $region34: #{res_block_forward.3} parent=31 // pred_check_branch
              %223 = sbr.rel target = $region36
            $region35: #{res_block_forward.3} parent=31 // pred_region
              // Predicated region
              $region48: #{res_block_forward.3} parent=35 // pred_check
                _
              $region49: #{res_block_forward.3} parent=35 // pred_check_branch
                %381 = sbr.rel (0) target = $region51
              $region50: #{res_block_forward.3} parent=35 // pred_region
                loop: start=0, step=1, limit=1
                $region52: #{res_block_forward.3} parent=50 // loop_pre_header
                  _
                $region53: #{res_block_forward.3} parent=50 // loop_header
                  %s383 = sphi 0, %s387
                  %p384 = scmp.ge.s32.totalorder %s383, 1
                  %s388 = sphi %s219, %s219
                  %s389 = sphi %s216, %s216
                $region54: #{res_block_forward.3} parent=50 // loop_header_branch
                  %386 = sbr.rel (%p384) target = $region58
                $region55: #{res_block_forward.3} parent=50 // loop_body
                  _
                $region56: #{res_block_forward.3} parent=50 // loop_footer
                  %s387 = sadd.s32 1, %s383
                $region57: #{res_block_forward.3} parent=50 // loop_footer_branch
                  %382 = sbr.rel target = $region53
                $region58: #{res_block_forward.3} parent=50 // loop_exit
                  _
                %s391 = ssub.s32 16, 1
                loop: start=0, step=1, limit=1
                $region59: #{res_block_forward.3} parent=50 // loop_pre_header
                  _
                $region60: #{res_block_forward.3} parent=50 // loop_header
                  %s393 = sphi 0, %s397
                  %p394 = scmp.ge.s32.totalorder %s393, 1
                  %s398 = sphi %s219, %s219
                  %s399 = sphi %s216, %s216
                $region61: #{res_block_forward.3} parent=50 // loop_header_branch
                  %396 = sbr.rel (%p394) target = $region65
                $region62: #{res_block_forward.3} parent=50 // loop_body
                  %v400 = vld [vmem:[%s398] sm:%s391]
                  %401 = vst [vmem:[%s399] sm:%s391] %v400
                  %v402 = vld [vmem:[%s398 + $0x4] sm:%s391]
                  %403 = vst [vmem:[%s399 + $0x4] sm:%s391] %v402
                  %v404 = vld [vmem:[%s398 + $0x8] sm:%s391]
                  %405 = vst [vmem:[%s399 + $0x8] sm:%s391] %v404
                  %v406 = vld [vmem:[%s398 + $0xc] sm:%s391]
                  %407 = vst [vmem:[%s399 + $0xc] sm:%s391] %v406
                  %v408 = vld [vmem:[%s398 + $0x10] sm:%s391]
                  %409 = vst [vmem:[%s399 + $0x10] sm:%s391] %v408
                  %v410 = vld [vmem:[%s398 + $0x14] sm:%s391]
                  %411 = vst [vmem:[%s399 + $0x14] sm:%s391] %v410
                  %v412 = vld [vmem:[%s398 + $0x18] sm:%s391]
                  %413 = vst [vmem:[%s399 + $0x18] sm:%s391] %v412
                  %v414 = vld [vmem:[%s398 + $0x1c] sm:%s391]
                  %415 = vst [vmem:[%s399 + $0x1c] sm:%s391] %v414
                  %v416 = vld [vmem:[%s398 + $0x20] sm:%s391]
                  %417 = vst [vmem:[%s399 + $0x20] sm:%s391] %v416
                  %v418 = vld [vmem:[%s398 + $0x24] sm:%s391]
                  %419 = vst [vmem:[%s399 + $0x24] sm:%s391] %v418
                  %v420 = vld [vmem:[%s398 + $0x28] sm:%s391]
                  %421 = vst [vmem:[%s399 + $0x28] sm:%s391] %v420
                  %v422 = vld [vmem:[%s398 + $0x2c] sm:%s391]
                  %423 = vst [vmem:[%s399 + $0x2c] sm:%s391] %v422
                  %v424 = vld [vmem:[%s398 + $0x30] sm:%s391]
                  %425 = vst [vmem:[%s399 + $0x30] sm:%s391] %v424
                  %v426 = vld [vmem:[%s398 + $0x34] sm:%s391]
                  %427 = vst [vmem:[%s399 + $0x34] sm:%s391] %v426
                  %v428 = vld [vmem:[%s398 + $0x38] sm:%s391]
                  %429 = vst [vmem:[%s399 + $0x38] sm:%s391] %v428
                  %v430 = vld [vmem:[%s398 + $0x3c] sm:%s391]
                  %431 = vst [vmem:[%s399 + $0x3c] sm:%s391] %v430
                  %v432 = vld [vmem:[%s398 + $0x40] sm:%s391]
                  %433 = vst [vmem:[%s399 + $0x40] sm:%s391] %v432
                  %v434 = vld [vmem:[%s398 + $0x44] sm:%s391]
                  %435 = vst [vmem:[%s399 + $0x44] sm:%s391] %v434
                  %v436 = vld [vmem:[%s398 + $0x90] sm:%s391]
                  %437 = vst [vmem:[%s399 + $0x48] sm:%s391] %v436
                  %v438 = vld [vmem:[%s398 + $0x94] sm:%s391]
                  %439 = vst [vmem:[%s399 + $0x4c] sm:%s391] %v438
                  %v440 = vld [vmem:[%s398 + $0x98] sm:%s391]
                  %441 = vst [vmem:[%s399 + $0x50] sm:%s391] %v440
                  %v442 = vld [vmem:[%s398 + $0x9c] sm:%s391]
                  %443 = vst [vmem:[%s399 + $0x54] sm:%s391] %v442
                  %v444 = vld [vmem:[%s398 + $0xa0] sm:%s391]
                  %445 = vst [vmem:[%s399 + $0x58] sm:%s391] %v444
                  %v446 = vld [vmem:[%s398 + $0xa4] sm:%s391]
                  %447 = vst [vmem:[%s399 + $0x5c] sm:%s391] %v446
                  %v448 = vld [vmem:[%s398 + $0xa8] sm:%s391]
                  %449 = vst [vmem:[%s399 + $0x60] sm:%s391] %v448
                  %v450 = vld [vmem:[%s398 + $0xac] sm:%s391]
                  %451 = vst [vmem:[%s399 + $0x64] sm:%s391] %v450
                  %v452 = vld [vmem:[%s398 + $0xb0] sm:%s391]
                  %453 = vst [vmem:[%s399 + $0x68] sm:%s391] %v452
                  %v454 = vld [vmem:[%s398 + $0xb4] sm:%s391]
                  %455 = vst [vmem:[%s399 + $0x6c] sm:%s391] %v454
                  %v456 = vld [vmem:[%s398 + $0xb8] sm:%s391]
                  %457 = vst [vmem:[%s399 + $0x70] sm:%s391] %v456
                  %v458 = vld [vmem:[%s398 + $0xbc] sm:%s391]
                  %459 = vst [vmem:[%s399 + $0x74] sm:%s391] %v458
                  %v460 = vld [vmem:[%s398 + $0xc0] sm:%s391]
                  %461 = vst [vmem:[%s399 + $0x78] sm:%s391] %v460
                  %v462 = vld [vmem:[%s398 + $0xc4] sm:%s391]
                  %463 = vst [vmem:[%s399 + $0x7c] sm:%s391] %v462
                  %v464 = vld [vmem:[%s398 + $0xc8] sm:%s391]
                  %465 = vst [vmem:[%s399 + $0x80] sm:%s391] %v464
                  %v466 = vld [vmem:[%s398 + $0xcc] sm:%s391]
                  %467 = vst [vmem:[%s399 + $0x84] sm:%s391] %v466
                  %v468 = vld [vmem:[%s398 + $0xd0] sm:%s391]
                  %469 = vst [vmem:[%s399 + $0x88] sm:%s391] %v468
                  %v470 = vld [vmem:[%s398 + $0xd4] sm:%s391]
                  %471 = vst [vmem:[%s399 + $0x8c] sm:%s391] %v470
                  %v472 = vld [vmem:[%s398 + $0x120] sm:%s391]
                  %473 = vst [vmem:[%s399 + $0x90] sm:%s391] %v472
                  %v474 = vld [vmem:[%s398 + $0x124] sm:%s391]
                  %475 = vst [vmem:[%s399 + $0x94] sm:%s391] %v474
                  %v476 = vld [vmem:[%s398 + $0x128] sm:%s391]
                  %477 = vst [vmem:[%s399 + $0x98] sm:%s391] %v476
                  %v478 = vld [vmem:[%s398 + $0x12c] sm:%s391]
                  %479 = vst [vmem:[%s399 + $0x9c] sm:%s391] %v478
                  %v480 = vld [vmem:[%s398 + $0x130] sm:%s391]
                  %481 = vst [vmem:[%s399 + $0xa0] sm:%s391] %v480
                  %v482 = vld [vmem:[%s398 + $0x134] sm:%s391]
                  %483 = vst [vmem:[%s399 + $0xa4] sm:%s391] %v482
                  %v484 = vld [vmem:[%s398 + $0x138] sm:%s391]
                  %485 = vst [vmem:[%s399 + $0xa8] sm:%s391] %v484
                  %v486 = vld [vmem:[%s398 + $0x13c] sm:%s391]
                  %487 = vst [vmem:[%s399 + $0xac] sm:%s391] %v486
                  %v488 = vld [vmem:[%s398 + $0x140] sm:%s391]
                  %489 = vst [vmem:[%s399 + $0xb0] sm:%s391] %v488
                  %v490 = vld [vmem:[%s398 + $0x144] sm:%s391]
                  %491 = vst [vmem:[%s399 + $0xb4] sm:%s391] %v490
                  %v492 = vld [vmem:[%s398 + $0x148] sm:%s391]
                  %493 = vst [vmem:[%s399 + $0xb8] sm:%s391] %v492
                  %v494 = vld [vmem:[%s398 + $0x14c] sm:%s391]
                  %495 = vst [vmem:[%s399 + $0xbc] sm:%s391] %v494
                  %v496 = vld [vmem:[%s398 + $0x150] sm:%s391]
                  %497 = vst [vmem:[%s399 + $0xc0] sm:%s391] %v496
                  %v498 = vld [vmem:[%s398 + $0x154] sm:%s391]
                  %499 = vst [vmem:[%s399 + $0xc4] sm:%s391] %v498
                  %v500 = vld [vmem:[%s398 + $0x158] sm:%s391]
                  %501 = vst [vmem:[%s399 + $0xc8] sm:%s391] %v500
                  %v502 = vld [vmem:[%s398 + $0x15c] sm:%s391]
                  %503 = vst [vmem:[%s399 + $0xcc] sm:%s391] %v502
                  %v504 = vld [vmem:[%s398 + $0x160] sm:%s391]
                  %505 = vst [vmem:[%s399 + $0xd0] sm:%s391] %v504
                  %v506 = vld [vmem:[%s398 + $0x164] sm:%s391]
                  %507 = vst [vmem:[%s399 + $0xd4] sm:%s391] %v506
                  %v508 = vld [vmem:[%s398 + $0x1b0] sm:%s391]
                  %509 = vst [vmem:[%s399 + $0xd8] sm:%s391] %v508
                  %v510 = vld [vmem:[%s398 + $0x1b4] sm:%s391]
                  %511 = vst [vmem:[%s399 + $0xdc] sm:%s391] %v510
                  %v512 = vld [vmem:[%s398 + $0x1b8] sm:%s391]
                  %513 = vst [vmem:[%s399 + $0xe0] sm:%s391] %v512
                  %v514 = vld [vmem:[%s398 + $0x1bc] sm:%s391]
                  %515 = vst [vmem:[%s399 + $0xe4] sm:%s391] %v514
                  %v516 = vld [vmem:[%s398 + $0x1c0] sm:%s391]
                  %517 = vst [vmem:[%s399 + $0xe8] sm:%s391] %v516
                  %v518 = vld [vmem:[%s398 + $0x1c4] sm:%s391]
                  %519 = vst [vmem:[%s399 + $0xec] sm:%s391] %v518
                  %v520 = vld [vmem:[%s398 + $0x1c8] sm:%s391]
                  %521 = vst [vmem:[%s399 + $0xf0] sm:%s391] %v520
                  %v522 = vld [vmem:[%s398 + $0x1cc] sm:%s391]
                  %523 = vst [vmem:[%s399 + $0xf4] sm:%s391] %v522
                  %v524 = vld [vmem:[%s398 + $0x1d0] sm:%s391]
                  %525 = vst [vmem:[%s399 + $0xf8] sm:%s391] %v524
                  %v526 = vld [vmem:[%s398 + $0x1d4] sm:%s391]
                  %527 = vst [vmem:[%s399 + $0xfc] sm:%s391] %v526
                  %v528 = vld [vmem:[%s398 + $0x1d8] sm:%s391]
                  %529 = vst [vmem:[%s399 + $0x100] sm:%s391] %v528
                  %v530 = vld [vmem:[%s398 + $0x1dc] sm:%s391]
                  %531 = vst [vmem:[%s399 + $0x104] sm:%s391] %v530
                  %v532 = vld [vmem:[%s398 + $0x1e0] sm:%s391]
                  %533 = vst [vmem:[%s399 + $0x108] sm:%s391] %v532
                  %v534 = vld [vmem:[%s398 + $0x1e4] sm:%s391]
                  %535 = vst [vmem:[%s399 + $0x10c] sm:%s391] %v534
                  %v536 = vld [vmem:[%s398 + $0x1e8] sm:%s391]
                  %537 = vst [vmem:[%s399 + $0x110] sm:%s391] %v536
                  %v538 = vld [vmem:[%s398 + $0x1ec] sm:%s391]
                  %539 = vst [vmem:[%s399 + $0x114] sm:%s391] %v538
                  %v540 = vld [vmem:[%s398 + $0x1f0] sm:%s391]
                  %541 = vst [vmem:[%s399 + $0x118] sm:%s391] %v540
                  %v542 = vld [vmem:[%s398 + $0x1f4] sm:%s391]
                  %543 = vst [vmem:[%s399 + $0x11c] sm:%s391] %v542
                $region63: #{res_block_forward.3} parent=50 // loop_footer
                  %s397 = sadd.s32 1, %s393
                $region64: #{res_block_forward.3} parent=50 // loop_footer_branch
                  %392 = sbr.rel target = $region60
                $region65: #{res_block_forward.3} parent=50 // loop_exit
                  _
              $region51: #{res_block_forward.3} parent=35 // pred_fallthru
                _
            $region36: #{res_block_forward.3} parent=31 // pred_fallthru
              _
            // Predicated region
            $region37: #{res_block_forward.3} parent=31 // pred_check
              _
            $region38: #{res_block_forward.3} parent=31 // pred_check_branch
              %225 = sbr.rel (0) target = $region40
            $region39: #{res_block_forward.3} parent=31 // pred_region
              %s227 = ssub.s32 16, 1
              loop: start=0, step=1, limit=1
              $region41: #{res_block_forward.3} parent=39 // loop_pre_header
                _
              $region42: #{res_block_forward.3} parent=39 // loop_header
                %s229 = sphi 0, %s233
                %p230 = scmp.ge.s32.totalorder %s229, 1
                %s234 = sphi %s219, %s219
                %s235 = sphi %s216, %s216
              $region43: #{res_block_forward.3} parent=39 // loop_header_branch
                %232 = sbr.rel (%p230) target = $region47
              $region44: #{res_block_forward.3} parent=39 // loop_body
                %v236 = vld [vmem:[%s234] sm:%s227]
                %237 = vst [vmem:[%s235] sm:%s227] %v236
                %v238 = vld [vmem:[%s234 + $0x4] sm:%s227]
                %239 = vst [vmem:[%s235 + $0x4] sm:%s227] %v238
                %v240 = vld [vmem:[%s234 + $0x8] sm:%s227]
                %241 = vst [vmem:[%s235 + $0x8] sm:%s227] %v240
                %v242 = vld [vmem:[%s234 + $0xc] sm:%s227]
                %243 = vst [vmem:[%s235 + $0xc] sm:%s227] %v242
                %v244 = vld [vmem:[%s234 + $0x10] sm:%s227]
                %245 = vst [vmem:[%s235 + $0x10] sm:%s227] %v244
                %v246 = vld [vmem:[%s234 + $0x14] sm:%s227]
                %247 = vst [vmem:[%s235 + $0x14] sm:%s227] %v246
                %v248 = vld [vmem:[%s234 + $0x18] sm:%s227]
                %249 = vst [vmem:[%s235 + $0x18] sm:%s227] %v248
                %v250 = vld [vmem:[%s234 + $0x1c] sm:%s227]
                %251 = vst [vmem:[%s235 + $0x1c] sm:%s227] %v250
                %v252 = vld [vmem:[%s234 + $0x20] sm:%s227]
                %253 = vst [vmem:[%s235 + $0x20] sm:%s227] %v252
                %v254 = vld [vmem:[%s234 + $0x24] sm:%s227]
                %255 = vst [vmem:[%s235 + $0x24] sm:%s227] %v254
                %v256 = vld [vmem:[%s234 + $0x28] sm:%s227]
                %257 = vst [vmem:[%s235 + $0x28] sm:%s227] %v256
                %v258 = vld [vmem:[%s234 + $0x2c] sm:%s227]
                %259 = vst [vmem:[%s235 + $0x2c] sm:%s227] %v258
                %v260 = vld [vmem:[%s234 + $0x30] sm:%s227]
                %261 = vst [vmem:[%s235 + $0x30] sm:%s227] %v260
                %v262 = vld [vmem:[%s234 + $0x34] sm:%s227]
                %263 = vst [vmem:[%s235 + $0x34] sm:%s227] %v262
                %v264 = vld [vmem:[%s234 + $0x38] sm:%s227]
                %265 = vst [vmem:[%s235 + $0x38] sm:%s227] %v264
                %v266 = vld [vmem:[%s234 + $0x3c] sm:%s227]
                %267 = vst [vmem:[%s235 + $0x3c] sm:%s227] %v266
                %v268 = vld [vmem:[%s234 + $0x40] sm:%s227]
                %269 = vst [vmem:[%s235 + $0x40] sm:%s227] %v268
                %v270 = vld [vmem:[%s234 + $0x44] sm:%s227]
                %271 = vst [vmem:[%s235 + $0x44] sm:%s227] %v270
                %v272 = vld [vmem:[%s234 + $0x90] sm:%s227]
                %273 = vst [vmem:[%s235 + $0x48] sm:%s227] %v272
                %v274 = vld [vmem:[%s234 + $0x94] sm:%s227]
                %275 = vst [vmem:[%s235 + $0x4c] sm:%s227] %v274
                %v276 = vld [vmem:[%s234 + $0x98] sm:%s227]
                %277 = vst [vmem:[%s235 + $0x50] sm:%s227] %v276
                %v278 = vld [vmem:[%s234 + $0x9c] sm:%s227]
                %279 = vst [vmem:[%s235 + $0x54] sm:%s227] %v278
                %v280 = vld [vmem:[%s234 + $0xa0] sm:%s227]
                %281 = vst [vmem:[%s235 + $0x58] sm:%s227] %v280
                %v282 = vld [vmem:[%s234 + $0xa4] sm:%s227]
                %283 = vst [vmem:[%s235 + $0x5c] sm:%s227] %v282
                %v284 = vld [vmem:[%s234 + $0xa8] sm:%s227]
                %285 = vst [vmem:[%s235 + $0x60] sm:%s227] %v284
                %v286 = vld [vmem:[%s234 + $0xac] sm:%s227]
                %287 = vst [vmem:[%s235 + $0x64] sm:%s227] %v286
                %v288 = vld [vmem:[%s234 + $0xb0] sm:%s227]
                %289 = vst [vmem:[%s235 + $0x68] sm:%s227] %v288
                %v290 = vld [vmem:[%s234 + $0xb4] sm:%s227]
                %291 = vst [vmem:[%s235 + $0x6c] sm:%s227] %v290
                %v292 = vld [vmem:[%s234 + $0xb8] sm:%s227]
                %293 = vst [vmem:[%s235 + $0x70] sm:%s227] %v292
                %v294 = vld [vmem:[%s234 + $0xbc] sm:%s227]
                %295 = vst [vmem:[%s235 + $0x74] sm:%s227] %v294
                %v296 = vld [vmem:[%s234 + $0xc0] sm:%s227]
                %297 = vst [vmem:[%s235 + $0x78] sm:%s227] %v296
                %v298 = vld [vmem:[%s234 + $0xc4] sm:%s227]
                %299 = vst [vmem:[%s235 + $0x7c] sm:%s227] %v298
                %v300 = vld [vmem:[%s234 + $0xc8] sm:%s227]
                %301 = vst [vmem:[%s235 + $0x80] sm:%s227] %v300
                %v302 = vld [vmem:[%s234 + $0xcc] sm:%s227]
                %303 = vst [vmem:[%s235 + $0x84] sm:%s227] %v302
                %v304 = vld [vmem:[%s234 + $0xd0] sm:%s227]
                %305 = vst [vmem:[%s235 + $0x88] sm:%s227] %v304
                %v306 = vld [vmem:[%s234 + $0xd4] sm:%s227]
                %307 = vst [vmem:[%s235 + $0x8c] sm:%s227] %v306
                %v308 = vld [vmem:[%s234 + $0x120] sm:%s227]
                %309 = vst [vmem:[%s235 + $0x90] sm:%s227] %v308
                %v310 = vld [vmem:[%s234 + $0x124] sm:%s227]
                %311 = vst [vmem:[%s235 + $0x94] sm:%s227] %v310
                %v312 = vld [vmem:[%s234 + $0x128] sm:%s227]
                %313 = vst [vmem:[%s235 + $0x98] sm:%s227] %v312
                %v314 = vld [vmem:[%s234 + $0x12c] sm:%s227]
                %315 = vst [vmem:[%s235 + $0x9c] sm:%s227] %v314
                %v316 = vld [vmem:[%s234 + $0x130] sm:%s227]
                %317 = vst [vmem:[%s235 + $0xa0] sm:%s227] %v316
                %v318 = vld [vmem:[%s234 + $0x134] sm:%s227]
                %319 = vst [vmem:[%s235 + $0xa4] sm:%s227] %v318
                %v320 = vld [vmem:[%s234 + $0x138] sm:%s227]
                %321 = vst [vmem:[%s235 + $0xa8] sm:%s227] %v320
                %v322 = vld [vmem:[%s234 + $0x13c] sm:%s227]
                %323 = vst [vmem:[%s235 + $0xac] sm:%s227] %v322
                %v324 = vld [vmem:[%s234 + $0x140] sm:%s227]
                %325 = vst [vmem:[%s235 + $0xb0] sm:%s227] %v324
                %v326 = vld [vmem:[%s234 + $0x144] sm:%s227]
                %327 = vst [vmem:[%s235 + $0xb4] sm:%s227] %v326
                %v328 = vld [vmem:[%s234 + $0x148] sm:%s227]
                %329 = vst [vmem:[%s235 + $0xb8] sm:%s227] %v328
                %v330 = vld [vmem:[%s234 + $0x14c] sm:%s227]
                %331 = vst [vmem:[%s235 + $0xbc] sm:%s227] %v330
                %v332 = vld [vmem:[%s234 + $0x150] sm:%s227]
                %333 = vst [vmem:[%s235 + $0xc0] sm:%s227] %v332
                %v334 = vld [vmem:[%s234 + $0x154] sm:%s227]
                %335 = vst [vmem:[%s235 + $0xc4] sm:%s227] %v334
                %v336 = vld [vmem:[%s234 + $0x158] sm:%s227]
                %337 = vst [vmem:[%s235 + $0xc8] sm:%s227] %v336
                %v338 = vld [vmem:[%s234 + $0x15c] sm:%s227]
                %339 = vst [vmem:[%s235 + $0xcc] sm:%s227] %v338
                %v340 = vld [vmem:[%s234 + $0x160] sm:%s227]
                %341 = vst [vmem:[%s235 + $0xd0] sm:%s227] %v340
                %v342 = vld [vmem:[%s234 + $0x164] sm:%s227]
                %343 = vst [vmem:[%s235 + $0xd4] sm:%s227] %v342
                %v344 = vld [vmem:[%s234 + $0x1b0] sm:%s227]
                %345 = vst [vmem:[%s235 + $0xd8] sm:%s227] %v344
                %v346 = vld [vmem:[%s234 + $0x1b4] sm:%s227]
                %347 = vst [vmem:[%s235 + $0xdc] sm:%s227] %v346
                %v348 = vld [vmem:[%s234 + $0x1b8] sm:%s227]
                %349 = vst [vmem:[%s235 + $0xe0] sm:%s227] %v348
                %v350 = vld [vmem:[%s234 + $0x1bc] sm:%s227]
                %351 = vst [vmem:[%s235 + $0xe4] sm:%s227] %v350
                %v352 = vld [vmem:[%s234 + $0x1c0] sm:%s227]
                %353 = vst [vmem:[%s235 + $0xe8] sm:%s227] %v352
                %v354 = vld [vmem:[%s234 + $0x1c4] sm:%s227]
                %355 = vst [vmem:[%s235 + $0xec] sm:%s227] %v354
                %v356 = vld [vmem:[%s234 + $0x1c8] sm:%s227]
                %357 = vst [vmem:[%s235 + $0xf0] sm:%s227] %v356
                %v358 = vld [vmem:[%s234 + $0x1cc] sm:%s227]
                %359 = vst [vmem:[%s235 + $0xf4] sm:%s227] %v358
                %v360 = vld [vmem:[%s234 + $0x1d0] sm:%s227]
                %361 = vst [vmem:[%s235 + $0xf8] sm:%s227] %v360
                %v362 = vld [vmem:[%s234 + $0x1d4] sm:%s227]
                %363 = vst [vmem:[%s235 + $0xfc] sm:%s227] %v362
                %v364 = vld [vmem:[%s234 + $0x1d8] sm:%s227]
                %365 = vst [vmem:[%s235 + $0x100] sm:%s227] %v364
                %v366 = vld [vmem:[%s234 + $0x1dc] sm:%s227]
                %367 = vst [vmem:[%s235 + $0x104] sm:%s227] %v366
                %v368 = vld [vmem:[%s234 + $0x1e0] sm:%s227]
                %369 = vst [vmem:[%s235 + $0x108] sm:%s227] %v368
                %v370 = vld [vmem:[%s234 + $0x1e4] sm:%s227]
                %371 = vst [vmem:[%s235 + $0x10c] sm:%s227] %v370
                %v372 = vld [vmem:[%s234 + $0x1e8] sm:%s227]
                %373 = vst [vmem:[%s235 + $0x110] sm:%s227] %v372
                %v374 = vld [vmem:[%s234 + $0x1ec] sm:%s227]
                %375 = vst [vmem:[%s235 + $0x114] sm:%s227] %v374
                %v376 = vld [vmem:[%s234 + $0x1f0] sm:%s227]
                %377 = vst [vmem:[%s235 + $0x118] sm:%s227] %v376
                %v378 = vld [vmem:[%s234 + $0x1f4] sm:%s227]
                %379 = vst [vmem:[%s235 + $0x11c] sm:%s227] %v378
              $region45: #{res_block_forward.3} parent=39 // loop_footer
                %s233 = sadd.s32 1, %s229
              $region46: #{res_block_forward.3} parent=39 // loop_footer_branch
                %228 = sbr.rel target = $region42
              $region47: #{res_block_forward.3} parent=39 // loop_exit
                _
            $region40: #{res_block_forward.3} parent=31 // pred_fallthru
              _
          $region32: #{res_block_forward.3} parent=27 // pred_fallthru
            _
          %544 = vnop
        $region28: #{res_block_forward.3} parent=23 // pred_fallthru
          _
      $region24: #{res_block_forward.3} parent=5 // pred_fallthru
        _
      %p545 = scmp.le.s32.totalorder 1, %s13
      %p546 = scmp.lt.s32.totalorder %s13, 3
      %p547 = pnand %p545, %p546
      %p548 = pneg %p547
      // Predicated region
      $region66: #{res_block_forward.3} parent=5 // pred_check
        _
      $region67: #{res_block_forward.3} parent=5 // pred_check_branch
        %550 = sbr.rel (%p547) target = $region69
      $region68: #{res_block_forward.3} parent=5 // pred_region
        %s551 = ssub.s32 %s13, 1
        %s552 = sand.u32 %s26, 1
        %s553 = sand.u32 %s26, 1
        %s554 = smul.addr %s553, 288
        %s555 = scalar_lea.vmem [#allocation2], %s554
        // Predicated region
        $region70: #{res_block_forward.3} parent=68 // pred_check
          %p556 = pneg %p39
        $region71: #{res_block_forward.3} parent=68 // pred_check_branch
          %558 = sbr.rel (%p556) target = $region73
        $region72: #{res_block_forward.3} parent=68 // pred_region
          _
        $region73: #{res_block_forward.3} parent=68 // pred_fallthru
          _
        %s559 = sand.u32 %s26, 1
        %s560 = sand.u32 %s26, 1
        %s561 = smul.addr %s560, 288
        %s562 = scalar_lea.vmem [#allocation2], %s561
        %p563 = pneg %p39
        %p564 = pneg %p36
        %p565 = pneg %p60
        %p566 = pneg %p57
        %p567 = pneg %p81
        %p568 = pneg %p78
        %p569 = pneg %p107
        %p570 = pneg %p104
        %p571 = scmp.lt.s32.totalorder %s18, 1
        %s572 = scalar_select %p571, %s18, 1
        %s573 = smul.addr %s572, 8
        %s574 = smul.addr %s573, 8
        %s575 = scalar_lea.vmem %s3, %s574
        %p576 = pneg %p133
        %p577 = pneg %p130
        %p578 = scmp.lt.s32.totalorder %s18, 1
        %s579 = scalar_select %p578, %s18, 1
        %s580 = smul.addr %s579, 8
        %s581 = scalar_lea.vmem %s4, %s580
        %p582 = pneg %p159
        %p583 = pneg %p156
        %p584 = scmp.lt.s32.totalorder %s18, 1
        %s585 = scalar_select %p584, %s18, 1
        %s586 = smul.addr %s585, 8
        %s587 = smul.addr %s586, 8
        %s588 = scalar_lea.vmem %s5, %s587
        %p589 = pneg %p185
        %p590 = pneg %p182
        %p591 = scmp.lt.s32.totalorder %s18, 1
        %s592 = scalar_select %p591, %s18, 1
        %s593 = smul.addr %s592, 8
        %s594 = scalar_lea.vmem %s6, %s593
        %p595 = scmp.lt.s32.totalorder %s18, 1
        %s596 = scalar_select %p595, %s18, 1
        %s597 = smul.addr %s596, 8
        %s598 = smul.addr %s597, 8
        %s599 = scalar_lea.vmem %s3, %s598
        %p600 = scmp.lt.s32.totalorder %s18, 1
        %s601 = scalar_select %p600, %s18, 1
        %s602 = smul.addr %s601, 8
        %s603 = scalar_lea.vmem %s4, %s602
        %p604 = scmp.lt.s32.totalorder %s18, 1
        %s605 = scalar_select %p604, %s18, 1
        %s606 = smul.addr %s605, 8
        %s607 = smul.addr %s606, 8
        %s608 = scalar_lea.vmem %s5, %s607
        %p609 = scmp.lt.s32.totalorder %s18, 1
        %s610 = scalar_select %p609, %s18, 1
        %s611 = smul.addr %s610, 8
        %s612 = scalar_lea.vmem %s6, %s611
        %v614 = vld [vmem:[%s555] sm:$0xf]
        %v615 = vld [vmem:[%s555 + $0x8] sm:$0xf]
        %v616 = vld [vmem:[%s555 + $0x10] sm:$0xf]
        %v617 = vld [vmem:[%s555 + $0x18] sm:$0xf]
        %v618 = vld [vmem:[%s555 + $0x20] sm:$0xf]
        %v619 = vld [vmem:[%s555 + $0x28] sm:$0xf]
        %v620 = vld [vmem:[%s555 + $0x30] sm:$0xf]
        %v621 = vld [vmem:[%s555 + $0x38] sm:$0xf]
        %s622 = scalar_lea.vmem %s555, 72 [#allocation2]
        %v623 = vld [vmem:[%s622] sm:$0xf]
        %v624 = vld [vmem:[%s622 + $0x8] sm:$0xf]
        %v625 = vld [vmem:[%s622 + $0x10] sm:$0xf]
        %v626 = vld [vmem:[%s622 + $0x18] sm:$0xf]
        %v627 = vld [vmem:[%s622 + $0x20] sm:$0xf]
        %v628 = vld [vmem:[%s622 + $0x28] sm:$0xf]
        %v629 = vld [vmem:[%s622 + $0x30] sm:$0xf]
        %v630 = vld [vmem:[%s622 + $0x38] sm:$0xf]
        %v631 = vld [vmem:[%s555 + $0x4] sm:$0x1]
        %v632 = vld [vmem:[%s555 + $0xc] sm:$0x1]
        %v633 = vld [vmem:[%s555 + $0x14] sm:$0x1]
        %v634 = vld [vmem:[%s555 + $0x1c] sm:$0x1]
        %v635 = vld [vmem:[%s555 + $0x24] sm:$0x1]
        %v636 = vld [vmem:[%s555 + $0x2c] sm:$0x1]
        %v637 = vld [vmem:[%s555 + $0x34] sm:$0x1]
        %v638 = vld [vmem:[%s555 + $0x3c] sm:$0x1]
        %s639 = scalar_lea.vmem %s555, 144 [#allocation2]
        %v640 = vld [vmem:[%s639] sm:$0xf]
        %v641 = vld [vmem:[%s639 + $0x8] sm:$0xf]
        %v642 = vld [vmem:[%s639 + $0x10] sm:$0xf]
        %v643 = vld [vmem:[%s639 + $0x18] sm:$0xf]
        %v644 = vld [vmem:[%s639 + $0x20] sm:$0xf]
        %v645 = vld [vmem:[%s639 + $0x28] sm:$0xf]
        %v646 = vld [vmem:[%s639 + $0x30] sm:$0xf]
        %v647 = vld [vmem:[%s639 + $0x38] sm:$0xf]
        %s648 = scalar_lea.vmem %s555, 216 [#allocation2]
        %v649 = vld [vmem:[%s648] sm:$0xf]
        %v650 = vld [vmem:[%s648 + $0x8] sm:$0xf]
        %v651 = vld [vmem:[%s648 + $0x10] sm:$0xf]
        %v652 = vld [vmem:[%s648 + $0x18] sm:$0xf]
        %v653 = vld [vmem:[%s648 + $0x20] sm:$0xf]
        %v654 = vld [vmem:[%s648 + $0x28] sm:$0xf]
        %v655 = vld [vmem:[%s648 + $0x30] sm:$0xf]
        %v656 = vld [vmem:[%s648 + $0x38] sm:$0xf]
        %v657 = vld [vmem:[%s639 + $0x4] sm:$0x1]
        %v658 = vld [vmem:[%s639 + $0xc] sm:$0x1]
        %v659 = vld [vmem:[%s639 + $0x14] sm:$0x1]
        %v660 = vld [vmem:[%s639 + $0x1c] sm:$0x1]
        %v661 = vld [vmem:[%s639 + $0x24] sm:$0x1]
        %v662 = vld [vmem:[%s639 + $0x2c] sm:$0x1]
        %v663 = vld [vmem:[%s639 + $0x34] sm:$0x1]
        %v664 = vld [vmem:[%s639 + $0x3c] sm:$0x1]
        %s665 = scalar_lea.vmem %s555, 8 [#allocation2]
        %v666 = vld [vmem:[%s665] sm:$0xf]
        %v667 = vld [vmem:[%s665 + $0x8] sm:$0xf]
        %v668 = vld [vmem:[%s665 + $0x10] sm:$0xf]
        %v669 = vld [vmem:[%s665 + $0x18] sm:$0xf]
        %v670 = vld [vmem:[%s665 + $0x20] sm:$0xf]
        %v671 = vld [vmem:[%s665 + $0x28] sm:$0xf]
        %v672 = vld [vmem:[%s665 + $0x30] sm:$0xf]
        %v673 = vld [vmem:[%s665 + $0x38] sm:$0xf]
        %s674 = scalar_lea.vmem %s555, 80 [#allocation2]
        %v675 = vld [vmem:[%s674] sm:$0xf]
        %v676 = vld [vmem:[%s674 + $0x8] sm:$0xf]
        %v677 = vld [vmem:[%s674 + $0x10] sm:$0xf]
        %v678 = vld [vmem:[%s674 + $0x18] sm:$0xf]
        %v679 = vld [vmem:[%s674 + $0x20] sm:$0xf]
        %v680 = vld [vmem:[%s674 + $0x28] sm:$0xf]
        %v681 = vld [vmem:[%s674 + $0x30] sm:$0xf]
        %v682 = vld [vmem:[%s674 + $0x38] sm:$0xf]
        %v683 = vld [vmem:[%s665 + $0x4] sm:$0x1]
        %v684 = vld [vmem:[%s665 + $0xc] sm:$0x1]
        %v685 = vld [vmem:[%s665 + $0x14] sm:$0x1]
        %v686 = vld [vmem:[%s665 + $0x1c] sm:$0x1]
        %v687 = vld [vmem:[%s665 + $0x24] sm:$0x1]
        %v688 = vld [vmem:[%s665 + $0x2c] sm:$0x1]
        %v689 = vld [vmem:[%s665 + $0x34] sm:$0x1]
        %v690 = vld [vmem:[%s665 + $0x3c] sm:$0x1]
        %v707 = vunpack.c.l.b16 %v614
        %v708 = vunpack.c.l.b16 %v631
        %v709 = vunpack.c.l.b16 %v615
        %v710 = vunpack.c.l.b16 %v632
        %v711 = vunpack.c.l.b16 %v616
        %v712 = vunpack.c.l.b16 %v633
        %v713 = vunpack.c.l.b16 %v617
        %v714 = vunpack.c.l.b16 %v634
        %v715 = vunpack.c.l.b16 %v618
        %v716 = vunpack.c.l.b16 %v635
        %v717 = vunpack.c.l.b16 %v619
        %v718 = vunpack.c.l.b16 %v636
        %v719 = vunpack.c.l.b16 %v620
        %v720 = vunpack.c.l.b16 %v637
        %v721 = vunpack.c.l.b16 %v621
        %v722 = vunpack.c.l.b16 %v638
        %v723 = vpack.c.b16 %v708, %v707
        %v724 = vpack.c.b16 %v710, %v709
        %v725 = vpack.c.b16 %v712, %v711
        %v726 = vpack.c.b16 %v714, %v713
        %v727 = vpack.c.b16 %v716, %v715
        %v728 = vpack.c.b16 %v718, %v717
        %v729 = vpack.c.b16 %v720, %v719
        %v730 = vpack.c.b16 %v722, %v721
        %v732 = vshrl.u32 %v723, 16
        %v734 = vshll.u32 %v723, 16
        %v736 = vrot.slane %v734, 1
        %v737 = vor.u32 %v732, %v736
        %v739 = vshrl.u32 %v724, 16
        %v741 = vshll.u32 %v724, 16
        %v743 = vrot.slane %v741, 1
        %v744 = vor.u32 %v739, %v743
        %v746 = vshrl.u32 %v725, 16
        %v748 = vshll.u32 %v725, 16
        %v750 = vrot.slane %v748, 1
        %v751 = vor.u32 %v746, %v750
        %v753 = vshrl.u32 %v726, 16
        %v755 = vshll.u32 %v726, 16
        %v757 = vrot.slane %v755, 1
        %v758 = vor.u32 %v753, %v757
        %v760 = vshrl.u32 %v727, 16
        %v762 = vshll.u32 %v727, 16
        %v764 = vrot.slane %v762, 1
        %v765 = vor.u32 %v760, %v764
        %v767 = vshrl.u32 %v728, 16
        %v769 = vshll.u32 %v728, 16
        %v771 = vrot.slane %v769, 1
        %v772 = vor.u32 %v767, %v771
        %v774 = vshrl.u32 %v729, 16
        %v776 = vshll.u32 %v729, 16
        %v778 = vrot.slane %v776, 1
        %v779 = vor.u32 %v774, %v778
        %v781 = vshrl.u32 %v730, 16
        %v783 = vshll.u32 %v730, 16
        %v785 = vrot.slane %v783, 1
        %v786 = vor.u32 %v781, %v785
        %v811 = vunpack.c.l.b16 %v640
        %v812 = vunpack.c.l.b16 %v657
        %v813 = vunpack.c.l.b16 %v641
        %v814 = vunpack.c.l.b16 %v658
        %v815 = vunpack.c.l.b16 %v642
        %v816 = vunpack.c.l.b16 %v659
        %v817 = vunpack.c.l.b16 %v643
        %v818 = vunpack.c.l.b16 %v660
        %v819 = vunpack.c.l.b16 %v644
        %v820 = vunpack.c.l.b16 %v661
        %v821 = vunpack.c.l.b16 %v645
        %v822 = vunpack.c.l.b16 %v662
        %v823 = vunpack.c.l.b16 %v646
        %v824 = vunpack.c.l.b16 %v663
        %v825 = vunpack.c.l.b16 %v647
        %v826 = vunpack.c.l.b16 %v664
        %v827 = vpack.c.b16 %v812, %v811
        %v828 = vpack.c.b16 %v814, %v813
        %v829 = vpack.c.b16 %v816, %v815
        %v830 = vpack.c.b16 %v818, %v817
        %v831 = vpack.c.b16 %v820, %v819
        %v832 = vpack.c.b16 %v822, %v821
        %v833 = vpack.c.b16 %v824, %v823
        %v834 = vpack.c.b16 %v826, %v825
        %v836 = vshrl.u32 %v827, 16
        %v838 = vshll.u32 %v827, 16
        %v840 = vrot.slane %v838, 1
        %v841 = vor.u32 %v836, %v840
        %v843 = vshrl.u32 %v828, 16
        %v845 = vshll.u32 %v828, 16
        %v847 = vrot.slane %v845, 1
        %v848 = vor.u32 %v843, %v847
        %v850 = vshrl.u32 %v829, 16
        %v852 = vshll.u32 %v829, 16
        %v854 = vrot.slane %v852, 1
        %v855 = vor.u32 %v850, %v854
        %v857 = vshrl.u32 %v830, 16
        %v859 = vshll.u32 %v830, 16
        %v861 = vrot.slane %v859, 1
        %v862 = vor.u32 %v857, %v861
        %v864 = vshrl.u32 %v831, 16
        %v866 = vshll.u32 %v831, 16
        %v868 = vrot.slane %v866, 1
        %v869 = vor.u32 %v864, %v868
        %v871 = vshrl.u32 %v832, 16
        %v873 = vshll.u32 %v832, 16
        %v875 = vrot.slane %v873, 1
        %v876 = vor.u32 %v871, %v875
        %v878 = vshrl.u32 %v833, 16
        %v880 = vshll.u32 %v833, 16
        %v882 = vrot.slane %v880, 1
        %v883 = vor.u32 %v878, %v882
        %v885 = vshrl.u32 %v834, 16
        %v887 = vshll.u32 %v834, 16
        %v889 = vrot.slane %v887, 1
        %v890 = vor.u32 %v885, %v889
        %v915 = vunpack.c.l.b16 %v666
        %v916 = vunpack.c.l.b16 %v683
        %v917 = vunpack.c.l.b16 %v667
        %v918 = vunpack.c.l.b16 %v684
        %v919 = vunpack.c.l.b16 %v668
        %v920 = vunpack.c.l.b16 %v685
        %v921 = vunpack.c.l.b16 %v669
        %v922 = vunpack.c.l.b16 %v686
        %v923 = vunpack.c.l.b16 %v670
        %v924 = vunpack.c.l.b16 %v687
        %v925 = vunpack.c.l.b16 %v671
        %v926 = vunpack.c.l.b16 %v688
        %v927 = vunpack.c.l.b16 %v672
        %v928 = vunpack.c.l.b16 %v689
        %v929 = vunpack.c.l.b16 %v673
        %v930 = vunpack.c.l.b16 %v690
        %v931 = vpack.c.b16 %v916, %v915
        %v932 = vpack.c.b16 %v918, %v917
        %v933 = vpack.c.b16 %v920, %v919
        %v934 = vpack.c.b16 %v922, %v921
        %v935 = vpack.c.b16 %v924, %v923
        %v936 = vpack.c.b16 %v926, %v925
        %v937 = vpack.c.b16 %v928, %v927
        %v938 = vpack.c.b16 %v930, %v929
        %v940 = vshrl.u32 %v931, 16
        %v942 = vshll.u32 %v931, 16
        %v944 = vrot.slane %v942, 1
        %v945 = vor.u32 %v940, %v944
        %v947 = vshrl.u32 %v932, 16
        %v949 = vshll.u32 %v932, 16
        %v951 = vrot.slane %v949, 1
        %v952 = vor.u32 %v947, %v951
        %v954 = vshrl.u32 %v933, 16
        %v956 = vshll.u32 %v933, 16
        %v958 = vrot.slane %v956, 1
        %v959 = vor.u32 %v954, %v958
        %v961 = vshrl.u32 %v934, 16
        %v963 = vshll.u32 %v934, 16
        %v965 = vrot.slane %v963, 1
        %v966 = vor.u32 %v961, %v965
        %v968 = vshrl.u32 %v935, 16
        %v970 = vshll.u32 %v935, 16
        %v972 = vrot.slane %v970, 1
        %v973 = vor.u32 %v968, %v972
        %v975 = vshrl.u32 %v936, 16
        %v977 = vshll.u32 %v936, 16
        %v979 = vrot.slane %v977, 1
        %v980 = vor.u32 %v975, %v979
        %v982 = vshrl.u32 %v937, 16
        %v984 = vshll.u32 %v937, 16
        %v986 = vrot.slane %v984, 1
        %v987 = vor.u32 %v982, %v986
        %v989 = vshrl.u32 %v938, 16
        %v991 = vshll.u32 %v938, 16
        %v993 = vrot.slane %v991, 1
        %v994 = vor.u32 %v989, %v993
        %v1003 = vunpack.c.l.bf16 %v614
        %v1004 = vunpack.c.l.bf16 %v623
        %v1005 = vunpack.c.l.bf16 %v737
        %v1006 = vunpack.c.l.bf16 %v640
        %v1007 = vunpack.c.l.bf16 %v649
        %v1008 = vunpack.c.l.bf16 %v841
        %v1009 = vunpack.c.l.bf16 %v666
        %v1010 = vunpack.c.l.bf16 %v675
        %v1011 = vunpack.c.l.bf16 %v945
        %v1012 = vunpack.c.l.bf16 %v615
        %v1013 = vunpack.c.l.bf16 %v624
        %v1014 = vunpack.c.l.bf16 %v744
        %v1015 = vunpack.c.l.bf16 %v641
        %v1016 = vunpack.c.l.bf16 %v650
        %v1017 = vunpack.c.l.bf16 %v848
        %v1018 = vunpack.c.l.bf16 %v667
        %v1019 = vunpack.c.l.bf16 %v676
        %v1020 = vunpack.c.l.bf16 %v952
        %v1021 = vunpack.c.l.bf16 %v616
        %v1022 = vunpack.c.l.bf16 %v625
        %v1023 = vunpack.c.l.bf16 %v751
        %v1024 = vunpack.c.l.bf16 %v642
        %v1025 = vunpack.c.l.bf16 %v651
        %v1026 = vunpack.c.l.bf16 %v855
        %v1027 = vunpack.c.l.bf16 %v668
        %v1028 = vunpack.c.l.bf16 %v677
        %v1029 = vunpack.c.l.bf16 %v959
        %v1030 = vunpack.c.l.bf16 %v617
        %v1031 = vunpack.c.l.bf16 %v626
        %v1032 = vunpack.c.l.bf16 %v758
        %v1033 = vunpack.c.l.bf16 %v643
        %v1034 = vunpack.c.l.bf16 %v652
        %v1035 = vunpack.c.l.bf16 %v862
        %v1036 = vunpack.c.l.bf16 %v669
        %v1037 = vunpack.c.l.bf16 %v678
        %v1038 = vunpack.c.l.bf16 %v966
        %v1039 = vunpack.c.l.bf16 %v618
        %v1040 = vunpack.c.l.bf16 %v627
        %v1041 = vunpack.c.l.bf16 %v765
        %v1042 = vunpack.c.l.bf16 %v644
        %v1043 = vunpack.c.l.bf16 %v653
        %v1044 = vunpack.c.l.bf16 %v869
        %v1045 = vunpack.c.l.bf16 %v670
        %v1046 = vunpack.c.l.bf16 %v679
        %v1047 = vunpack.c.l.bf16 %v973
        %v1048 = vunpack.c.l.bf16 %v619
        %v1049 = vunpack.c.l.bf16 %v628
        %v1050 = vunpack.c.l.bf16 %v772
        %v1051 = vunpack.c.l.bf16 %v645
        %v1052 = vunpack.c.l.bf16 %v654
        %v1053 = vunpack.c.l.bf16 %v876
        %v1054 = vunpack.c.l.bf16 %v671
        %v1055 = vunpack.c.l.bf16 %v680
        %v1056 = vunpack.c.l.bf16 %v980
        %v1057 = vunpack.c.l.bf16 %v620
        %v1058 = vunpack.c.l.bf16 %v629
        %v1059 = vunpack.c.l.bf16 %v779
        %v1060 = vunpack.c.l.bf16 %v646
        %v1061 = vunpack.c.l.bf16 %v655
        %v1062 = vunpack.c.l.bf16 %v883
        %v1063 = vunpack.c.l.bf16 %v672
        %v1064 = vunpack.c.l.bf16 %v681
        %v1065 = vunpack.c.l.bf16 %v987
        %v1066 = vunpack.c.l.bf16 %v621
        %v1067 = vunpack.c.l.bf16 %v630
        %v1068 = vunpack.c.l.bf16 %v786
        %v1069 = vunpack.c.l.bf16 %v647
        %v1070 = vunpack.c.l.bf16 %v656
        %v1071 = vunpack.c.l.bf16 %v890
        %v1072 = vunpack.c.l.bf16 %v673
        %v1073 = vunpack.c.l.bf16 %v682
        %v1074 = vunpack.c.l.bf16 %v994
        %v1075 = vpack.c.bf16 %v1012, %v1003
        %v1076 = vpack.c.bf16 %v1013, %v1004
        %v1077 = vpack.c.bf16 %v1014, %v1005
        %v1078 = vpack.c.bf16 %v1015, %v1006
        %v1079 = vpack.c.bf16 %v1016, %v1007
        %v1080 = vpack.c.bf16 %v1017, %v1008
        %v1081 = vpack.c.bf16 %v1018, %v1009
        %v1082 = vpack.c.bf16 %v1019, %v1010
        %v1083 = vpack.c.bf16 %v1020, %v1011
        %v1084 = vpack.c.bf16 %v1030, %v1021
        %v1085 = vpack.c.bf16 %v1031, %v1022
        %v1086 = vpack.c.bf16 %v1032, %v1023
        %v1087 = vpack.c.bf16 %v1033, %v1024
        %v1088 = vpack.c.bf16 %v1034, %v1025
        %v1089 = vpack.c.bf16 %v1035, %v1026
        %v1090 = vpack.c.bf16 %v1036, %v1027
        %v1091 = vpack.c.bf16 %v1037, %v1028
        %v1092 = vpack.c.bf16 %v1038, %v1029
        %v1093 = vpack.c.bf16 %v1048, %v1039
        %v1094 = vpack.c.bf16 %v1049, %v1040
        %v1095 = vpack.c.bf16 %v1050, %v1041
        %v1096 = vpack.c.bf16 %v1051, %v1042
        %v1097 = vpack.c.bf16 %v1052, %v1043
        %v1098 = vpack.c.bf16 %v1053, %v1044
        %v1099 = vpack.c.bf16 %v1054, %v1045
        %v1100 = vpack.c.bf16 %v1055, %v1046
        %v1101 = vpack.c.bf16 %v1056, %v1047
        %v1102 = vpack.c.bf16 %v1066, %v1057
        %v1103 = vpack.c.bf16 %v1067, %v1058
        %v1104 = vpack.c.bf16 %v1068, %v1059
        %v1105 = vpack.c.bf16 %v1069, %v1060
        %v1106 = vpack.c.bf16 %v1070, %v1061
        %v1107 = vpack.c.bf16 %v1071, %v1062
        %v1108 = vpack.c.bf16 %v1072, %v1063
        %v1109 = vpack.c.bf16 %v1073, %v1064
        %v1110 = vpack.c.bf16 %v1074, %v1065
        %v1111 = vld [vmem:[%s1] sm:$0xf]
        %v1112 = vld [vmem:[%s1 + $0x4] sm:$0xf]
        %v1113 = vld [vmem:[%s1 + $0x8] sm:$0xf]
        %v1114 = vld [vmem:[%s1 + $0xc] sm:$0xf]
        %v1115 = vld [vmem:[%s1 + $0x10] sm:$0xf]
        %v1116 = vld [vmem:[%s1 + $0x14] sm:$0xf]
        %v1117 = vld [vmem:[%s1 + $0x18] sm:$0xf]
        %v1118 = vld [vmem:[%s1 + $0x1c] sm:$0xf]
        %v1119 = vld [vmem:[%s1 + $0x20] sm:$0xf]
        %v1120 = vld [vmem:[%s1 + $0x24] sm:$0xf]
        %v1121 = vld [vmem:[%s1 + $0x28] sm:$0xf]
        %v1122 = vld [vmem:[%s1 + $0x2c] sm:$0xf]
        %v1123 = vld [vmem:[%s1 + $0x30] sm:$0xf]
        %v1124 = vld [vmem:[%s1 + $0x34] sm:$0xf]
        %v1125 = vld [vmem:[%s1 + $0x38] sm:$0xf]
        %v1126 = vld [vmem:[%s1 + $0x3c] sm:$0xf]
        %v1127 = vld [vmem:[%s1 + $0x40] sm:$0xf]
        %v1128 = vld [vmem:[%s1 + $0x44] sm:$0xf]
        %v1129 = vld [vmem:[%s1 + $0x48] sm:$0xf]
        %v1130 = vld [vmem:[%s1 + $0x4c] sm:$0xf]
        %v1131 = vld [vmem:[%s1 + $0x50] sm:$0xf]
        %v1132 = vld [vmem:[%s1 + $0x54] sm:$0xf]
        %v1133 = vld [vmem:[%s1 + $0x58] sm:$0xf]
        %v1134 = vld [vmem:[%s1 + $0x5c] sm:$0xf]
        %v1135 = vld [vmem:[%s1 + $0x60] sm:$0xf]
        %v1136 = vld [vmem:[%s1 + $0x64] sm:$0xf]
        %v1137 = vld [vmem:[%s1 + $0x68] sm:$0xf]
        %v1138 = vld [vmem:[%s1 + $0x6c] sm:$0xf]
        %v1139 = vld [vmem:[%s1 + $0x70] sm:$0xf]
        %v1140 = vld [vmem:[%s1 + $0x74] sm:$0xf]
        %v1141 = vld [vmem:[%s1 + $0x78] sm:$0xf]
        %v1142 = vld [vmem:[%s1 + $0x7c] sm:$0xf]
        %v1143 = vld [vmem:[%s1 + $0x80] sm:$0xf]
        %v1144 = vld [vmem:[%s1 + $0x84] sm:$0xf]
        %v1145 = vld [vmem:[%s1 + $0x88] sm:$0xf]
        %v1146 = vld [vmem:[%s1 + $0x8c] sm:$0xf]
        %v1147 = vld [vmem:[%s1 + $0x90] sm:$0xf]
        %v1148 = vld [vmem:[%s1 + $0x94] sm:$0xf]
        %v1149 = vld [vmem:[%s1 + $0x98] sm:$0xf]
        %v1150 = vld [vmem:[%s1 + $0x9c] sm:$0xf]
        %v1151 = vld [vmem:[%s1 + $0xa0] sm:$0xf]
        %v1152 = vld [vmem:[%s1 + $0xa4] sm:$0xf]
        %v1153 = vld [vmem:[%s1 + $0xa8] sm:$0xf]
        %v1154 = vld [vmem:[%s1 + $0xac] sm:$0xf]
        %v1155 = vld [vmem:[%s1 + $0xb0] sm:$0xf]
        %v1156 = vld [vmem:[%s1 + $0xb4] sm:$0xf]
        %v1157 = vld [vmem:[%s1 + $0xb8] sm:$0xf]
        %v1158 = vld [vmem:[%s1 + $0xbc] sm:$0xf]
        %v1159 = vld [vmem:[%s1 + $0xc0] sm:$0xf]
        %v1160 = vld [vmem:[%s1 + $0xc4] sm:$0xf]
        %v1161 = vld [vmem:[%s1 + $0xc8] sm:$0xf]
        %v1162 = vld [vmem:[%s1 + $0xcc] sm:$0xf]
        %v1163 = vld [vmem:[%s1 + $0xd0] sm:$0xf]
        %v1164 = vld [vmem:[%s1 + $0xd4] sm:$0xf]
        %v1165 = vld [vmem:[%s1 + $0xd8] sm:$0xf]
        %v1166 = vld [vmem:[%s1 + $0xdc] sm:$0xf]
        %v1167 = vld [vmem:[%s1 + $0xe0] sm:$0xf]
        %v1168 = vld [vmem:[%s1 + $0xe4] sm:$0xf]
        %v1169 = vld [vmem:[%s1 + $0xe8] sm:$0xf]
        %v1170 = vld [vmem:[%s1 + $0xec] sm:$0xf]
        %v1171 = vld [vmem:[%s1 + $0xf0] sm:$0xf]
        %v1172 = vld [vmem:[%s1 + $0xf4] sm:$0xf]
        %v1173 = vld [vmem:[%s1 + $0xf8] sm:$0xf]
        %v1174 = vld [vmem:[%s1 + $0xfc] sm:$0xf]
        %v1175 = vld [vmem:[%s1 + $0x100] sm:$0xf]
        %v1176 = vld [vmem:[%s1 + $0x104] sm:$0xf]
        %v1177 = vld [vmem:[%s1 + $0x108] sm:$0xf]
        %v1178 = vld [vmem:[%s1 + $0x10c] sm:$0xf]
        %v1179 = vld [vmem:[%s1 + $0x110] sm:$0xf]
        %v1180 = vld [vmem:[%s1 + $0x114] sm:$0xf]
        %v1181 = vld [vmem:[%s1 + $0x118] sm:$0xf]
        %v1182 = vld [vmem:[%s1 + $0x11c] sm:$0xf]
        %v1183 = vld [vmem:[%s1 + $0x120] sm:$0xf]
        %v1184 = vld [vmem:[%s1 + $0x124] sm:$0xf]
        %v1185 = vld [vmem:[%s1 + $0x128] sm:$0xf]
        %v1186 = vld [vmem:[%s1 + $0x12c] sm:$0xf]
        %v1187 = vld [vmem:[%s1 + $0x130] sm:$0xf]
        %v1188 = vld [vmem:[%s1 + $0x134] sm:$0xf]
        %v1189 = vld [vmem:[%s1 + $0x138] sm:$0xf]
        %v1190 = vld [vmem:[%s1 + $0x13c] sm:$0xf]
        %v1191 = vld [vmem:[%s1 + $0x140] sm:$0xf]
        %v1192 = vld [vmem:[%s1 + $0x144] sm:$0xf]
        %v1193 = vld [vmem:[%s1 + $0x148] sm:$0xf]
        %v1194 = vld [vmem:[%s1 + $0x14c] sm:$0xf]
        %v1195 = vld [vmem:[%s1 + $0x150] sm:$0xf]
        %v1196 = vld [vmem:[%s1 + $0x154] sm:$0xf]
        %v1197 = vld [vmem:[%s1 + $0x158] sm:$0xf]
        %v1198 = vld [vmem:[%s1 + $0x15c] sm:$0xf]
        %v1199 = vld [vmem:[%s1 + $0x160] sm:$0xf]
        %v1200 = vld [vmem:[%s1 + $0x164] sm:$0xf]
        %v1201 = vld [vmem:[%s1 + $0x168] sm:$0xf]
        %v1202 = vld [vmem:[%s1 + $0x16c] sm:$0xf]
        %v1203 = vld [vmem:[%s1 + $0x170] sm:$0xf]
        %v1204 = vld [vmem:[%s1 + $0x174] sm:$0xf]
        %v1205 = vld [vmem:[%s1 + $0x178] sm:$0xf]
        %v1206 = vld [vmem:[%s1 + $0x17c] sm:$0xf]
        %v1207 = vld [vmem:[%s1 + $0x180] sm:$0xf]
        %v1208 = vld [vmem:[%s1 + $0x184] sm:$0xf]
        %v1209 = vld [vmem:[%s1 + $0x188] sm:$0xf]
        %v1210 = vld [vmem:[%s1 + $0x18c] sm:$0xf]
        %v1211 = vld [vmem:[%s1 + $0x190] sm:$0xf]
        %v1212 = vld [vmem:[%s1 + $0x194] sm:$0xf]
        %v1213 = vld [vmem:[%s1 + $0x198] sm:$0xf]
        %v1214 = vld [vmem:[%s1 + $0x19c] sm:$0xf]
        %v1215 = vld [vmem:[%s1 + $0x1a0] sm:$0xf]
        %v1216 = vld [vmem:[%s1 + $0x1a4] sm:$0xf]
        %v1217 = vld [vmem:[%s1 + $0x1a8] sm:$0xf]
        %v1218 = vld [vmem:[%s1 + $0x1ac] sm:$0xf]
        %v1219 = vld [vmem:[%s1 + $0x1b0] sm:$0xf]
        %v1220 = vld [vmem:[%s1 + $0x1b4] sm:$0xf]
        %v1221 = vld [vmem:[%s1 + $0x1b8] sm:$0xf]
        %v1222 = vld [vmem:[%s1 + $0x1bc] sm:$0xf]
        %v1223 = vld [vmem:[%s1 + $0x1c0] sm:$0xf]
        %v1224 = vld [vmem:[%s1 + $0x1c4] sm:$0xf]
        %v1225 = vld [vmem:[%s1 + $0x1c8] sm:$0xf]
        %v1226 = vld [vmem:[%s1 + $0x1cc] sm:$0xf]
        %v1227 = vld [vmem:[%s1 + $0x1d0] sm:$0xf]
        %v1228 = vld [vmem:[%s1 + $0x1d4] sm:$0xf]
        %v1229 = vld [vmem:[%s1 + $0x1d8] sm:$0xf]
        %v1230 = vld [vmem:[%s1 + $0x1dc] sm:$0xf]
        %v1231 = vld [vmem:[%s1 + $0x1e0] sm:$0xf]
        %v1232 = vld [vmem:[%s1 + $0x1e4] sm:$0xf]
        %v1233 = vld [vmem:[%s1 + $0x1e8] sm:$0xf]
        %v1234 = vld [vmem:[%s1 + $0x1ec] sm:$0xf]
        %v1235 = vld [vmem:[%s1 + $0x1f0] sm:$0xf]
        %v1236 = vld [vmem:[%s1 + $0x1f4] sm:$0xf]
        %v1237 = vld [vmem:[%s1 + $0x1f8] sm:$0xf]
        %v1238 = vld [vmem:[%s1 + $0x1fc] sm:$0xf]
        %v1239 = vld [vmem:[%s1 + $0x200] sm:$0xf]
        %v1240 = vld [vmem:[%s1 + $0x204] sm:$0xf]
        %v1241 = vld [vmem:[%s1 + $0x208] sm:$0xf]
        %v1242 = vld [vmem:[%s1 + $0x20c] sm:$0xf]
        %v1243 = vld [vmem:[%s1 + $0x210] sm:$0xf]
        %v1244 = vld [vmem:[%s1 + $0x214] sm:$0xf]
        %v1245 = vld [vmem:[%s1 + $0x218] sm:$0xf]
        %v1246 = vld [vmem:[%s1 + $0x21c] sm:$0xf]
        %v1247 = vld [vmem:[%s1 + $0x220] sm:$0xf]
        %v1248 = vld [vmem:[%s1 + $0x224] sm:$0xf]
        %v1249 = vld [vmem:[%s1 + $0x228] sm:$0xf]
        %v1250 = vld [vmem:[%s1 + $0x22c] sm:$0xf]
        %v1251 = vld [vmem:[%s1 + $0x230] sm:$0xf]
        %v1252 = vld [vmem:[%s1 + $0x234] sm:$0xf]
        %v1253 = vld [vmem:[%s1 + $0x238] sm:$0xf]
        %v1254 = vld [vmem:[%s1 + $0x23c] sm:$0xf]
        %v1399 = vunpack.c.l.b16 %v1111
        %v1400 = vunpack.c.l.b16 %v1112
        %v1401 = vunpack.c.l.b16 %v1113
        %v1402 = vunpack.c.l.b16 %v1114
        %v1403 = vunpack.c.l.b16 %v1115
        %v1404 = vunpack.c.l.b16 %v1116
        %v1405 = vunpack.c.l.b16 %v1117
        %v1406 = vunpack.c.l.b16 %v1118
        %v1407 = vunpack.c.l.b16 %v1119
        %v1408 = vunpack.c.l.b16 %v1120
        %v1409 = vunpack.c.l.b16 %v1121
        %v1410 = vunpack.c.l.b16 %v1122
        %v1411 = vunpack.c.l.b16 %v1123
        %v1412 = vunpack.c.l.b16 %v1124
        %v1413 = vunpack.c.l.b16 %v1125
        %v1414 = vunpack.c.l.b16 %v1126
        %v1415 = vunpack.c.l.b16 %v1127
        %v1416 = vunpack.c.l.b16 %v1128
        %v1417 = vunpack.c.l.b16 %v1129
        %v1418 = vunpack.c.l.b16 %v1130
        %v1419 = vunpack.c.l.b16 %v1131
        %v1420 = vunpack.c.l.b16 %v1132
        %v1421 = vunpack.c.l.b16 %v1133
        %v1422 = vunpack.c.l.b16 %v1134
        %v1423 = vunpack.c.l.b16 %v1135
        %v1424 = vunpack.c.l.b16 %v1136
        %v1425 = vunpack.c.l.b16 %v1137
        %v1426 = vunpack.c.l.b16 %v1138
        %v1427 = vunpack.c.l.b16 %v1139
        %v1428 = vunpack.c.l.b16 %v1140
        %v1429 = vunpack.c.l.b16 %v1141
        %v1430 = vunpack.c.l.b16 %v1142
        %v1431 = vunpack.c.l.b16 %v1143
        %v1432 = vunpack.c.l.b16 %v1144
        %v1433 = vunpack.c.l.b16 %v1145
        %v1434 = vunpack.c.l.b16 %v1146
        %v1435 = vunpack.c.l.b16 %v1147
        %v1436 = vunpack.c.l.b16 %v1148
        %v1437 = vunpack.c.l.b16 %v1149
        %v1438 = vunpack.c.l.b16 %v1150
        %v1439 = vunpack.c.l.b16 %v1151
        %v1440 = vunpack.c.l.b16 %v1152
        %v1441 = vunpack.c.l.b16 %v1153
        %v1442 = vunpack.c.l.b16 %v1154
        %v1443 = vunpack.c.l.b16 %v1155
        %v1444 = vunpack.c.l.b16 %v1156
        %v1445 = vunpack.c.l.b16 %v1157
        %v1446 = vunpack.c.l.b16 %v1158
        %v1447 = vunpack.c.l.b16 %v1159
        %v1448 = vunpack.c.l.b16 %v1160
        %v1449 = vunpack.c.l.b16 %v1161
        %v1450 = vunpack.c.l.b16 %v1162
        %v1451 = vunpack.c.l.b16 %v1163
        %v1452 = vunpack.c.l.b16 %v1164
        %v1453 = vunpack.c.l.b16 %v1165
        %v1454 = vunpack.c.l.b16 %v1166
        %v1455 = vunpack.c.l.b16 %v1167
        %v1456 = vunpack.c.l.b16 %v1168
        %v1457 = vunpack.c.l.b16 %v1169
        %v1458 = vunpack.c.l.b16 %v1170
        %v1459 = vunpack.c.l.b16 %v1171
        %v1460 = vunpack.c.l.b16 %v1172
        %v1461 = vunpack.c.l.b16 %v1173
        %v1462 = vunpack.c.l.b16 %v1174
        %v1463 = vunpack.c.l.b16 %v1175
        %v1464 = vunpack.c.l.b16 %v1176
        %v1465 = vunpack.c.l.b16 %v1177
        %v1466 = vunpack.c.l.b16 %v1178
        %v1467 = vunpack.c.l.b16 %v1179
        %v1468 = vunpack.c.l.b16 %v1180
        %v1469 = vunpack.c.l.b16 %v1181
        %v1470 = vunpack.c.l.b16 %v1182
        %v1471 = vunpack.c.l.b16 %v1183
        %v1472 = vunpack.c.l.b16 %v1184
        %v1473 = vunpack.c.l.b16 %v1185
        %v1474 = vunpack.c.l.b16 %v1186
        %v1475 = vunpack.c.l.b16 %v1187
        %v1476 = vunpack.c.l.b16 %v1188
        %v1477 = vunpack.c.l.b16 %v1189
        %v1478 = vunpack.c.l.b16 %v1190
        %v1479 = vunpack.c.l.b16 %v1191
        %v1480 = vunpack.c.l.b16 %v1192
        %v1481 = vunpack.c.l.b16 %v1193
        %v1482 = vunpack.c.l.b16 %v1194
        %v1483 = vunpack.c.l.b16 %v1195
        %v1484 = vunpack.c.l.b16 %v1196
        %v1485 = vunpack.c.l.b16 %v1197
        %v1486 = vunpack.c.l.b16 %v1198
        %v1487 = vunpack.c.l.b16 %v1199
        %v1488 = vunpack.c.l.b16 %v1200
        %v1489 = vunpack.c.l.b16 %v1201
        %v1490 = vunpack.c.l.b16 %v1202
        %v1491 = vunpack.c.l.b16 %v1203
        %v1492 = vunpack.c.l.b16 %v1204
        %v1493 = vunpack.c.l.b16 %v1205
        %v1494 = vunpack.c.l.b16 %v1206
        %v1495 = vunpack.c.l.b16 %v1207
        %v1496 = vunpack.c.l.b16 %v1208
        %v1497 = vunpack.c.l.b16 %v1209
        %v1498 = vunpack.c.l.b16 %v1210
        %v1499 = vunpack.c.l.b16 %v1211
        %v1500 = vunpack.c.l.b16 %v1212
        %v1501 = vunpack.c.l.b16 %v1213
        %v1502 = vunpack.c.l.b16 %v1214
        %v1503 = vunpack.c.l.b16 %v1215
        %v1504 = vunpack.c.l.b16 %v1216
        %v1505 = vunpack.c.l.b16 %v1217
        %v1506 = vunpack.c.l.b16 %v1218
        %v1507 = vunpack.c.l.b16 %v1219
        %v1508 = vunpack.c.l.b16 %v1220
        %v1509 = vunpack.c.l.b16 %v1221
        %v1510 = vunpack.c.l.b16 %v1222
        %v1511 = vunpack.c.l.b16 %v1223
        %v1512 = vunpack.c.l.b16 %v1224
        %v1513 = vunpack.c.l.b16 %v1225
        %v1514 = vunpack.c.l.b16 %v1226
        %v1515 = vunpack.c.l.b16 %v1227
        %v1516 = vunpack.c.l.b16 %v1228
        %v1517 = vunpack.c.l.b16 %v1229
        %v1518 = vunpack.c.l.b16 %v1230
        %v1519 = vunpack.c.l.b16 %v1231
        %v1520 = vunpack.c.l.b16 %v1232
        %v1521 = vunpack.c.l.b16 %v1233
        %v1522 = vunpack.c.l.b16 %v1234
        %v1523 = vunpack.c.l.b16 %v1235
        %v1524 = vunpack.c.l.b16 %v1236
        %v1525 = vunpack.c.l.b16 %v1237
        %v1526 = vunpack.c.l.b16 %v1238
        %v1527 = vunpack.c.l.b16 %v1239
        %v1528 = vunpack.c.l.b16 %v1240
        %v1529 = vunpack.c.l.b16 %v1241
        %v1530 = vunpack.c.l.b16 %v1242
        %v1531 = vunpack.c.l.b16 %v1243
        %v1532 = vunpack.c.l.b16 %v1244
        %v1533 = vunpack.c.l.b16 %v1245
        %v1534 = vunpack.c.l.b16 %v1246
        %v1535 = vunpack.c.l.b16 %v1247
        %v1536 = vunpack.c.l.b16 %v1248
        %v1537 = vunpack.c.l.b16 %v1249
        %v1538 = vunpack.c.l.b16 %v1250
        %v1539 = vunpack.c.l.b16 %v1251
        %v1540 = vunpack.c.l.b16 %v1252
        %v1541 = vunpack.c.l.b16 %v1253
        %v1542 = vunpack.c.l.b16 %v1254
        %v1543 = vpack.c.b16 %v1400, %v1399
        %v1544 = vpack.c.b16 %v1402, %v1401
        %v1545 = vpack.c.b16 %v1404, %v1403
        %v1546 = vpack.c.b16 %v1406, %v1405
        %v1547 = vpack.c.b16 %v1408, %v1407
        %v1548 = vpack.c.b16 %v1410, %v1409
        %v1549 = vpack.c.b16 %v1412, %v1411
        %v1550 = vpack.c.b16 %v1414, %v1413
        %v1551 = vpack.c.b16 %v1416, %v1415
        %v1552 = vpack.c.b16 %v1418, %v1417
        %v1553 = vpack.c.b16 %v1420, %v1419
        %v1554 = vpack.c.b16 %v1422, %v1421
        %v1555 = vpack.c.b16 %v1424, %v1423
        %v1556 = vpack.c.b16 %v1426, %v1425
        %v1557 = vpack.c.b16 %v1428, %v1427
        %v1558 = vpack.c.b16 %v1430, %v1429
        %v1559 = vpack.c.b16 %v1432, %v1431
        %v1560 = vpack.c.b16 %v1434, %v1433
        %v1561 = vpack.c.b16 %v1436, %v1435
        %v1562 = vpack.c.b16 %v1438, %v1437
        %v1563 = vpack.c.b16 %v1440, %v1439
        %v1564 = vpack.c.b16 %v1442, %v1441
        %v1565 = vpack.c.b16 %v1444, %v1443
        %v1566 = vpack.c.b16 %v1446, %v1445
        %v1567 = vpack.c.b16 %v1448, %v1447
        %v1568 = vpack.c.b16 %v1450, %v1449
        %v1569 = vpack.c.b16 %v1452, %v1451
        %v1570 = vpack.c.b16 %v1454, %v1453
        %v1571 = vpack.c.b16 %v1456, %v1455
        %v1572 = vpack.c.b16 %v1458, %v1457
        %v1573 = vpack.c.b16 %v1460, %v1459
        %v1574 = vpack.c.b16 %v1462, %v1461
        %v1575 = vpack.c.b16 %v1464, %v1463
        %v1576 = vpack.c.b16 %v1466, %v1465
        %v1577 = vpack.c.b16 %v1468, %v1467
        %v1578 = vpack.c.b16 %v1470, %v1469
        %v1579 = vpack.c.b16 %v1472, %v1471
        %v1580 = vpack.c.b16 %v1474, %v1473
        %v1581 = vpack.c.b16 %v1476, %v1475
        %v1582 = vpack.c.b16 %v1478, %v1477
        %v1583 = vpack.c.b16 %v1480, %v1479
        %v1584 = vpack.c.b16 %v1482, %v1481
        %v1585 = vpack.c.b16 %v1484, %v1483
        %v1586 = vpack.c.b16 %v1486, %v1485
        %v1587 = vpack.c.b16 %v1488, %v1487
        %v1588 = vpack.c.b16 %v1490, %v1489
        %v1589 = vpack.c.b16 %v1492, %v1491
        %v1590 = vpack.c.b16 %v1494, %v1493
        %v1591 = vpack.c.b16 %v1496, %v1495
        %v1592 = vpack.c.b16 %v1498, %v1497
        %v1593 = vpack.c.b16 %v1500, %v1499
        %v1594 = vpack.c.b16 %v1502, %v1501
        %v1595 = vpack.c.b16 %v1504, %v1503
        %v1596 = vpack.c.b16 %v1506, %v1505
        %v1597 = vpack.c.b16 %v1508, %v1507
        %v1598 = vpack.c.b16 %v1510, %v1509
        %v1599 = vpack.c.b16 %v1512, %v1511
        %v1600 = vpack.c.b16 %v1514, %v1513
        %v1601 = vpack.c.b16 %v1516, %v1515
        %v1602 = vpack.c.b16 %v1518, %v1517
        %v1603 = vpack.c.b16 %v1520, %v1519
        %v1604 = vpack.c.b16 %v1522, %v1521
        %v1605 = vpack.c.b16 %v1524, %v1523
        %v1606 = vpack.c.b16 %v1526, %v1525
        %v1607 = vpack.c.b16 %v1528, %v1527
        %v1608 = vpack.c.b16 %v1530, %v1529
        %v1609 = vpack.c.b16 %v1532, %v1531
        %v1610 = vpack.c.b16 %v1534, %v1533
        %v1611 = vpack.c.b16 %v1536, %v1535
        %v1612 = vpack.c.b16 %v1538, %v1537
        %v1613 = vpack.c.b16 %v1540, %v1539
        %v1614 = vpack.c.b16 %v1542, %v1541
        %1687 = vmatprep.subr.bf16.mxu0 0
        %1688 = vmatpush1.bf16.msra.mxu0 %v1550
        %1689 = vmatprep.subr.bf16.mxu0 0
        %1690 = vmatpush1.bf16.msra.mxu0 %v1549
        %1691 = vmatprep.subr.bf16.mxu0 0
        %1692 = vmatpush1.bf16.msra.mxu0 %v1548
        %1693 = vmatprep.subr.bf16.mxu0 0
        %1694 = vmatpush1.bf16.msra.mxu0 %v1547
        %1695 = vmatprep.subr.bf16.mxu0 0
        %1696 = vmatpush1.bf16.msra.mxu0 %v1546
        %1697 = vmatprep.subr.bf16.mxu0 0
        %1698 = vmatpush1.bf16.msra.mxu0 %v1545
        %1699 = vmatprep.subr.bf16.mxu0 0
        %1700 = vmatpush1.bf16.msra.mxu0 %v1544
        %1701 = vmatprep.subr.bf16.mxu0 0
        %1702 = vmatpush1.bf16.msra.mxu0 %v1543
        %1703 = vmatprep.subr.bf16.mxu0 0
        %1704 = vmatpush2.bf16.msra.mxu0 %v1558
        %1705 = vmatprep.subr.bf16.mxu0 0
        %1706 = vmatpush2.bf16.msra.mxu0 %v1557
        %1707 = vmatprep.subr.bf16.mxu0 0
        %1708 = vmatpush2.bf16.msra.mxu0 %v1556
        %1709 = vmatprep.subr.bf16.mxu0 0
        %1710 = vmatpush2.bf16.msra.mxu0 %v1555
        %1711 = vmatprep.subr.bf16.mxu0 0
        %1712 = vmatpush2.bf16.msra.mxu0 %v1554
        %1713 = vmatprep.subr.bf16.mxu0 0
        %1714 = vmatpush2.bf16.msra.mxu0 %v1553
        %1715 = vmatprep.subr.bf16.mxu0 0
        %1716 = vmatpush2.bf16.msra.mxu0 %v1552
        %1717 = vmatprep.subr.bf16.mxu0 0
        %1718 = vmatpush2.bf16.msra.mxu0 %v1551
        %1719 = vmatprep.mubr.bf16.mxu0 %v1076
        %1720 = vmatmul.mubr.bf16.gmra.mxu0 %v1075
        %v1721 = vpop.f32.mrf.mxu0
        %v1722 = vadd.f32 0.0, %v1721
        %v1723 = vpop.f32.mrf.mxu0
        %v1724 = vpop.f32.mrf.mxu0
        %v1725 = vadd.f32 0.0, %v1724
        %v1726 = vpop.f32.mrf.mxu0
        %1727 = vmatprep.mubr.bf16.mxu0 %v1085
        %1728 = vmatmul.mubr.bf16.gmra.mxu0 %v1084
        %v1729 = vpop.f32.mrf.mxu0
        %v1730 = vadd.f32 0.0, %v1729
        %v1731 = vpop.f32.mrf.mxu0
        %v1732 = vpop.f32.mrf.mxu0
        %v1733 = vadd.f32 0.0, %v1732
        %v1734 = vpop.f32.mrf.mxu0
        %1735 = vmatprep.mubr.bf16.mxu0 %v1094
        %1736 = vmatmul.mubr.bf16.gmra.mxu0 %v1093
        %v1737 = vpop.f32.mrf.mxu0
        %v1738 = vadd.f32 0.0, %v1737
        %v1739 = vpop.f32.mrf.mxu0
        %v1740 = vpop.f32.mrf.mxu0
        %v1741 = vadd.f32 0.0, %v1740
        %v1742 = vpop.f32.mrf.mxu0
        %1743 = vmatprep.mubr.bf16.mxu0 %v1103
        %1744 = vmatmul.mubr.bf16.gmra.mxu0 %v1102
        %v1745 = vpop.f32.mrf.mxu0
        %v1746 = vadd.f32 0.0, %v1745
        %v1747 = vpop.f32.mrf.mxu0
        %v1748 = vpop.f32.mrf.mxu0
        %v1749 = vadd.f32 0.0, %v1748
        %v1750 = vpop.f32.mrf.mxu0
        %1751 = vdwg.mxu0
        %1752 = vmatprep.subr.bf16.mxu0 0
        %1753 = vmatpush1.bf16.msra.mxu0 %v1566
        %1754 = vmatprep.subr.bf16.mxu0 0
        %1755 = vmatpush1.bf16.msra.mxu0 %v1565
        %1756 = vmatprep.subr.bf16.mxu0 0
        %1757 = vmatpush1.bf16.msra.mxu0 %v1564
        %1758 = vmatprep.subr.bf16.mxu0 0
        %1759 = vmatpush1.bf16.msra.mxu0 %v1563
        %1760 = vmatprep.subr.bf16.mxu0 0
        %1761 = vmatpush1.bf16.msra.mxu0 %v1562
        %1762 = vmatprep.subr.bf16.mxu0 0
        %1763 = vmatpush1.bf16.msra.mxu0 %v1561
        %1764 = vmatprep.subr.bf16.mxu0 0
        %1765 = vmatpush1.bf16.msra.mxu0 %v1560
        %1766 = vmatprep.subr.bf16.mxu0 0
        %1767 = vmatpush1.bf16.msra.mxu0 %v1559
        %1768 = vmatprep.subr.bf16.mxu0 0
        %1769 = vmatpush2.bf16.msra.mxu0 %v1574
        %1770 = vmatprep.subr.bf16.mxu0 0
        %1771 = vmatpush2.bf16.msra.mxu0 %v1573
        %1772 = vmatprep.subr.bf16.mxu0 0
        %1773 = vmatpush2.bf16.msra.mxu0 %v1572
        %1774 = vmatprep.subr.bf16.mxu0 0
        %1775 = vmatpush2.bf16.msra.mxu0 %v1571
        %1776 = vmatprep.subr.bf16.mxu0 0
        %1777 = vmatpush2.bf16.msra.mxu0 %v1570
        %1778 = vmatprep.subr.bf16.mxu0 0
        %1779 = vmatpush2.bf16.msra.mxu0 %v1569
        %1780 = vmatprep.subr.bf16.mxu0 0
        %1781 = vmatpush2.bf16.msra.mxu0 %v1568
        %1782 = vmatprep.subr.bf16.mxu0 0
        %1783 = vmatpush2.bf16.msra.mxu0 %v1567
        %1784 = vmatprep.mubr.bf16.mxu0 %v1078
        %1785 = vmatmul.mubr.bf16.gmra.mxu0 %v1077
        %v1786 = vpop.f32.mrf.mxu0
        %v1787 = vadd.f32 %v1722, %v1786
        %v1788 = vpop.f32.mrf.mxu0
        %v1789 = vpop.f32.mrf.mxu0
        %v1790 = vadd.f32 %v1725, %v1789
        %v1791 = vpop.f32.mrf.mxu0
        %1792 = vmatprep.mubr.bf16.mxu0 %v1087
        %1793 = vmatmul.mubr.bf16.gmra.mxu0 %v1086
        %v1794 = vpop.f32.mrf.mxu0
        %v1795 = vadd.f32 %v1730, %v1794
        %v1796 = vpop.f32.mrf.mxu0
        %v1797 = vpop.f32.mrf.mxu0
        %v1798 = vadd.f32 %v1733, %v1797
        %v1799 = vpop.f32.mrf.mxu0
        %1800 = vmatprep.mubr.bf16.mxu0 %v1096
        %1801 = vmatmul.mubr.bf16.gmra.mxu0 %v1095
        %v1802 = vpop.f32.mrf.mxu0
        %v1803 = vadd.f32 %v1738, %v1802
        %v1804 = vpop.f32.mrf.mxu0
        %v1805 = vpop.f32.mrf.mxu0
        %v1806 = vadd.f32 %v1741, %v1805
        %v1807 = vpop.f32.mrf.mxu0
        %1808 = vmatprep.mubr.bf16.mxu0 %v1105
        %1809 = vmatmul.mubr.bf16.gmra.mxu0 %v1104
        %v1810 = vpop.f32.mrf.mxu0
        %v1811 = vadd.f32 %v1746, %v1810
        %v1812 = vpop.f32.mrf.mxu0
        %v1813 = vpop.f32.mrf.mxu0
        %v1814 = vadd.f32 %v1749, %v1813
        %v1815 = vpop.f32.mrf.mxu0
        %1816 = vdwg.mxu0
        %1817 = vmatprep.subr.bf16.mxu0 0
        %1818 = vmatpush1.bf16.msra.mxu0 %v1582
        %1819 = vmatprep.subr.bf16.mxu0 0
        %1820 = vmatpush1.bf16.msra.mxu0 %v1581
        %1821 = vmatprep.subr.bf16.mxu0 0
        %1822 = vmatpush1.bf16.msra.mxu0 %v1580
        %1823 = vmatprep.subr.bf16.mxu0 0
        %1824 = vmatpush1.bf16.msra.mxu0 %v1579
        %1825 = vmatprep.subr.bf16.mxu0 0
        %1826 = vmatpush1.bf16.msra.mxu0 %v1578
        %1827 = vmatprep.subr.bf16.mxu0 0
        %1828 = vmatpush1.bf16.msra.mxu0 %v1577
        %1829 = vmatprep.subr.bf16.mxu0 0
        %1830 = vmatpush1.bf16.msra.mxu0 %v1576
        %1831 = vmatprep.subr.bf16.mxu0 0
        %1832 = vmatpush1.bf16.msra.mxu0 %v1575
        %1833 = vmatprep.subr.bf16.mxu0 0
        %1834 = vmatpush2.bf16.msra.mxu0 %v1590
        %1835 = vmatprep.subr.bf16.mxu0 0
        %1836 = vmatpush2.bf16.msra.mxu0 %v1589
        %1837 = vmatprep.subr.bf16.mxu0 0
        %1838 = vmatpush2.bf16.msra.mxu0 %v1588
        %1839 = vmatprep.subr.bf16.mxu0 0
        %1840 = vmatpush2.bf16.msra.mxu0 %v1587
        %1841 = vmatprep.subr.bf16.mxu0 0
        %1842 = vmatpush2.bf16.msra.mxu0 %v1586
        %1843 = vmatprep.subr.bf16.mxu0 0
        %1844 = vmatpush2.bf16.msra.mxu0 %v1585
        %1845 = vmatprep.subr.bf16.mxu0 0
        %1846 = vmatpush2.bf16.msra.mxu0 %v1584
        %1847 = vmatprep.subr.bf16.mxu0 0
        %1848 = vmatpush2.bf16.msra.mxu0 %v1583
        %1849 = vmatprep.mubr.bf16.mxu0 %v1080
        %1850 = vmatmul.mubr.bf16.gmra.mxu0 %v1079
        %v1851 = vpop.f32.mrf.mxu0
        %v1852 = vadd.f32 %v1787, %v1851
        %v1853 = vpop.f32.mrf.mxu0
        %v1854 = vpop.f32.mrf.mxu0
        %v1855 = vadd.f32 %v1790, %v1854
        %v1856 = vpop.f32.mrf.mxu0
        %1857 = vmatprep.mubr.bf16.mxu0 %v1089
        %1858 = vmatmul.mubr.bf16.gmra.mxu0 %v1088
        %v1859 = vpop.f32.mrf.mxu0
        %v1860 = vadd.f32 %v1795, %v1859
        %v1861 = vpop.f32.mrf.mxu0
        %v1862 = vpop.f32.mrf.mxu0
        %v1863 = vadd.f32 %v1798, %v1862
        %v1864 = vpop.f32.mrf.mxu0
        %1865 = vmatprep.mubr.bf16.mxu0 %v1098
        %1866 = vmatmul.mubr.bf16.gmra.mxu0 %v1097
        %v1867 = vpop.f32.mrf.mxu0
        %v1868 = vadd.f32 %v1803, %v1867
        %v1869 = vpop.f32.mrf.mxu0
        %v1870 = vpop.f32.mrf.mxu0
        %v1871 = vadd.f32 %v1806, %v1870
        %v1872 = vpop.f32.mrf.mxu0
        %1873 = vmatprep.mubr.bf16.mxu0 %v1107
        %1874 = vmatmul.mubr.bf16.gmra.mxu0 %v1106
        %v1875 = vpop.f32.mrf.mxu0
        %v1876 = vadd.f32 %v1811, %v1875
        %v1877 = vpop.f32.mrf.mxu0
        %v1878 = vpop.f32.mrf.mxu0
        %v1879 = vadd.f32 %v1814, %v1878
        %v1880 = vpop.f32.mrf.mxu0
        %1881 = vdwg.mxu0
        %1882 = vmatprep.subr.bf16.mxu0 0
        %1883 = vmatpush1.bf16.msra.mxu0 %v1598
        %1884 = vmatprep.subr.bf16.mxu0 0
        %1885 = vmatpush1.bf16.msra.mxu0 %v1597
        %1886 = vmatprep.subr.bf16.mxu0 0
        %1887 = vmatpush1.bf16.msra.mxu0 %v1596
        %1888 = vmatprep.subr.bf16.mxu0 0
        %1889 = vmatpush1.bf16.msra.mxu0 %v1595
        %1890 = vmatprep.subr.bf16.mxu0 0
        %1891 = vmatpush1.bf16.msra.mxu0 %v1594
        %1892 = vmatprep.subr.bf16.mxu0 0
        %1893 = vmatpush1.bf16.msra.mxu0 %v1593
        %1894 = vmatprep.subr.bf16.mxu0 0
        %1895 = vmatpush1.bf16.msra.mxu0 %v1592
        %1896 = vmatprep.subr.bf16.mxu0 0
        %1897 = vmatpush1.bf16.msra.mxu0 %v1591
        %1898 = vmatprep.subr.bf16.mxu0 0
        %1899 = vmatpush2.bf16.msra.mxu0 %v1606
        %1900 = vmatprep.subr.bf16.mxu0 0
        %1901 = vmatpush2.bf16.msra.mxu0 %v1605
        %1902 = vmatprep.subr.bf16.mxu0 0
        %1903 = vmatpush2.bf16.msra.mxu0 %v1604
        %1904 = vmatprep.subr.bf16.mxu0 0
        %1905 = vmatpush2.bf16.msra.mxu0 %v1603
        %1906 = vmatprep.subr.bf16.mxu0 0
        %1907 = vmatpush2.bf16.msra.mxu0 %v1602
        %1908 = vmatprep.subr.bf16.mxu0 0
        %1909 = vmatpush2.bf16.msra.mxu0 %v1601
        %1910 = vmatprep.subr.bf16.mxu0 0
        %1911 = vmatpush2.bf16.msra.mxu0 %v1600
        %1912 = vmatprep.subr.bf16.mxu0 0
        %1913 = vmatpush2.bf16.msra.mxu0 %v1599
        %1914 = vmatprep.mubr.bf16.mxu0 %v1082
        %1915 = vmatmul.mubr.bf16.gmra.mxu0 %v1081
        %v1916 = vpop.f32.mrf.mxu0
        %v1917 = vadd.f32 %v1852, %v1916
        %v1918 = vpop.f32.mrf.mxu0
        %v1919 = vpop.f32.mrf.mxu0
        %v1920 = vadd.f32 %v1855, %v1919
        %v1921 = vpop.f32.mrf.mxu0
        %1922 = vmatprep.mubr.bf16.mxu0 %v1091
        %1923 = vmatmul.mubr.bf16.gmra.mxu0 %v1090
        %v1924 = vpop.f32.mrf.mxu0
        %v1925 = vadd.f32 %v1860, %v1924
        %v1926 = vpop.f32.mrf.mxu0
        %v1927 = vpop.f32.mrf.mxu0
        %v1928 = vadd.f32 %v1863, %v1927
        %v1929 = vpop.f32.mrf.mxu0
        %1930 = vmatprep.mubr.bf16.mxu0 %v1100
        %1931 = vmatmul.mubr.bf16.gmra.mxu0 %v1099
        %v1932 = vpop.f32.mrf.mxu0
        %v1933 = vadd.f32 %v1868, %v1932
        %v1934 = vpop.f32.mrf.mxu0
        %v1935 = vpop.f32.mrf.mxu0
        %v1936 = vadd.f32 %v1871, %v1935
        %v1937 = vpop.f32.mrf.mxu0
        %1938 = vmatprep.mubr.bf16.mxu0 %v1109
        %1939 = vmatmul.mubr.bf16.gmra.mxu0 %v1108
        %v1940 = vpop.f32.mrf.mxu0
        %v1941 = vadd.f32 %v1876, %v1940
        %v1942 = vpop.f32.mrf.mxu0
        %v1943 = vpop.f32.mrf.mxu0
        %v1944 = vadd.f32 %v1879, %v1943
        %v1945 = vpop.f32.mrf.mxu0
        %1946 = vdwg.mxu0
        %1947 = vmatprep.subr.bf16.mxu0 0
        %1948 = vmatpush1.bf16.msra.mxu0 %v1614
        %1949 = vmatprep.subr.bf16.mxu0 0
        %1950 = vmatpush1.bf16.msra.mxu0 %v1613
        %1951 = vmatprep.subr.bf16.mxu0 0
        %1952 = vmatpush1.bf16.msra.mxu0 %v1612
        %1953 = vmatprep.subr.bf16.mxu0 0
        %1954 = vmatpush1.bf16.msra.mxu0 %v1611
        %1955 = vmatprep.subr.bf16.mxu0 0
        %1956 = vmatpush1.bf16.msra.mxu0 %v1610
        %1957 = vmatprep.subr.bf16.mxu0 0
        %1958 = vmatpush1.bf16.msra.mxu0 %v1609
        %1959 = vmatprep.subr.bf16.mxu0 0
        %1960 = vmatpush1.bf16.msra.mxu0 %v1608
        %1961 = vmatprep.subr.bf16.mxu0 0
        %1962 = vmatpush1.bf16.msra.mxu0 %v1607
        %1963 = vmatprep.subr.bf16.mxu0 0
        %1964 = vmatpush2.bf16.msra.mxu0 0
        %1965 = vmatprep.subr.bf16.mxu0 0
        %1966 = vmatpush2.bf16.msra.mxu0 0
        %1967 = vmatprep.subr.bf16.mxu0 0
        %1968 = vmatpush2.bf16.msra.mxu0 0
        %1969 = vmatprep.subr.bf16.mxu0 0
        %1970 = vmatpush2.bf16.msra.mxu0 0
        %1971 = vmatprep.subr.bf16.mxu0 0
        %1972 = vmatpush2.bf16.msra.mxu0 0
        %1973 = vmatprep.subr.bf16.mxu0 0
        %1974 = vmatpush2.bf16.msra.mxu0 0
        %1975 = vmatprep.subr.bf16.mxu0 0
        %1976 = vmatpush2.bf16.msra.mxu0 0
        %1977 = vmatprep.subr.bf16.mxu0 0
        %1978 = vmatpush2.bf16.msra.mxu0 0
        %1979 = vmatprep.mubr.bf16.mxu0 0
        %1980 = vmatmul.mubr.bf16.gmra.mxu0 %v1083
        %v1981 = vpop.f32.mrf.mxu0
        %v1982 = vadd.f32 %v1917, %v1981
        %v1983 = vpop.f32.mrf.mxu0
        %v1984 = vpop.f32.mrf.mxu0
        %v1985 = vadd.f32 %v1920, %v1984
        %v1986 = vpop.f32.mrf.mxu0
        %1987 = vmatprep.mubr.bf16.mxu0 0
        %1988 = vmatmul.mubr.bf16.gmra.mxu0 %v1092
        %v1989 = vpop.f32.mrf.mxu0
        %v1990 = vadd.f32 %v1925, %v1989
        %v1991 = vpop.f32.mrf.mxu0
        %v1992 = vpop.f32.mrf.mxu0
        %v1993 = vadd.f32 %v1928, %v1992
        %v1994 = vpop.f32.mrf.mxu0
        %1995 = vmatprep.mubr.bf16.mxu0 0
        %1996 = vmatmul.mubr.bf16.gmra.mxu0 %v1101
        %v1997 = vpop.f32.mrf.mxu0
        %v1998 = vadd.f32 %v1933, %v1997
        %v1999 = vpop.f32.mrf.mxu0
        %v2000 = vpop.f32.mrf.mxu0
        %v2001 = vadd.f32 %v1936, %v2000
        %v2002 = vpop.f32.mrf.mxu0
        %2003 = vmatprep.mubr.bf16.mxu0 0
        %2004 = vmatmul.mubr.bf16.gmra.mxu0 %v1110
        %v2005 = vpop.f32.mrf.mxu0
        %v2006 = vadd.f32 %v1941, %v2005
        %v2007 = vpop.f32.mrf.mxu0
        %v2008 = vpop.f32.mrf.mxu0
        %v2009 = vadd.f32 %v1944, %v2008
        %v2010 = vpop.f32.mrf.mxu0
        %2011 = vdwg.mxu0
        %2012 = vst [vmem:[%s599] sm:$0xff] %v1982
        %2013 = vst [vmem:[%s599 + $0x8] sm:$0xff] %v1985
        %2014 = vst [vmem:[%s599 + $0x10] sm:$0xff] %v1990
        %2015 = vst [vmem:[%s599 + $0x18] sm:$0xff] %v1993
        %2016 = vst [vmem:[%s599 + $0x20] sm:$0xff] %v1998
        %2017 = vst [vmem:[%s599 + $0x28] sm:$0xff] %v2001
        %2018 = vst [vmem:[%s599 + $0x30] sm:$0xff] %v2006
        %2019 = vst [vmem:[%s599 + $0x38] sm:$0xff] %v2009
        %v2020 = vadd.f32 %v1982, %v1985
        %v2021 = vadd.f32 %v2020, %v1990
        %v2022 = vadd.f32 %v2021, %v1993
        %v2023 = vadd.f32 %v2022, %v1998
        %v2024 = vadd.f32 %v2023, %v2001
        %v2025 = vadd.f32 %v2024, %v2006
        %v2026 = vadd.f32 %v2025, %v2009
        %v2027 = vrot.slane %v2026, 4
        %v2028 = vadd.f32 %v2026, %v2027
        %v2029 = vrot.slane %v2028, 2
        %v2030 = vadd.f32 %v2028, %v2029
        %v2031 = vrot.slane %v2030, 1
        %v2032 = vadd.f32 %v2030, %v2031
        %v2033 = vmul.f32 %v1982, %v1982
        %v2034 = vmul.f32 %v1985, %v1985
        %v2035 = vmul.f32 %v1990, %v1990
        %v2036 = vmul.f32 %v1993, %v1993
        %v2037 = vmul.f32 %v1998, %v1998
        %v2038 = vmul.f32 %v2001, %v2001
        %v2039 = vmul.f32 %v2006, %v2006
        %v2040 = vmul.f32 %v2009, %v2009
        %v2041 = vadd.f32 %v2033, %v2034
        %v2042 = vadd.f32 %v2041, %v2035
        %v2043 = vadd.f32 %v2042, %v2036
        %v2044 = vadd.f32 %v2043, %v2037
        %v2045 = vadd.f32 %v2044, %v2038
        %v2046 = vadd.f32 %v2045, %v2039
        %v2047 = vadd.f32 %v2046, %v2040
        %v2048 = vrot.slane %v2047, 4
        %v2049 = vadd.f32 %v2047, %v2048
        %v2050 = vrot.slane %v2049, 2
        %v2051 = vadd.f32 %v2049, %v2050
        %v2052 = vrot.slane %v2051, 1
        %v2053 = vadd.f32 %v2051, %v2052
        %vm2054 = vcmask 1040384
        %v2055 = vsel %vm2054, %v2032, %v2053
        %vm2056 = vcmask 1041408
        %v2057 = vsel %vm2056, %v2055, 0.0
        %2058 = vst [vmem:[%s603] sm:$0xff] %v2057
        %v2059 = vld [vmem:[%s648] sm:$0xf]
        %v2060 = vld [vmem:[%s648 + $0x8] sm:$0xf]
        %v2061 = vld [vmem:[%s648 + $0x10] sm:$0xf]
        %v2062 = vld [vmem:[%s648 + $0x18] sm:$0xf]
        %v2063 = vld [vmem:[%s648 + $0x20] sm:$0xf]
        %v2064 = vld [vmem:[%s648 + $0x28] sm:$0xf]
        %v2065 = vld [vmem:[%s648 + $0x30] sm:$0xf]
        %v2066 = vld [vmem:[%s648 + $0x38] sm:$0xf]
        %v2067 = vunpack.c.l.bf16 %v2059
        %v2068 = vunpack.c.l.bf16 %v2060
        %v2069 = vunpack.c.l.bf16 %v2061
        %v2070 = vunpack.c.l.bf16 %v2062
        %v2071 = vunpack.c.l.bf16 %v2063
        %v2072 = vunpack.c.l.bf16 %v2064
        %v2073 = vunpack.c.l.bf16 %v2065
        %v2074 = vunpack.c.l.bf16 %v2066
        %v2075 = vpack.c.bf16 %v2068, %v2067
        %v2076 = vpack.c.bf16 %v2070, %v2069
        %v2077 = vpack.c.bf16 %v2072, %v2071
        %v2078 = vpack.c.bf16 %v2074, %v2073
        %v2079 = vld [vmem:[%s2] sm:$0xf]
        %v2080 = vld [vmem:[%s2 + $0x4] sm:$0xf]
        %v2081 = vld [vmem:[%s2 + $0x8] sm:$0xf]
        %v2082 = vld [vmem:[%s2 + $0xc] sm:$0xf]
        %v2083 = vld [vmem:[%s2 + $0x10] sm:$0xf]
        %v2084 = vld [vmem:[%s2 + $0x14] sm:$0xf]
        %v2085 = vld [vmem:[%s2 + $0x18] sm:$0xf]
        %v2086 = vld [vmem:[%s2 + $0x1c] sm:$0xf]
        %v2087 = vld [vmem:[%s2 + $0x20] sm:$0xf]
        %v2088 = vld [vmem:[%s2 + $0x24] sm:$0xf]
        %v2089 = vld [vmem:[%s2 + $0x28] sm:$0xf]
        %v2090 = vld [vmem:[%s2 + $0x2c] sm:$0xf]
        %v2091 = vld [vmem:[%s2 + $0x30] sm:$0xf]
        %v2092 = vld [vmem:[%s2 + $0x34] sm:$0xf]
        %v2093 = vld [vmem:[%s2 + $0x38] sm:$0xf]
        %v2094 = vld [vmem:[%s2 + $0x3c] sm:$0xf]
        %v2111 = vunpack.c.l.b16 %v2079
        %v2112 = vunpack.c.l.b16 %v2080
        %v2113 = vunpack.c.l.b16 %v2081
        %v2114 = vunpack.c.l.b16 %v2082
        %v2115 = vunpack.c.l.b16 %v2083
        %v2116 = vunpack.c.l.b16 %v2084
        %v2117 = vunpack.c.l.b16 %v2085
        %v2118 = vunpack.c.l.b16 %v2086
        %v2119 = vunpack.c.l.b16 %v2087
        %v2120 = vunpack.c.l.b16 %v2088
        %v2121 = vunpack.c.l.b16 %v2089
        %v2122 = vunpack.c.l.b16 %v2090
        %v2123 = vunpack.c.l.b16 %v2091
        %v2124 = vunpack.c.l.b16 %v2092
        %v2125 = vunpack.c.l.b16 %v2093
        %v2126 = vunpack.c.l.b16 %v2094
        %v2127 = vpack.c.b16 %v2112, %v2111
        %v2128 = vpack.c.b16 %v2114, %v2113
        %v2129 = vpack.c.b16 %v2116, %v2115
        %v2130 = vpack.c.b16 %v2118, %v2117
        %v2131 = vpack.c.b16 %v2120, %v2119
        %v2132 = vpack.c.b16 %v2122, %v2121
        %v2133 = vpack.c.b16 %v2124, %v2123
        %v2134 = vpack.c.b16 %v2126, %v2125
        %2143 = vmatprep.subr.bf16.mxu0 0
        %2144 = vmatpush1.bf16.msra.mxu0 %v2134
        %2145 = vmatprep.subr.bf16.mxu0 0
        %2146 = vmatpush1.bf16.msra.mxu0 %v2133
        %2147 = vmatprep.subr.bf16.mxu0 0
        %2148 = vmatpush1.bf16.msra.mxu0 %v2132
        %2149 = vmatprep.subr.bf16.mxu0 0
        %2150 = vmatpush1.bf16.msra.mxu0 %v2131
        %2151 = vmatprep.subr.bf16.mxu0 0
        %2152 = vmatpush1.bf16.msra.mxu0 %v2130
        %2153 = vmatprep.subr.bf16.mxu0 0
        %2154 = vmatpush1.bf16.msra.mxu0 %v2129
        %2155 = vmatprep.subr.bf16.mxu0 0
        %2156 = vmatpush1.bf16.msra.mxu0 %v2128
        %2157 = vmatprep.subr.bf16.mxu0 0
        %2158 = vmatpush1.bf16.msra.mxu0 %v2127
        %2159 = vmatprep.subr.bf16.mxu0 0
        %2160 = vmatpush2.bf16.msra.mxu0 0
        %2161 = vmatprep.subr.bf16.mxu0 0
        %2162 = vmatpush2.bf16.msra.mxu0 0
        %2163 = vmatprep.subr.bf16.mxu0 0
        %2164 = vmatpush2.bf16.msra.mxu0 0
        %2165 = vmatprep.subr.bf16.mxu0 0
        %2166 = vmatpush2.bf16.msra.mxu0 0
        %2167 = vmatprep.subr.bf16.mxu0 0
        %2168 = vmatpush2.bf16.msra.mxu0 0
        %2169 = vmatprep.subr.bf16.mxu0 0
        %2170 = vmatpush2.bf16.msra.mxu0 0
        %2171 = vmatprep.subr.bf16.mxu0 0
        %2172 = vmatpush2.bf16.msra.mxu0 0
        %2173 = vmatprep.subr.bf16.mxu0 0
        %2174 = vmatpush2.bf16.msra.mxu0 0
        %2175 = vmatprep.mubr.bf16.mxu0 0
        %2176 = vmatmul.mubr.bf16.gmra.mxu0 %v2075
        %v2177 = vpop.f32.mrf.mxu0
        %v2178 = vadd.f32 0.0, %v2177
        %v2179 = vpop.f32.mrf.mxu0
        %v2180 = vpop.f32.mrf.mxu0
        %v2181 = vadd.f32 0.0, %v2180
        %v2182 = vpop.f32.mrf.mxu0
        %2183 = vmatprep.mubr.bf16.mxu0 0
        %2184 = vmatmul.mubr.bf16.gmra.mxu0 %v2076
        %v2185 = vpop.f32.mrf.mxu0
        %v2186 = vadd.f32 0.0, %v2185
        %v2187 = vpop.f32.mrf.mxu0
        %v2188 = vpop.f32.mrf.mxu0
        %v2189 = vadd.f32 0.0, %v2188
        %v2190 = vpop.f32.mrf.mxu0
        %2191 = vmatprep.mubr.bf16.mxu0 0
        %2192 = vmatmul.mubr.bf16.gmra.mxu0 %v2077
        %v2193 = vpop.f32.mrf.mxu0
        %v2194 = vadd.f32 0.0, %v2193
        %v2195 = vpop.f32.mrf.mxu0
        %v2196 = vpop.f32.mrf.mxu0
        %v2197 = vadd.f32 0.0, %v2196
        %v2198 = vpop.f32.mrf.mxu0
        %2199 = vmatprep.mubr.bf16.mxu0 0
        %2200 = vmatmul.mubr.bf16.gmra.mxu0 %v2078
        %v2201 = vpop.f32.mrf.mxu0
        %v2202 = vadd.f32 0.0, %v2201
        %v2203 = vpop.f32.mrf.mxu0
        %v2204 = vpop.f32.mrf.mxu0
        %v2205 = vadd.f32 0.0, %v2204
        %v2206 = vpop.f32.mrf.mxu0
        %2207 = vdwg.mxu0
        %2208 = vst [vmem:[%s608] sm:$0xff] %v2178
        %2209 = vst [vmem:[%s608 + $0x8] sm:$0xff] %v2181
        %2210 = vst [vmem:[%s608 + $0x10] sm:$0xff] %v2186
        %2211 = vst [vmem:[%s608 + $0x18] sm:$0xff] %v2189
        %2212 = vst [vmem:[%s608 + $0x20] sm:$0xff] %v2194
        %2213 = vst [vmem:[%s608 + $0x28] sm:$0xff] %v2197
        %2214 = vst [vmem:[%s608 + $0x30] sm:$0xff] %v2202
        %2215 = vst [vmem:[%s608 + $0x38] sm:$0xff] %v2205
        %v2216 = vadd.f32 %v2178, %v2181
        %v2217 = vadd.f32 %v2216, %v2186
        %v2218 = vadd.f32 %v2217, %v2189
        %v2219 = vadd.f32 %v2218, %v2194
        %v2220 = vadd.f32 %v2219, %v2197
        %v2221 = vadd.f32 %v2220, %v2202
        %v2222 = vadd.f32 %v2221, %v2205
        %v2223 = vrot.slane %v2222, 4
        %v2224 = vadd.f32 %v2222, %v2223
        %v2225 = vrot.slane %v2224, 2
        %v2226 = vadd.f32 %v2224, %v2225
        %v2227 = vrot.slane %v2226, 1
        %v2228 = vadd.f32 %v2226, %v2227
        %v2229 = vmul.f32 %v2178, %v2178
        %v2230 = vmul.f32 %v2181, %v2181
        %v2231 = vmul.f32 %v2186, %v2186
        %v2232 = vmul.f32 %v2189, %v2189
        %v2233 = vmul.f32 %v2194, %v2194
        %v2234 = vmul.f32 %v2197, %v2197
        %v2235 = vmul.f32 %v2202, %v2202
        %v2236 = vmul.f32 %v2205, %v2205
        %v2237 = vadd.f32 %v2229, %v2230
        %v2238 = vadd.f32 %v2237, %v2231
        %v2239 = vadd.f32 %v2238, %v2232
        %v2240 = vadd.f32 %v2239, %v2233
        %v2241 = vadd.f32 %v2240, %v2234
        %v2242 = vadd.f32 %v2241, %v2235
        %v2243 = vadd.f32 %v2242, %v2236
        %v2244 = vrot.slane %v2243, 4
        %v2245 = vadd.f32 %v2243, %v2244
        %v2246 = vrot.slane %v2245, 2
        %v2247 = vadd.f32 %v2245, %v2246
        %v2248 = vrot.slane %v2247, 1
        %v2249 = vadd.f32 %v2247, %v2248
        %v2250 = vsel %vm2054, %v2228, %v2249
        %v2251 = vsel %vm2056, %v2250, 0.0
        %2252 = vst [vmem:[%s612] sm:$0xff] %v2251
        %p2253 = scmp.lt.s32.totalorder %s18, 1
        %s2254 = scalar_select %p2253, %s18, 1
        %s2255 = smul.addr %s2254, 8
        %s2256 = smul.addr %s2255, 8
        %s2257 = scalar_lea.vmem %s3, %s2256
        %p2258 = scmp.lt.s32.totalorder %s18, 1
        %s2259 = scalar_select %p2258, %s18, 1
        %s2260 = smul.addr %s2259, 8
        %s2261 = scalar_lea.vmem %s4, %s2260
        %p2262 = scmp.lt.s32.totalorder %s18, 1
        %s2263 = scalar_select %p2262, %s18, 1
        %s2264 = smul.addr %s2263, 8
        %s2265 = smul.addr %s2264, 8
        %s2266 = scalar_lea.vmem %s5, %s2265
        %p2267 = scmp.lt.s32.totalorder %s18, 1
        %s2268 = scalar_select %p2267, %s18, 1
        %s2269 = smul.addr %s2268, 8
        %s2270 = scalar_lea.vmem %s6, %s2269
        // Predicated region
        $region74: #{res_block_forward.3} parent=68 // pred_check
          %p2271 = pneg %p104
        $region75: #{res_block_forward.3} parent=68 // pred_check_branch
          %2273 = sbr.rel (%p2271) target = $region77
        $region76: #{res_block_forward.3} parent=68 // pred_region
          _
        $region77: #{res_block_forward.3} parent=68 // pred_fallthru
          _
        // Predicated region
        $region78: #{res_block_forward.3} parent=68 // pred_check
          %p2274 = pneg %p130
        $region79: #{res_block_forward.3} parent=68 // pred_check_branch
          %2276 = sbr.rel (%p2274) target = $region81
        $region80: #{res_block_forward.3} parent=68 // pred_region
          _
        $region81: #{res_block_forward.3} parent=68 // pred_fallthru
          _
        // Predicated region
        $region82: #{res_block_forward.3} parent=68 // pred_check
          %p2277 = pneg %p156
        $region83: #{res_block_forward.3} parent=68 // pred_check_branch
          %2279 = sbr.rel (%p2277) target = $region85
        $region84: #{res_block_forward.3} parent=68 // pred_region
          _
        $region85: #{res_block_forward.3} parent=68 // pred_fallthru
          _
        // Predicated region
        $region86: #{res_block_forward.3} parent=68 // pred_check
          %p2280 = pneg %p182
        $region87: #{res_block_forward.3} parent=68 // pred_check_branch
          %2282 = sbr.rel (%p2280) target = $region89
        $region88: #{res_block_forward.3} parent=68 // pred_region
          _
        $region89: #{res_block_forward.3} parent=68 // pred_fallthru
          _
      $region69: #{res_block_forward.3} parent=5 // pred_fallthru
        _
      %p2283 = scmp.le.s32.totalorder 2, %s13
      // Predicated region
      $region90: #{res_block_forward.3} parent=5 // pred_check
        %p2284 = pneg %p2283
      $region91: #{res_block_forward.3} parent=5 // pred_check_branch
        %2286 = sbr.rel (%p2284) target = $region93
      $region92: #{res_block_forward.3} parent=5 // pred_region
        %s2287 = ssub.s32 %s13, 2
        // Predicated region
        $region94: #{res_block_forward.3} parent=92 // pred_check
          %p2288 = pneg %p110
        $region95: #{res_block_forward.3} parent=92 // pred_check_branch
          %2290 = sbr.rel (%p2288) target = $region97
        $region96: #{res_block_forward.3} parent=92 // pred_region
          %p2291 = scmp.lt.s32.totalorder %s19, 1
          %s2292 = scalar_select %p2291, %s19, 1
          %s2293 = smul.addr %s2292, 8
          %s2294 = smul.addr %s2293, 8
          %s2295 = scalar_lea.vmem %s3, %s2294
        $region97: #{res_block_forward.3} parent=92 // pred_fallthru
          _
        // Predicated region
        $region98: #{res_block_forward.3} parent=92 // pred_check
          %p2296 = pneg %p136
        $region99: #{res_block_forward.3} parent=92 // pred_check_branch
          %2298 = sbr.rel (%p2296) target = $region101
        $region100: #{res_block_forward.3} parent=92 // pred_region
          %p2299 = scmp.lt.s32.totalorder %s19, 1
          %s2300 = scalar_select %p2299, %s19, 1
          %s2301 = smul.addr %s2300, 8
          %s2302 = scalar_lea.vmem %s4, %s2301
        $region101: #{res_block_forward.3} parent=92 // pred_fallthru
          _
        // Predicated region
        $region102: #{res_block_forward.3} parent=92 // pred_check
          %p2303 = pneg %p162
        $region103: #{res_block_forward.3} parent=92 // pred_check_branch
          %2305 = sbr.rel (%p2303) target = $region105
        $region104: #{res_block_forward.3} parent=92 // pred_region
          %p2306 = scmp.lt.s32.totalorder %s19, 1
          %s2307 = scalar_select %p2306, %s19, 1
          %s2308 = smul.addr %s2307, 8
          %s2309 = smul.addr %s2308, 8
          %s2310 = scalar_lea.vmem %s5, %s2309
        $region105: #{res_block_forward.3} parent=92 // pred_fallthru
          _
        // Predicated region
        $region106: #{res_block_forward.3} parent=92 // pred_check
          %p2311 = pneg %p188
        $region107: #{res_block_forward.3} parent=92 // pred_check_branch
          %2313 = sbr.rel (%p2311) target = $region109
        $region108: #{res_block_forward.3} parent=92 // pred_region
          %p2314 = scmp.lt.s32.totalorder %s19, 1
          %s2315 = scalar_select %p2314, %s19, 1
          %s2316 = smul.addr %s2315, 8
          %s2317 = scalar_lea.vmem %s6, %s2316
        $region109: #{res_block_forward.3} parent=92 // pred_fallthru
          _
      $region93: #{res_block_forward.3} parent=5 // pred_fallthru
        _
    $region6: #{res_block_forward.3} parent=1 // loop_footer
      %s17 = sadd.s32 1, %s13
    $region7: #{res_block_forward.3} parent=1 // loop_footer_branch
      %12 = sbr.rel target = $region3
    $region8: #{res_block_forward.3} parent=1 // loop_exit
      _

// kernel: res_block_forward.4
$region0: #{res_block_forward.4}
  #allocation0 [shape = 'u32[]', space=smem, size = 0x4, offset = 0x4, fixed_abs, tag = 'smem constant byte address 0x4 - core index']
  #allocation1 [shape = 'u32[144,128]{1,0:T(1,128)}', space=vmem, size = 0x12000, scoped, tag = 'internal scratch']
  #allocation2 [shape = 'f32[1,10,10,128]{3,2,1,0:T(8,128)}', space=vmem, size = 0x14000, scoped, tag = 'scratch operand']
  %s0 = inlined_call_operand.vmem [shape: f32[2,8,8,128], index: 0, kind: input, shape index: {}]
  %s1 = inlined_call_operand.vmem [shape: f32[1,128], index: 1, kind: input, shape index: {}]
  %s2 = inlined_call_operand.vmem [shape: f32[1,128], index: 2, kind: input, shape index: {}]
  %s3 = inlined_call_operand.vmem [shape: bf16[1152,128], index: 3, kind: input, shape index: {}]
  %s4 = inlined_call_operand.vmem [shape: f32[2,8,8,128], index: 4, kind: output, shape index: {0}]
  %s5 = inlined_call_operand.vmem [shape: f32[2,8,128], index: 5, kind: output, shape index: {1}]
  %6 = xla_tuple %s4, %s5
  %s7 = sld [smem:[#allocation0]]
  $region57: #{res_block_forward.4} parent=0
    _
  %s9 = ssub.s32 1, %s7
  %s10 = scalar_select 0, %s9, %s7
  loop: start=0, step=1, limit=4
  $region2: #{res_block_forward.4} parent=0 // loop_pre_header
    _
  $region3: #{res_block_forward.4} parent=0 // loop_header
    %s12 = sphi 0, %s16
    %p13 = scmp.ge.s32.totalorder %s12, 4
    %s22 = sphi 0, %s24
    %s25 = sphi 0, %s22
    %s26 = sphi 0, %s25
    %s42 = sphi 0, %s26
    %s46 = sphi 0, %s46
    %s48 = sphi 0, %s46
    %s49 = sphi 0, %s48
    %s63 = sphi 0, %s49
    %s67 = sphi 0, %s67
    %s69 = sphi 0, %s67
    %s70 = sphi 0, %s69
    %s84 = sphi 0, %s70
    %s88 = sphi 0, %s88
    %s90 = sphi 0, %s88
    %s91 = sphi 0, %s90
    %s105 = sphi 0, %s91
    %s111 = sphi 0, %s113
    %s114 = sphi 0, %s111
    %s115 = sphi 0, %s114
    %s131 = sphi 0, %s115
    %s137 = sphi 0, %s139
    %s140 = sphi 0, %s137
    %s141 = sphi 0, %s140
    %s157 = sphi 0, %s141
  $region4: #{res_block_forward.4} parent=0 // loop_header_branch
    %15 = sbr.rel (%p13) target = $region8
  $region5: #{res_block_forward.4} parent=0 // loop_body
    %s17 = ssub.s32 %s12, 1
    %s18 = ssub.s32 %s12, 2
    %s19 = sadd.s32 %s12, 1
    %s20 = ssub.s32 %s12, %s19
    %p21 = scmp.eq.s32.totalorder %s20, 0
    %s23 = sadd.s32 %s22, 1
    %s24 = scalar_select %p21, %s22, %s23
    %p27 = pneg %p21
    %p28 = scmp.eq.s32.totalorder %s12, 1
    %p29 = por %p27, %p28
    %p30 = scmp.ne.s32.totalorder %s22, %s25
    %p31 = scmp.eq.s32.totalorder %s12, 0
    %p32 = por %p30, %p31
    %p33 = scmp.ne.s32.totalorder %s22, %s25
    %p34 = scmp.eq.s32.totalorder %s17, 1
    %p35 = por %p33, %p34
    %p36 = scmp.ne.s32.totalorder %s25, %s26
    %p37 = scmp.eq.s32.totalorder %s17, 0
    %p38 = por %p36, %p37
    %p39 = scmp.ne.s32.totalorder %s25, %s26
    %p40 = scmp.eq.s32.totalorder %s18, 1
    %p41 = por %p39, %p40
    %p43 = scmp.ne.s32.totalorder %s26, %s42
    %p44 = scmp.eq.s32.totalorder %s18, 0
    %p45 = por %p43, %p44
    %s47 = sadd.s32 %s46, 1
    %p50 = scmp.eq.s32.totalorder %s12, 1
    %p51 = scmp.ne.s32.totalorder %s46, %s48
    %p52 = scmp.eq.s32.totalorder %s12, 0
    %p53 = por %p51, %p52
    %p54 = scmp.ne.s32.totalorder %s46, %s48
    %p55 = scmp.eq.s32.totalorder %s17, 1
    %p56 = por %p54, %p55
    %p57 = scmp.ne.s32.totalorder %s48, %s49
    %p58 = scmp.eq.s32.totalorder %s17, 0
    %p59 = por %p57, %p58
    %p60 = scmp.ne.s32.totalorder %s48, %s49
    %p61 = scmp.eq.s32.totalorder %s18, 1
    %p62 = por %p60, %p61
    %p64 = scmp.ne.s32.totalorder %s49, %s63
    %p65 = scmp.eq.s32.totalorder %s18, 0
    %p66 = por %p64, %p65
    %s68 = sadd.s32 %s67, 1
    %p71 = scmp.eq.s32.totalorder %s12, 1
    %p72 = scmp.ne.s32.totalorder %s67, %s69
    %p73 = scmp.eq.s32.totalorder %s12, 0
    %p74 = por %p72, %p73
    %p75 = scmp.ne.s32.totalorder %s67, %s69
    %p76 = scmp.eq.s32.totalorder %s17, 1
    %p77 = por %p75, %p76
    %p78 = scmp.ne.s32.totalorder %s69, %s70
    %p79 = scmp.eq.s32.totalorder %s17, 0
    %p80 = por %p78, %p79
    %p81 = scmp.ne.s32.totalorder %s69, %s70
    %p82 = scmp.eq.s32.totalorder %s18, 1
    %p83 = por %p81, %p82
    %p85 = scmp.ne.s32.totalorder %s70, %s84
    %p86 = scmp.eq.s32.totalorder %s18, 0
    %p87 = por %p85, %p86
    %s89 = sadd.s32 %s88, 1
    %p92 = scmp.eq.s32.totalorder %s12, 1
    %p93 = scmp.ne.s32.totalorder %s88, %s90
    %p94 = scmp.eq.s32.totalorder %s12, 0
    %p95 = por %p93, %p94
    %p96 = scmp.ne.s32.totalorder %s88, %s90
    %p97 = scmp.eq.s32.totalorder %s17, 1
    %p98 = por %p96, %p97
    %p99 = scmp.ne.s32.totalorder %s90, %s91
    %p100 = scmp.eq.s32.totalorder %s17, 0
    %p101 = por %p99, %p100
    %p102 = scmp.ne.s32.totalorder %s90, %s91
    %p103 = scmp.eq.s32.totalorder %s18, 1
    %p104 = por %p102, %p103
    %p106 = scmp.ne.s32.totalorder %s91, %s105
    %p107 = scmp.eq.s32.totalorder %s18, 0
    %p108 = por %p106, %p107
    %s109 = ssub.s32 %s12, %s19
    %p110 = scmp.eq.s32.totalorder %s109, 0
    %s112 = sadd.s32 %s111, 1
    %s113 = scalar_select %p110, %s111, %s112
    %p116 = pneg %p110
    %p117 = scmp.eq.s32.totalorder %s12, 1
    %p118 = por %p116, %p117
    %p119 = scmp.ne.s32.totalorder %s111, %s114
    %p120 = scmp.eq.s32.totalorder %s12, 0
    %p121 = por %p119, %p120
    %p122 = scmp.ne.s32.totalorder %s111, %s114
    %p123 = scmp.eq.s32.totalorder %s17, 1
    %p124 = por %p122, %p123
    %p125 = scmp.ne.s32.totalorder %s114, %s115
    %p126 = scmp.eq.s32.totalorder %s17, 0
    %p127 = por %p125, %p126
    %p128 = scmp.ne.s32.totalorder %s114, %s115
    %p129 = scmp.eq.s32.totalorder %s18, 1
    %p130 = por %p128, %p129
    %p132 = scmp.ne.s32.totalorder %s115, %s131
    %p133 = scmp.eq.s32.totalorder %s18, 0
    %p134 = por %p132, %p133
    %s135 = ssub.s32 %s12, %s19
    %p136 = scmp.eq.s32.totalorder %s135, 0
    %s138 = sadd.s32 %s137, 1
    %s139 = scalar_select %p136, %s137, %s138
    %p142 = pneg %p136
    %p143 = scmp.eq.s32.totalorder %s12, 1
    %p144 = por %p142, %p143
    %p145 = scmp.ne.s32.totalorder %s137, %s140
    %p146 = scmp.eq.s32.totalorder %s12, 0
    %p147 = por %p145, %p146
    %p148 = scmp.ne.s32.totalorder %s137, %s140
    %p149 = scmp.eq.s32.totalorder %s17, 1
    %p150 = por %p148, %p149
    %p151 = scmp.ne.s32.totalorder %s140, %s141
    %p152 = scmp.eq.s32.totalorder %s17, 0
    %p153 = por %p151, %p152
    %p154 = scmp.ne.s32.totalorder %s140, %s141
    %p155 = scmp.eq.s32.totalorder %s18, 1
    %p156 = por %p154, %p155
    %p158 = scmp.ne.s32.totalorder %s141, %s157
    %p159 = scmp.eq.s32.totalorder %s18, 0
    %p160 = por %p158, %p159
    %p161 = scmp.le.s32.totalorder 1, %s12
    %p162 = scmp.lt.s32.totalorder %s12, 3
    %p163 = pnand %p161, %p162
    %p164 = pneg %p163
    // Predicated region
    $region9: #{res_block_forward.4} parent=5 // pred_check
      _
    $region10: #{res_block_forward.4} parent=5 // pred_check_branch
      %166 = sbr.rel (%p163) target = $region12
    $region11: #{res_block_forward.4} parent=5 // pred_region
      %s167 = ssub.s32 %s12, 1
      // Predicated region
      $region13: #{res_block_forward.4} parent=11 // pred_check
        %p168 = pneg %p59
      $region14: #{res_block_forward.4} parent=11 // pred_check_branch
        %170 = sbr.rel (%p168) target = $region16
      $region15: #{res_block_forward.4} parent=11 // pred_region
        _
      $region16: #{res_block_forward.4} parent=11 // pred_fallthru
        _
      // Predicated region
      $region17: #{res_block_forward.4} parent=11 // pred_check
        %p171 = pneg %p80
      $region18: #{res_block_forward.4} parent=11 // pred_check_branch
        %173 = sbr.rel (%p171) target = $region20
      $region19: #{res_block_forward.4} parent=11 // pred_region
        _
      $region20: #{res_block_forward.4} parent=11 // pred_fallthru
        _
      // Predicated region
      $region21: #{res_block_forward.4} parent=11 // pred_check
        %p174 = pneg %p101
      $region22: #{res_block_forward.4} parent=11 // pred_check_branch
        %176 = sbr.rel (%p174) target = $region24
      $region23: #{res_block_forward.4} parent=11 // pred_region
        _
      $region24: #{res_block_forward.4} parent=11 // pred_fallthru
        _
    $region12: #{res_block_forward.4} parent=5 // pred_fallthru
      _
    %p177 = scmp.lt.s32.totalorder %s12, 2
    // Predicated region
    $region25: #{res_block_forward.4} parent=5 // pred_check
      %p178 = pneg %p177
    $region26: #{res_block_forward.4} parent=5 // pred_check_branch
      %180 = sbr.rel (%p178) target = $region28
    $region27: #{res_block_forward.4} parent=5 // pred_region
      // Predicated region
      $region29: #{res_block_forward.4} parent=27 // pred_check
        %p181 = pneg %p32
      $region30: #{res_block_forward.4} parent=27 // pred_check_branch
        %183 = sbr.rel (%p181) target = $region32
      $region31: #{res_block_forward.4} parent=27 // pred_region
        %p184 = scmp.lt.s32.totalorder %s12, 1
        %s185 = scalar_select %p184, %s12, 1
        %s186 = smul.addr %s185, 8
        %s187 = smul.addr %s186, 8
        %s188 = scalar_lea.vmem %s0, %s187
      $region32: #{res_block_forward.4} parent=27 // pred_fallthru
        _
    $region28: #{res_block_forward.4} parent=5 // pred_fallthru
      _
    %p189 = scmp.le.s32.totalorder 1, %s12
    %p190 = scmp.lt.s32.totalorder %s12, 3
    %p191 = pnand %p189, %p190
    %p192 = pneg %p191
    // Predicated region
    $region33: #{res_block_forward.4} parent=5 // pred_check
      _
    $region34: #{res_block_forward.4} parent=5 // pred_check_branch
      %194 = sbr.rel (%p191) target = $region36
    $region35: #{res_block_forward.4} parent=5 // pred_region
      %s195 = ssub.s32 %s12, 1
      %p196 = scmp.lt.s32.totalorder %s17, 1
      %s197 = scalar_select %p196, %s17, 1
      %s198 = smul.addr %s197, 8
      %s199 = smul.addr %s198, 8
      %s200 = scalar_lea.vmem %s0, %s199
      %p201 = pneg %p38
      %p202 = pneg %p35
      %p203 = pneg %p59
      %p204 = pneg %p56
      %p205 = pneg %p80
      %p206 = pneg %p77
      %p207 = pneg %p101
      %p208 = pneg %p98
      %p209 = pneg %p127
      %p210 = pneg %p124
      %p211 = scmp.lt.s32.totalorder %s17, 1
      %s212 = scalar_select %p211, %s17, 1
      %s213 = smul.addr %s212, 8
      %s214 = smul.addr %s213, 8
      %s215 = scalar_lea.vmem %s4, %s214
      %p216 = pneg %p153
      %p217 = pneg %p150
      %p218 = scmp.lt.s32.totalorder %s17, 1
      %s219 = scalar_select %p218, %s17, 1
      %s220 = smul.addr %s219, 8
      %s221 = scalar_lea.vmem %s5, %s220
      %p222 = scmp.lt.s32.totalorder %s17, 1
      %s223 = scalar_select %p222, %s17, 1
      %s224 = smul.addr %s223, 8
      %s225 = smul.addr %s224, 8
      %s226 = scalar_lea.vmem %s0, %s225
      %p227 = scmp.lt.s32.totalorder %s17, 1
      %s228 = scalar_select %p227, %s17, 1
      %s229 = smul.addr %s228, 8
      %s230 = smul.addr %s229, 8
      %s231 = scalar_lea.vmem %s4, %s230
      %p232 = scmp.lt.s32.totalorder %s17, 1
      %s233 = scalar_select %p232, %s17, 1
      %s234 = smul.addr %s233, 8
      %s235 = scalar_lea.vmem %s5, %s234
      %v237 = vld [vmem:[%s226] sm:$0xff]
      %v238 = vld [vmem:[%s226 + $0x8] sm:$0xff]
      %v239 = vld [vmem:[%s226 + $0x10] sm:$0xff]
      %v240 = vld [vmem:[%s226 + $0x18] sm:$0xff]
      %v241 = vld [vmem:[%s226 + $0x20] sm:$0xff]
      %v242 = vld [vmem:[%s226 + $0x28] sm:$0xff]
      %v243 = vld [vmem:[%s226 + $0x30] sm:$0xff]
      %v244 = vld [vmem:[%s226 + $0x38] sm:$0xff]
      %v245 = vld [vmem:[%s1] sm:$0x1]
      %v247 = vlaneseq
      %v248 = vshrl.u32 %v247, 7
      %v249 = vsub.s32 0, %v248
      %v250 = vrot.slane %v245, %v249
      %v252 = vmul.f32 %v237, %v250
      %v253 = vmul.f32 %v238, %v250
      %v254 = vmul.f32 %v239, %v250
      %v255 = vmul.f32 %v240, %v250
      %v256 = vmul.f32 %v241, %v250
      %v257 = vmul.f32 %v242, %v250
      %v258 = vmul.f32 %v243, %v250
      %v259 = vmul.f32 %v244, %v250
      %v260 = vld [vmem:[%s2] sm:$0x1]
      %v262 = vlaneseq
      %v263 = vshrl.u32 %v262, 7
      %v264 = vsub.s32 0, %v263
      %v265 = vrot.slane %v260, %v264
      %v267 = vadd.f32 %v252, %v265
      %v268 = vadd.f32 %v253, %v265
      %v269 = vadd.f32 %v254, %v265
      %v270 = vadd.f32 %v255, %v265
      %v271 = vadd.f32 %v256, %v265
      %v272 = vadd.f32 %v257, %v265
      %v273 = vadd.f32 %v258, %v265
      %v274 = vadd.f32 %v259, %v265
      %v275 = vmax.f32 %v267, 0.0
      %v276 = vmax.f32 %v268, 0.0
      %v277 = vmax.f32 %v269, 0.0
      %v278 = vmax.f32 %v270, 0.0
      %v279 = vmax.f32 %v271, 0.0
      %v280 = vmax.f32 %v272, 0.0
      %v281 = vmax.f32 %v273, 0.0
      %v282 = vmax.f32 %v274, 0.0
      %283 = vst [vmem:[#allocation2] sm:$0xff] 0.0
      %284 = vst [vmem:[#allocation2 + $0x8] sm:$0x3] 0.0
      %s285 = scalar_lea.vmem [#allocation2], 144
      %286 = vst [vmem:[%s285] sm:$0xff] 0.0
      %287 = vst [vmem:[%s285 + $0x8] sm:$0x3] 0.0
      %s288 = scalar_lea.vmem [#allocation2], 16
      %289 = vst [vmem:[%s288] sm:$0x1] 0.0
      %290 = vst [vmem:[%s288 + $0x10] sm:$0x1] 0.0
      %291 = vst [vmem:[%s288 + $0x20] sm:$0x1] 0.0
      %292 = vst [vmem:[%s288 + $0x30] sm:$0x1] 0.0
      %293 = vst [vmem:[%s288 + $0x40] sm:$0x1] 0.0
      %294 = vst [vmem:[%s288 + $0x50] sm:$0x1] 0.0
      %295 = vst [vmem:[%s288 + $0x60] sm:$0x1] 0.0
      %296 = vst [vmem:[%s288 + $0x70] sm:$0x1] 0.0
      %297 = vst [vmem:[%s288 + $0x9] sm:$0x1] 0.0
      %298 = vst [vmem:[%s288 + $0x19] sm:$0x1] 0.0
      %299 = vst [vmem:[%s288 + $0x29] sm:$0x1] 0.0
      %300 = vst [vmem:[%s288 + $0x39] sm:$0x1] 0.0
      %301 = vst [vmem:[%s288 + $0x49] sm:$0x1] 0.0
      %302 = vst [vmem:[%s288 + $0x59] sm:$0x1] 0.0
      %303 = vst [vmem:[%s288 + $0x69] sm:$0x1] 0.0
      %304 = vst [vmem:[%s288 + $0x79] sm:$0x1] 0.0
      %305 = vst [vmem:[%s288 + $0x1] sm:$0xff] %v275
      %306 = vst [vmem:[%s288 + $0x11] sm:$0xff] %v276
      %307 = vst [vmem:[%s288 + $0x21] sm:$0xff] %v277
      %308 = vst [vmem:[%s288 + $0x31] sm:$0xff] %v278
      %309 = vst [vmem:[%s288 + $0x41] sm:$0xff] %v279
      %310 = vst [vmem:[%s288 + $0x51] sm:$0xff] %v280
      %311 = vst [vmem:[%s288 + $0x61] sm:$0xff] %v281
      %312 = vst [vmem:[%s288 + $0x71] sm:$0xff] %v282
      %v313 = vld [vmem:[#allocation2] sm:$0xff]
      %v314 = vld [vmem:[#allocation2 + $0x10] sm:$0xff]
      %v315 = vld [vmem:[#allocation2 + $0x20] sm:$0xff]
      %v316 = vld [vmem:[#allocation2 + $0x30] sm:$0xff]
      %v317 = vld [vmem:[#allocation2 + $0x40] sm:$0xff]
      %v318 = vld [vmem:[#allocation2 + $0x50] sm:$0xff]
      %v319 = vld [vmem:[#allocation2 + $0x60] sm:$0xff]
      %v320 = vld [vmem:[#allocation2 + $0x70] sm:$0xff]
      %v321 = vld [vmem:[#allocation2 + $0x1] sm:$0xff]
      %v322 = vld [vmem:[#allocation2 + $0x11] sm:$0xff]
      %v323 = vld [vmem:[#allocation2 + $0x21] sm:$0xff]
      %v324 = vld [vmem:[#allocation2 + $0x31] sm:$0xff]
      %v325 = vld [vmem:[#allocation2 + $0x41] sm:$0xff]
      %v326 = vld [vmem:[#allocation2 + $0x51] sm:$0xff]
      %v327 = vld [vmem:[#allocation2 + $0x61] sm:$0xff]
      %v328 = vld [vmem:[#allocation2 + $0x71] sm:$0xff]
      %v329 = vld [vmem:[#allocation2 + $0x2] sm:$0xff]
      %v330 = vld [vmem:[#allocation2 + $0x12] sm:$0xff]
      %v331 = vld [vmem:[#allocation2 + $0x22] sm:$0xff]
      %v332 = vld [vmem:[#allocation2 + $0x32] sm:$0xff]
      %v333 = vld [vmem:[#allocation2 + $0x42] sm:$0xff]
      %v334 = vld [vmem:[#allocation2 + $0x52] sm:$0xff]
      %v335 = vld [vmem:[#allocation2 + $0x62] sm:$0xff]
      %v336 = vld [vmem:[#allocation2 + $0x72] sm:$0xff]
      %v337 = vld [vmem:[%s288] sm:$0xff]
      %v338 = vld [vmem:[%s288 + $0x10] sm:$0xff]
      %v339 = vld [vmem:[%s288 + $0x20] sm:$0xff]
      %v340 = vld [vmem:[%s288 + $0x30] sm:$0xff]
      %v341 = vld [vmem:[%s288 + $0x40] sm:$0xff]
      %v342 = vld [vmem:[%s288 + $0x50] sm:$0xff]
      %v343 = vld [vmem:[%s288 + $0x60] sm:$0xff]
      %v344 = vld [vmem:[%s288 + $0x70] sm:$0xff]
      %v345 = vld [vmem:[%s288 + $0x1] sm:$0xff]
      %v346 = vld [vmem:[%s288 + $0x11] sm:$0xff]
      %v347 = vld [vmem:[%s288 + $0x21] sm:$0xff]
      %v348 = vld [vmem:[%s288 + $0x31] sm:$0xff]
      %v349 = vld [vmem:[%s288 + $0x41] sm:$0xff]
      %v350 = vld [vmem:[%s288 + $0x51] sm:$0xff]
      %v351 = vld [vmem:[%s288 + $0x61] sm:$0xff]
      %v352 = vld [vmem:[%s288 + $0x71] sm:$0xff]
      %v353 = vld [vmem:[%s288 + $0x2] sm:$0xff]
      %v354 = vld [vmem:[%s288 + $0x12] sm:$0xff]
      %v355 = vld [vmem:[%s288 + $0x22] sm:$0xff]
      %v356 = vld [vmem:[%s288 + $0x32] sm:$0xff]
      %v357 = vld [vmem:[%s288 + $0x42] sm:$0xff]
      %v358 = vld [vmem:[%s288 + $0x52] sm:$0xff]
      %v359 = vld [vmem:[%s288 + $0x62] sm:$0xff]
      %v360 = vld [vmem:[%s288 + $0x72] sm:$0xff]
      %s361 = scalar_lea.vmem [#allocation2], 32
      %v362 = vld [vmem:[%s361] sm:$0xff]
      %v363 = vld [vmem:[%s361 + $0x10] sm:$0xff]
      %v364 = vld [vmem:[%s361 + $0x20] sm:$0xff]
      %v365 = vld [vmem:[%s361 + $0x30] sm:$0xff]
      %v366 = vld [vmem:[%s361 + $0x40] sm:$0xff]
      %v367 = vld [vmem:[%s361 + $0x50] sm:$0xff]
      %v368 = vld [vmem:[%s361 + $0x60] sm:$0xff]
      %v369 = vld [vmem:[%s361 + $0x70] sm:$0xff]
      %v370 = vld [vmem:[%s361 + $0x1] sm:$0xff]
      %v371 = vld [vmem:[%s361 + $0x11] sm:$0xff]
      %v372 = vld [vmem:[%s361 + $0x21] sm:$0xff]
      %v373 = vld [vmem:[%s361 + $0x31] sm:$0xff]
      %v374 = vld [vmem:[%s361 + $0x41] sm:$0xff]
      %v375 = vld [vmem:[%s361 + $0x51] sm:$0xff]
      %v376 = vld [vmem:[%s361 + $0x61] sm:$0xff]
      %v377 = vld [vmem:[%s361 + $0x71] sm:$0xff]
      %v378 = vld [vmem:[%s361 + $0x2] sm:$0xff]
      %v379 = vld [vmem:[%s361 + $0x12] sm:$0xff]
      %v380 = vld [vmem:[%s361 + $0x22] sm:$0xff]
      %v381 = vld [vmem:[%s361 + $0x32] sm:$0xff]
      %v382 = vld [vmem:[%s361 + $0x42] sm:$0xff]
      %v383 = vld [vmem:[%s361 + $0x52] sm:$0xff]
      %v384 = vld [vmem:[%s361 + $0x62] sm:$0xff]
      %v385 = vld [vmem:[%s361 + $0x72] sm:$0xff]
      %v386 = vpack.c.bf16 %v314, %v313
      %v387 = vpack.c.bf16 %v322, %v321
      %v388 = vpack.c.bf16 %v330, %v329
      %v389 = vpack.c.bf16 %v338, %v337
      %v390 = vpack.c.bf16 %v346, %v345
      %v391 = vpack.c.bf16 %v354, %v353
      %v392 = vpack.c.bf16 %v363, %v362
      %v393 = vpack.c.bf16 %v371, %v370
      %v394 = vpack.c.bf16 %v379, %v378
      %v395 = vpack.c.bf16 %v316, %v315
      %v396 = vpack.c.bf16 %v324, %v323
      %v397 = vpack.c.bf16 %v332, %v331
      %v398 = vpack.c.bf16 %v340, %v339
      %v399 = vpack.c.bf16 %v348, %v347
      %v400 = vpack.c.bf16 %v356, %v355
      %v401 = vpack.c.bf16 %v365, %v364
      %v402 = vpack.c.bf16 %v373, %v372
      %v403 = vpack.c.bf16 %v381, %v380
      %v404 = vpack.c.bf16 %v318, %v317
      %v405 = vpack.c.bf16 %v326, %v325
      %v406 = vpack.c.bf16 %v334, %v333
      %v407 = vpack.c.bf16 %v342, %v341
      %v408 = vpack.c.bf16 %v350, %v349
      %v409 = vpack.c.bf16 %v358, %v357
      %v410 = vpack.c.bf16 %v367, %v366
      %v411 = vpack.c.bf16 %v375, %v374
      %v412 = vpack.c.bf16 %v383, %v382
      %v413 = vpack.c.bf16 %v320, %v319
      %v414 = vpack.c.bf16 %v328, %v327
      %v415 = vpack.c.bf16 %v336, %v335
      %v416 = vpack.c.bf16 %v344, %v343
      %v417 = vpack.c.bf16 %v352, %v351
      %v418 = vpack.c.bf16 %v360, %v359
      %v419 = vpack.c.bf16 %v369, %v368
      %v420 = vpack.c.bf16 %v377, %v376
      %v421 = vpack.c.bf16 %v385, %v384
      %v422 = vld [vmem:[%s3] sm:$0xf]
      %v423 = vld [vmem:[%s3 + $0x4] sm:$0xf]
      %v424 = vld [vmem:[%s3 + $0x8] sm:$0xf]
      %v425 = vld [vmem:[%s3 + $0xc] sm:$0xf]
      %v426 = vld [vmem:[%s3 + $0x10] sm:$0xf]
      %v427 = vld [vmem:[%s3 + $0x14] sm:$0xf]
      %v428 = vld [vmem:[%s3 + $0x18] sm:$0xf]
      %v429 = vld [vmem:[%s3 + $0x1c] sm:$0xf]
      %v430 = vld [vmem:[%s3 + $0x20] sm:$0xf]
      %v431 = vld [vmem:[%s3 + $0x24] sm:$0xf]
      %v432 = vld [vmem:[%s3 + $0x28] sm:$0xf]
      %v433 = vld [vmem:[%s3 + $0x2c] sm:$0xf]
      %v434 = vld [vmem:[%s3 + $0x30] sm:$0xf]
      %v435 = vld [vmem:[%s3 + $0x34] sm:$0xf]
      %v436 = vld [vmem:[%s3 + $0x38] sm:$0xf]
      %v437 = vld [vmem:[%s3 + $0x3c] sm:$0xf]
      %v438 = vld [vmem:[%s3 + $0x40] sm:$0xf]
      %v439 = vld [vmem:[%s3 + $0x44] sm:$0xf]
      %v440 = vld [vmem:[%s3 + $0x48] sm:$0xf]
      %v441 = vld [vmem:[%s3 + $0x4c] sm:$0xf]
      %v442 = vld [vmem:[%s3 + $0x50] sm:$0xf]
      %v443 = vld [vmem:[%s3 + $0x54] sm:$0xf]
      %v444 = vld [vmem:[%s3 + $0x58] sm:$0xf]
      %v445 = vld [vmem:[%s3 + $0x5c] sm:$0xf]
      %v446 = vld [vmem:[%s3 + $0x60] sm:$0xf]
      %v447 = vld [vmem:[%s3 + $0x64] sm:$0xf]
      %v448 = vld [vmem:[%s3 + $0x68] sm:$0xf]
      %v449 = vld [vmem:[%s3 + $0x6c] sm:$0xf]
      %v450 = vld [vmem:[%s3 + $0x70] sm:$0xf]
      %v451 = vld [vmem:[%s3 + $0x74] sm:$0xf]
      %v452 = vld [vmem:[%s3 + $0x78] sm:$0xf]
      %v453 = vld [vmem:[%s3 + $0x7c] sm:$0xf]
      %v454 = vld [vmem:[%s3 + $0x80] sm:$0xf]
      %v455 = vld [vmem:[%s3 + $0x84] sm:$0xf]
      %v456 = vld [vmem:[%s3 + $0x88] sm:$0xf]
      %v457 = vld [vmem:[%s3 + $0x8c] sm:$0xf]
      %v458 = vld [vmem:[%s3 + $0x90] sm:$0xf]
      %v459 = vld [vmem:[%s3 + $0x94] sm:$0xf]
      %v460 = vld [vmem:[%s3 + $0x98] sm:$0xf]
      %v461 = vld [vmem:[%s3 + $0x9c] sm:$0xf]
      %v462 = vld [vmem:[%s3 + $0xa0] sm:$0xf]
      %v463 = vld [vmem:[%s3 + $0xa4] sm:$0xf]
      %v464 = vld [vmem:[%s3 + $0xa8] sm:$0xf]
      %v465 = vld [vmem:[%s3 + $0xac] sm:$0xf]
      %v466 = vld [vmem:[%s3 + $0xb0] sm:$0xf]
      %v467 = vld [vmem:[%s3 + $0xb4] sm:$0xf]
      %v468 = vld [vmem:[%s3 + $0xb8] sm:$0xf]
      %v469 = vld [vmem:[%s3 + $0xbc] sm:$0xf]
      %v470 = vld [vmem:[%s3 + $0xc0] sm:$0xf]
      %v471 = vld [vmem:[%s3 + $0xc4] sm:$0xf]
      %v472 = vld [vmem:[%s3 + $0xc8] sm:$0xf]
      %v473 = vld [vmem:[%s3 + $0xcc] sm:$0xf]
      %v474 = vld [vmem:[%s3 + $0xd0] sm:$0xf]
      %v475 = vld [vmem:[%s3 + $0xd4] sm:$0xf]
      %v476 = vld [vmem:[%s3 + $0xd8] sm:$0xf]
      %v477 = vld [vmem:[%s3 + $0xdc] sm:$0xf]
      %v478 = vld [vmem:[%s3 + $0xe0] sm:$0xf]
      %v479 = vld [vmem:[%s3 + $0xe4] sm:$0xf]
      %v480 = vld [vmem:[%s3 + $0xe8] sm:$0xf]
      %v481 = vld [vmem:[%s3 + $0xec] sm:$0xf]
      %v482 = vld [vmem:[%s3 + $0xf0] sm:$0xf]
      %v483 = vld [vmem:[%s3 + $0xf4] sm:$0xf]
      %v484 = vld [vmem:[%s3 + $0xf8] sm:$0xf]
      %v485 = vld [vmem:[%s3 + $0xfc] sm:$0xf]
      %v486 = vld [vmem:[%s3 + $0x100] sm:$0xf]
      %v487 = vld [vmem:[%s3 + $0x104] sm:$0xf]
      %v488 = vld [vmem:[%s3 + $0x108] sm:$0xf]
      %v489 = vld [vmem:[%s3 + $0x10c] sm:$0xf]
      %v490 = vld [vmem:[%s3 + $0x110] sm:$0xf]
      %v491 = vld [vmem:[%s3 + $0x114] sm:$0xf]
      %v492 = vld [vmem:[%s3 + $0x118] sm:$0xf]
      %v493 = vld [vmem:[%s3 + $0x11c] sm:$0xf]
      %v494 = vld [vmem:[%s3 + $0x120] sm:$0xf]
      %v495 = vld [vmem:[%s3 + $0x124] sm:$0xf]
      %v496 = vld [vmem:[%s3 + $0x128] sm:$0xf]
      %v497 = vld [vmem:[%s3 + $0x12c] sm:$0xf]
      %v498 = vld [vmem:[%s3 + $0x130] sm:$0xf]
      %v499 = vld [vmem:[%s3 + $0x134] sm:$0xf]
      %v500 = vld [vmem:[%s3 + $0x138] sm:$0xf]
      %v501 = vld [vmem:[%s3 + $0x13c] sm:$0xf]
      %v502 = vld [vmem:[%s3 + $0x140] sm:$0xf]
      %v503 = vld [vmem:[%s3 + $0x144] sm:$0xf]
      %v504 = vld [vmem:[%s3 + $0x148] sm:$0xf]
      %v505 = vld [vmem:[%s3 + $0x14c] sm:$0xf]
      %v506 = vld [vmem:[%s3 + $0x150] sm:$0xf]
      %v507 = vld [vmem:[%s3 + $0x154] sm:$0xf]
      %v508 = vld [vmem:[%s3 + $0x158] sm:$0xf]
      %v509 = vld [vmem:[%s3 + $0x15c] sm:$0xf]
      %v510 = vld [vmem:[%s3 + $0x160] sm:$0xf]
      %v511 = vld [vmem:[%s3 + $0x164] sm:$0xf]
      %v512 = vld [vmem:[%s3 + $0x168] sm:$0xf]
      %v513 = vld [vmem:[%s3 + $0x16c] sm:$0xf]
      %v514 = vld [vmem:[%s3 + $0x170] sm:$0xf]
      %v515 = vld [vmem:[%s3 + $0x174] sm:$0xf]
      %v516 = vld [vmem:[%s3 + $0x178] sm:$0xf]
      %v517 = vld [vmem:[%s3 + $0x17c] sm:$0xf]
      %v518 = vld [vmem:[%s3 + $0x180] sm:$0xf]
      %v519 = vld [vmem:[%s3 + $0x184] sm:$0xf]
      %v520 = vld [vmem:[%s3 + $0x188] sm:$0xf]
      %v521 = vld [vmem:[%s3 + $0x18c] sm:$0xf]
      %v522 = vld [vmem:[%s3 + $0x190] sm:$0xf]
      %v523 = vld [vmem:[%s3 + $0x194] sm:$0xf]
      %v524 = vld [vmem:[%s3 + $0x198] sm:$0xf]
      %v525 = vld [vmem:[%s3 + $0x19c] sm:$0xf]
      %v526 = vld [vmem:[%s3 + $0x1a0] sm:$0xf]
      %v527 = vld [vmem:[%s3 + $0x1a4] sm:$0xf]
      %v528 = vld [vmem:[%s3 + $0x1a8] sm:$0xf]
      %v529 = vld [vmem:[%s3 + $0x1ac] sm:$0xf]
      %v530 = vld [vmem:[%s3 + $0x1b0] sm:$0xf]
      %v531 = vld [vmem:[%s3 + $0x1b4] sm:$0xf]
      %v532 = vld [vmem:[%s3 + $0x1b8] sm:$0xf]
      %v533 = vld [vmem:[%s3 + $0x1bc] sm:$0xf]
      %v534 = vld [vmem:[%s3 + $0x1c0] sm:$0xf]
      %v535 = vld [vmem:[%s3 + $0x1c4] sm:$0xf]
      %v536 = vld [vmem:[%s3 + $0x1c8] sm:$0xf]
      %v537 = vld [vmem:[%s3 + $0x1cc] sm:$0xf]
      %v538 = vld [vmem:[%s3 + $0x1d0] sm:$0xf]
      %v539 = vld [vmem:[%s3 + $0x1d4] sm:$0xf]
      %v540 = vld [vmem:[%s3 + $0x1d8] sm:$0xf]
      %v541 = vld [vmem:[%s3 + $0x1dc] sm:$0xf]
      %v542 = vld [vmem:[%s3 + $0x1e0] sm:$0xf]
      %v543 = vld [vmem:[%s3 + $0x1e4] sm:$0xf]
      %v544 = vld [vmem:[%s3 + $0x1e8] sm:$0xf]
      %v545 = vld [vmem:[%s3 + $0x1ec] sm:$0xf]
      %v546 = vld [vmem:[%s3 + $0x1f0] sm:$0xf]
      %v547 = vld [vmem:[%s3 + $0x1f4] sm:$0xf]
      %v548 = vld [vmem:[%s3 + $0x1f8] sm:$0xf]
      %v549 = vld [vmem:[%s3 + $0x1fc] sm:$0xf]
      %v550 = vld [vmem:[%s3 + $0x200] sm:$0xf]
      %v551 = vld [vmem:[%s3 + $0x204] sm:$0xf]
      %v552 = vld [vmem:[%s3 + $0x208] sm:$0xf]
      %v553 = vld [vmem:[%s3 + $0x20c] sm:$0xf]
      %v554 = vld [vmem:[%s3 + $0x210] sm:$0xf]
      %v555 = vld [vmem:[%s3 + $0x214] sm:$0xf]
      %v556 = vld [vmem:[%s3 + $0x218] sm:$0xf]
      %v557 = vld [vmem:[%s3 + $0x21c] sm:$0xf]
      %v558 = vld [vmem:[%s3 + $0x220] sm:$0xf]
      %v559 = vld [vmem:[%s3 + $0x224] sm:$0xf]
      %v560 = vld [vmem:[%s3 + $0x228] sm:$0xf]
      %v561 = vld [vmem:[%s3 + $0x22c] sm:$0xf]
      %v562 = vld [vmem:[%s3 + $0x230] sm:$0xf]
      %v563 = vld [vmem:[%s3 + $0x234] sm:$0xf]
      %v564 = vld [vmem:[%s3 + $0x238] sm:$0xf]
      %v565 = vld [vmem:[%s3 + $0x23c] sm:$0xf]
      %v710 = vunpack.c.l.b16 %v422
      %v711 = vunpack.c.l.b16 %v423
      %v712 = vunpack.c.l.b16 %v424
      %v713 = vunpack.c.l.b16 %v425
      %v714 = vunpack.c.l.b16 %v426
      %v715 = vunpack.c.l.b16 %v427
      %v716 = vunpack.c.l.b16 %v428
      %v717 = vunpack.c.l.b16 %v429
      %v718 = vunpack.c.l.b16 %v430
      %v719 = vunpack.c.l.b16 %v431
      %v720 = vunpack.c.l.b16 %v432
      %v721 = vunpack.c.l.b16 %v433
      %v722 = vunpack.c.l.b16 %v434
      %v723 = vunpack.c.l.b16 %v435
      %v724 = vunpack.c.l.b16 %v436
      %v725 = vunpack.c.l.b16 %v437
      %v726 = vunpack.c.l.b16 %v438
      %v727 = vunpack.c.l.b16 %v439
      %v728 = vunpack.c.l.b16 %v440
      %v729 = vunpack.c.l.b16 %v441
      %v730 = vunpack.c.l.b16 %v442
      %v731 = vunpack.c.l.b16 %v443
      %v732 = vunpack.c.l.b16 %v444
      %v733 = vunpack.c.l.b16 %v445
      %v734 = vunpack.c.l.b16 %v446
      %v735 = vunpack.c.l.b16 %v447
      %v736 = vunpack.c.l.b16 %v448
      %v737 = vunpack.c.l.b16 %v449
      %v738 = vunpack.c.l.b16 %v450
      %v739 = vunpack.c.l.b16 %v451
      %v740 = vunpack.c.l.b16 %v452
      %v741 = vunpack.c.l.b16 %v453
      %v742 = vunpack.c.l.b16 %v454
      %v743 = vunpack.c.l.b16 %v455
      %v744 = vunpack.c.l.b16 %v456
      %v745 = vunpack.c.l.b16 %v457
      %v746 = vunpack.c.l.b16 %v458
      %v747 = vunpack.c.l.b16 %v459
      %v748 = vunpack.c.l.b16 %v460
      %v749 = vunpack.c.l.b16 %v461
      %v750 = vunpack.c.l.b16 %v462
      %v751 = vunpack.c.l.b16 %v463
      %v752 = vunpack.c.l.b16 %v464
      %v753 = vunpack.c.l.b16 %v465
      %v754 = vunpack.c.l.b16 %v466
      %v755 = vunpack.c.l.b16 %v467
      %v756 = vunpack.c.l.b16 %v468
      %v757 = vunpack.c.l.b16 %v469
      %v758 = vunpack.c.l.b16 %v470
      %v759 = vunpack.c.l.b16 %v471
      %v760 = vunpack.c.l.b16 %v472
      %v761 = vunpack.c.l.b16 %v473
      %v762 = vunpack.c.l.b16 %v474
      %v763 = vunpack.c.l.b16 %v475
      %v764 = vunpack.c.l.b16 %v476
      %v765 = vunpack.c.l.b16 %v477
      %v766 = vunpack.c.l.b16 %v478
      %v767 = vunpack.c.l.b16 %v479
      %v768 = vunpack.c.l.b16 %v480
      %v769 = vunpack.c.l.b16 %v481
      %v770 = vunpack.c.l.b16 %v482
      %v771 = vunpack.c.l.b16 %v483
      %v772 = vunpack.c.l.b16 %v484
      %v773 = vunpack.c.l.b16 %v485
      %v774 = vunpack.c.l.b16 %v486
      %v775 = vunpack.c.l.b16 %v487
      %v776 = vunpack.c.l.b16 %v488
      %v777 = vunpack.c.l.b16 %v489
      %v778 = vunpack.c.l.b16 %v490
      %v779 = vunpack.c.l.b16 %v491
      %v780 = vunpack.c.l.b16 %v492
      %v781 = vunpack.c.l.b16 %v493
      %v782 = vunpack.c.l.b16 %v494
      %v783 = vunpack.c.l.b16 %v495
      %v784 = vunpack.c.l.b16 %v496
      %v785 = vunpack.c.l.b16 %v497
      %v786 = vunpack.c.l.b16 %v498
      %v787 = vunpack.c.l.b16 %v499
      %v788 = vunpack.c.l.b16 %v500
      %v789 = vunpack.c.l.b16 %v501
      %v790 = vunpack.c.l.b16 %v502
      %v791 = vunpack.c.l.b16 %v503
      %v792 = vunpack.c.l.b16 %v504
      %v793 = vunpack.c.l.b16 %v505
      %v794 = vunpack.c.l.b16 %v506
      %v795 = vunpack.c.l.b16 %v507
      %v796 = vunpack.c.l.b16 %v508
      %v797 = vunpack.c.l.b16 %v509
      %v798 = vunpack.c.l.b16 %v510
      %v799 = vunpack.c.l.b16 %v511
      %v800 = vunpack.c.l.b16 %v512
      %v801 = vunpack.c.l.b16 %v513
      %v802 = vunpack.c.l.b16 %v514
      %v803 = vunpack.c.l.b16 %v515
      %v804 = vunpack.c.l.b16 %v516
      %v805 = vunpack.c.l.b16 %v517
      %v806 = vunpack.c.l.b16 %v518
      %v807 = vunpack.c.l.b16 %v519
      %v808 = vunpack.c.l.b16 %v520
      %v809 = vunpack.c.l.b16 %v521
      %v810 = vunpack.c.l.b16 %v522
      %v811 = vunpack.c.l.b16 %v523
      %v812 = vunpack.c.l.b16 %v524
      %v813 = vunpack.c.l.b16 %v525
      %v814 = vunpack.c.l.b16 %v526
      %v815 = vunpack.c.l.b16 %v527
      %v816 = vunpack.c.l.b16 %v528
      %v817 = vunpack.c.l.b16 %v529
      %v818 = vunpack.c.l.b16 %v530
      %v819 = vunpack.c.l.b16 %v531
      %v820 = vunpack.c.l.b16 %v532
      %v821 = vunpack.c.l.b16 %v533
      %v822 = vunpack.c.l.b16 %v534
      %v823 = vunpack.c.l.b16 %v535
      %v824 = vunpack.c.l.b16 %v536
      %v825 = vunpack.c.l.b16 %v537
      %v826 = vunpack.c.l.b16 %v538
      %v827 = vunpack.c.l.b16 %v539
      %v828 = vunpack.c.l.b16 %v540
      %v829 = vunpack.c.l.b16 %v541
      %v830 = vunpack.c.l.b16 %v542
      %v831 = vunpack.c.l.b16 %v543
      %v832 = vunpack.c.l.b16 %v544
      %v833 = vunpack.c.l.b16 %v545
      %v834 = vunpack.c.l.b16 %v546
      %v835 = vunpack.c.l.b16 %v547
      %v836 = vunpack.c.l.b16 %v548
      %v837 = vunpack.c.l.b16 %v549
      %v838 = vunpack.c.l.b16 %v550
      %v839 = vunpack.c.l.b16 %v551
      %v840 = vunpack.c.l.b16 %v552
      %v841 = vunpack.c.l.b16 %v553
      %v842 = vunpack.c.l.b16 %v554
      %v843 = vunpack.c.l.b16 %v555
      %v844 = vunpack.c.l.b16 %v556
      %v845 = vunpack.c.l.b16 %v557
      %v846 = vunpack.c.l.b16 %v558
      %v847 = vunpack.c.l.b16 %v559
      %v848 = vunpack.c.l.b16 %v560
      %v849 = vunpack.c.l.b16 %v561
      %v850 = vunpack.c.l.b16 %v562
      %v851 = vunpack.c.l.b16 %v563
      %v852 = vunpack.c.l.b16 %v564
      %v853 = vunpack.c.l.b16 %v565
      %v854 = vpack.c.b16 %v711, %v710
      %v855 = vpack.c.b16 %v713, %v712
      %v856 = vpack.c.b16 %v715, %v714
      %v857 = vpack.c.b16 %v717, %v716
      %v858 = vpack.c.b16 %v719, %v718
      %v859 = vpack.c.b16 %v721, %v720
      %v860 = vpack.c.b16 %v723, %v722
      %v861 = vpack.c.b16 %v725, %v724
      %v862 = vpack.c.b16 %v727, %v726
      %v863 = vpack.c.b16 %v729, %v728
      %v864 = vpack.c.b16 %v731, %v730
      %v865 = vpack.c.b16 %v733, %v732
      %v866 = vpack.c.b16 %v735, %v734
      %v867 = vpack.c.b16 %v737, %v736
      %v868 = vpack.c.b16 %v739, %v738
      %v869 = vpack.c.b16 %v741, %v740
      %v870 = vpack.c.b16 %v743, %v742
      %v871 = vpack.c.b16 %v745, %v744
      %v872 = vpack.c.b16 %v747, %v746
      %v873 = vpack.c.b16 %v749, %v748
      %v874 = vpack.c.b16 %v751, %v750
      %v875 = vpack.c.b16 %v753, %v752
      %v876 = vpack.c.b16 %v755, %v754
      %v877 = vpack.c.b16 %v757, %v756
      %v878 = vpack.c.b16 %v759, %v758
      %v879 = vpack.c.b16 %v761, %v760
      %v880 = vpack.c.b16 %v763, %v762
      %v881 = vpack.c.b16 %v765, %v764
      %v882 = vpack.c.b16 %v767, %v766
      %v883 = vpack.c.b16 %v769, %v768
      %v884 = vpack.c.b16 %v771, %v770
      %v885 = vpack.c.b16 %v773, %v772
      %v886 = vpack.c.b16 %v775, %v774
      %v887 = vpack.c.b16 %v777, %v776
      %v888 = vpack.c.b16 %v779, %v778
      %v889 = vpack.c.b16 %v781, %v780
      %v890 = vpack.c.b16 %v783, %v782
      %v891 = vpack.c.b16 %v785, %v784
      %v892 = vpack.c.b16 %v787, %v786
      %v893 = vpack.c.b16 %v789, %v788
      %v894 = vpack.c.b16 %v791, %v790
      %v895 = vpack.c.b16 %v793, %v792
      %v896 = vpack.c.b16 %v795, %v794
      %v897 = vpack.c.b16 %v797, %v796
      %v898 = vpack.c.b16 %v799, %v798
      %v899 = vpack.c.b16 %v801, %v800
      %v900 = vpack.c.b16 %v803, %v802
      %v901 = vpack.c.b16 %v805, %v804
      %v902 = vpack.c.b16 %v807, %v806
      %v903 = vpack.c.b16 %v809, %v808
      %v904 = vpack.c.b16 %v811, %v810
      %v905 = vpack.c.b16 %v813, %v812
      %v906 = vpack.c.b16 %v815, %v814
      %v907 = vpack.c.b16 %v817, %v816
      %v908 = vpack.c.b16 %v819, %v818
      %v909 = vpack.c.b16 %v821, %v820
      %v910 = vpack.c.b16 %v823, %v822
      %v911 = vpack.c.b16 %v825, %v824
      %v912 = vpack.c.b16 %v827, %v826
      %v913 = vpack.c.b16 %v829, %v828
      %v914 = vpack.c.b16 %v831, %v830
      %v915 = vpack.c.b16 %v833, %v832
      %v916 = vpack.c.b16 %v835, %v834
      %v917 = vpack.c.b16 %v837, %v836
      %v918 = vpack.c.b16 %v839, %v838
      %v919 = vpack.c.b16 %v841, %v840
      %v920 = vpack.c.b16 %v843, %v842
      %v921 = vpack.c.b16 %v845, %v844
      %v922 = vpack.c.b16 %v847, %v846
      %v923 = vpack.c.b16 %v849, %v848
      %v924 = vpack.c.b16 %v851, %v850
      %v925 = vpack.c.b16 %v853, %v852
      %998 = vmatprep.subr.bf16.mxu0 0
      %999 = vmatpush1.bf16.msra.mxu0 %v861
      %1000 = vmatprep.subr.bf16.mxu0 0
      %1001 = vmatpush1.bf16.msra.mxu0 %v860
      %1002 = vmatprep.subr.bf16.mxu0 0
      %1003 = vmatpush1.bf16.msra.mxu0 %v859
      %1004 = vmatprep.subr.bf16.mxu0 0
      %1005 = vmatpush1.bf16.msra.mxu0 %v858
      %1006 = vmatprep.subr.bf16.mxu0 0
      %1007 = vmatpush1.bf16.msra.mxu0 %v857
      %1008 = vmatprep.subr.bf16.mxu0 0
      %1009 = vmatpush1.bf16.msra.mxu0 %v856
      %1010 = vmatprep.subr.bf16.mxu0 0
      %1011 = vmatpush1.bf16.msra.mxu0 %v855
      %1012 = vmatprep.subr.bf16.mxu0 0
      %1013 = vmatpush1.bf16.msra.mxu0 %v854
      %1014 = vmatprep.subr.bf16.mxu0 0
      %1015 = vmatpush2.bf16.msra.mxu0 %v869
      %1016 = vmatprep.subr.bf16.mxu0 0
      %1017 = vmatpush2.bf16.msra.mxu0 %v868
      %1018 = vmatprep.subr.bf16.mxu0 0
      %1019 = vmatpush2.bf16.msra.mxu0 %v867
      %1020 = vmatprep.subr.bf16.mxu0 0
      %1021 = vmatpush2.bf16.msra.mxu0 %v866
      %1022 = vmatprep.subr.bf16.mxu0 0
      %1023 = vmatpush2.bf16.msra.mxu0 %v865
      %1024 = vmatprep.subr.bf16.mxu0 0
      %1025 = vmatpush2.bf16.msra.mxu0 %v864
      %1026 = vmatprep.subr.bf16.mxu0 0
      %1027 = vmatpush2.bf16.msra.mxu0 %v863
      %1028 = vmatprep.subr.bf16.mxu0 0
      %1029 = vmatpush2.bf16.msra.mxu0 %v862
      %1030 = vmatprep.mubr.bf16.mxu0 %v387
      %1031 = vmatmul.mubr.bf16.gmra.mxu0 %v386
      %v1032 = vpop.f32.mrf.mxu0
      %v1033 = vadd.f32 0.0, %v1032
      %v1034 = vpop.f32.mrf.mxu0
      %v1035 = vpop.f32.mrf.mxu0
      %v1036 = vadd.f32 0.0, %v1035
      %v1037 = vpop.f32.mrf.mxu0
      %1038 = vmatprep.mubr.bf16.mxu0 %v396
      %1039 = vmatmul.mubr.bf16.gmra.mxu0 %v395
      %v1040 = vpop.f32.mrf.mxu0
      %v1041 = vadd.f32 0.0, %v1040
      %v1042 = vpop.f32.mrf.mxu0
      %v1043 = vpop.f32.mrf.mxu0
      %v1044 = vadd.f32 0.0, %v1043
      %v1045 = vpop.f32.mrf.mxu0
      %1046 = vmatprep.mubr.bf16.mxu0 %v405
      %1047 = vmatmul.mubr.bf16.gmra.mxu0 %v404
      %v1048 = vpop.f32.mrf.mxu0
      %v1049 = vadd.f32 0.0, %v1048
      %v1050 = vpop.f32.mrf.mxu0
      %v1051 = vpop.f32.mrf.mxu0
      %v1052 = vadd.f32 0.0, %v1051
      %v1053 = vpop.f32.mrf.mxu0
      %1054 = vmatprep.mubr.bf16.mxu0 %v414
      %1055 = vmatmul.mubr.bf16.gmra.mxu0 %v413
      %v1056 = vpop.f32.mrf.mxu0
      %v1057 = vadd.f32 0.0, %v1056
      %v1058 = vpop.f32.mrf.mxu0
      %v1059 = vpop.f32.mrf.mxu0
      %v1060 = vadd.f32 0.0, %v1059
      %v1061 = vpop.f32.mrf.mxu0
      %1062 = vdwg.mxu0
      %1063 = vmatprep.subr.bf16.mxu0 0
      %1064 = vmatpush1.bf16.msra.mxu0 %v877
      %1065 = vmatprep.subr.bf16.mxu0 0
      %1066 = vmatpush1.bf16.msra.mxu0 %v876
      %1067 = vmatprep.subr.bf16.mxu0 0
      %1068 = vmatpush1.bf16.msra.mxu0 %v875
      %1069 = vmatprep.subr.bf16.mxu0 0
      %1070 = vmatpush1.bf16.msra.mxu0 %v874
      %1071 = vmatprep.subr.bf16.mxu0 0
      %1072 = vmatpush1.bf16.msra.mxu0 %v873
      %1073 = vmatprep.subr.bf16.mxu0 0
      %1074 = vmatpush1.bf16.msra.mxu0 %v872
      %1075 = vmatprep.subr.bf16.mxu0 0
      %1076 = vmatpush1.bf16.msra.mxu0 %v871
      %1077 = vmatprep.subr.bf16.mxu0 0
      %1078 = vmatpush1.bf16.msra.mxu0 %v870
      %1079 = vmatprep.subr.bf16.mxu0 0
      %1080 = vmatpush2.bf16.msra.mxu0 %v885
      %1081 = vmatprep.subr.bf16.mxu0 0
      %1082 = vmatpush2.bf16.msra.mxu0 %v884
      %1083 = vmatprep.subr.bf16.mxu0 0
      %1084 = vmatpush2.bf16.msra.mxu0 %v883
      %1085 = vmatprep.subr.bf16.mxu0 0
      %1086 = vmatpush2.bf16.msra.mxu0 %v882
      %1087 = vmatprep.subr.bf16.mxu0 0
      %1088 = vmatpush2.bf16.msra.mxu0 %v881
      %1089 = vmatprep.subr.bf16.mxu0 0
      %1090 = vmatpush2.bf16.msra.mxu0 %v880
      %1091 = vmatprep.subr.bf16.mxu0 0
      %1092 = vmatpush2.bf16.msra.mxu0 %v879
      %1093 = vmatprep.subr.bf16.mxu0 0
      %1094 = vmatpush2.bf16.msra.mxu0 %v878
      %1095 = vmatprep.mubr.bf16.mxu0 %v389
      %1096 = vmatmul.mubr.bf16.gmra.mxu0 %v388
      %v1097 = vpop.f32.mrf.mxu0
      %v1098 = vadd.f32 %v1033, %v1097
      %v1099 = vpop.f32.mrf.mxu0
      %v1100 = vpop.f32.mrf.mxu0
      %v1101 = vadd.f32 %v1036, %v1100
      %v1102 = vpop.f32.mrf.mxu0
      %1103 = vmatprep.mubr.bf16.mxu0 %v398
      %1104 = vmatmul.mubr.bf16.gmra.mxu0 %v397
      %v1105 = vpop.f32.mrf.mxu0
      %v1106 = vadd.f32 %v1041, %v1105
      %v1107 = vpop.f32.mrf.mxu0
      %v1108 = vpop.f32.mrf.mxu0
      %v1109 = vadd.f32 %v1044, %v1108
      %v1110 = vpop.f32.mrf.mxu0
      %1111 = vmatprep.mubr.bf16.mxu0 %v407
      %1112 = vmatmul.mubr.bf16.gmra.mxu0 %v406
      %v1113 = vpop.f32.mrf.mxu0
      %v1114 = vadd.f32 %v1049, %v1113
      %v1115 = vpop.f32.mrf.mxu0
      %v1116 = vpop.f32.mrf.mxu0
      %v1117 = vadd.f32 %v1052, %v1116
      %v1118 = vpop.f32.mrf.mxu0
      %1119 = vmatprep.mubr.bf16.mxu0 %v416
      %1120 = vmatmul.mubr.bf16.gmra.mxu0 %v415
      %v1121 = vpop.f32.mrf.mxu0
      %v1122 = vadd.f32 %v1057, %v1121
      %v1123 = vpop.f32.mrf.mxu0
      %v1124 = vpop.f32.mrf.mxu0
      %v1125 = vadd.f32 %v1060, %v1124
      %v1126 = vpop.f32.mrf.mxu0
      %1127 = vdwg.mxu0
      %1128 = vmatprep.subr.bf16.mxu0 0
      %1129 = vmatpush1.bf16.msra.mxu0 %v893
      %1130 = vmatprep.subr.bf16.mxu0 0
      %1131 = vmatpush1.bf16.msra.mxu0 %v892
      %1132 = vmatprep.subr.bf16.mxu0 0
      %1133 = vmatpush1.bf16.msra.mxu0 %v891
      %1134 = vmatprep.subr.bf16.mxu0 0
      %1135 = vmatpush1.bf16.msra.mxu0 %v890
      %1136 = vmatprep.subr.bf16.mxu0 0
      %1137 = vmatpush1.bf16.msra.mxu0 %v889
      %1138 = vmatprep.subr.bf16.mxu0 0
      %1139 = vmatpush1.bf16.msra.mxu0 %v888
      %1140 = vmatprep.subr.bf16.mxu0 0
      %1141 = vmatpush1.bf16.msra.mxu0 %v887
      %1142 = vmatprep.subr.bf16.mxu0 0
      %1143 = vmatpush1.bf16.msra.mxu0 %v886
      %1144 = vmatprep.subr.bf16.mxu0 0
      %1145 = vmatpush2.bf16.msra.mxu0 %v901
      %1146 = vmatprep.subr.bf16.mxu0 0
      %1147 = vmatpush2.bf16.msra.mxu0 %v900
      %1148 = vmatprep.subr.bf16.mxu0 0
      %1149 = vmatpush2.bf16.msra.mxu0 %v899
      %1150 = vmatprep.subr.bf16.mxu0 0
      %1151 = vmatpush2.bf16.msra.mxu0 %v898
      %1152 = vmatprep.subr.bf16.mxu0 0
      %1153 = vmatpush2.bf16.msra.mxu0 %v897
      %1154 = vmatprep.subr.bf16.mxu0 0
      %1155 = vmatpush2.bf16.msra.mxu0 %v896
      %1156 = vmatprep.subr.bf16.mxu0 0
      %1157 = vmatpush2.bf16.msra.mxu0 %v895
      %1158 = vmatprep.subr.bf16.mxu0 0
      %1159 = vmatpush2.bf16.msra.mxu0 %v894
      %1160 = vmatprep.mubr.bf16.mxu0 %v391
      %1161 = vmatmul.mubr.bf16.gmra.mxu0 %v390
      %v1162 = vpop.f32.mrf.mxu0
      %v1163 = vadd.f32 %v1098, %v1162
      %v1164 = vpop.f32.mrf.mxu0
      %v1165 = vpop.f32.mrf.mxu0
      %v1166 = vadd.f32 %v1101, %v1165
      %v1167 = vpop.f32.mrf.mxu0
      %1168 = vmatprep.mubr.bf16.mxu0 %v400
      %1169 = vmatmul.mubr.bf16.gmra.mxu0 %v399
      %v1170 = vpop.f32.mrf.mxu0
      %v1171 = vadd.f32 %v1106, %v1170
      %v1172 = vpop.f32.mrf.mxu0
      %v1173 = vpop.f32.mrf.mxu0
      %v1174 = vadd.f32 %v1109, %v1173
      %v1175 = vpop.f32.mrf.mxu0
      %1176 = vmatprep.mubr.bf16.mxu0 %v409
      %1177 = vmatmul.mubr.bf16.gmra.mxu0 %v408
      %v1178 = vpop.f32.mrf.mxu0
      %v1179 = vadd.f32 %v1114, %v1178
      %v1180 = vpop.f32.mrf.mxu0
      %v1181 = vpop.f32.mrf.mxu0
      %v1182 = vadd.f32 %v1117, %v1181
      %v1183 = vpop.f32.mrf.mxu0
      %1184 = vmatprep.mubr.bf16.mxu0 %v418
      %1185 = vmatmul.mubr.bf16.gmra.mxu0 %v417
      %v1186 = vpop.f32.mrf.mxu0
      %v1187 = vadd.f32 %v1122, %v1186
      %v1188 = vpop.f32.mrf.mxu0
      %v1189 = vpop.f32.mrf.mxu0
      %v1190 = vadd.f32 %v1125, %v1189
      %v1191 = vpop.f32.mrf.mxu0
      %1192 = vdwg.mxu0
      %1193 = vmatprep.subr.bf16.mxu0 0
      %1194 = vmatpush1.bf16.msra.mxu0 %v909
      %1195 = vmatprep.subr.bf16.mxu0 0
      %1196 = vmatpush1.bf16.msra.mxu0 %v908
      %1197 = vmatprep.subr.bf16.mxu0 0
      %1198 = vmatpush1.bf16.msra.mxu0 %v907
      %1199 = vmatprep.subr.bf16.mxu0 0
      %1200 = vmatpush1.bf16.msra.mxu0 %v906
      %1201 = vmatprep.subr.bf16.mxu0 0
      %1202 = vmatpush1.bf16.msra.mxu0 %v905
      %1203 = vmatprep.subr.bf16.mxu0 0
      %1204 = vmatpush1.bf16.msra.mxu0 %v904
      %1205 = vmatprep.subr.bf16.mxu0 0
      %1206 = vmatpush1.bf16.msra.mxu0 %v903
      %1207 = vmatprep.subr.bf16.mxu0 0
      %1208 = vmatpush1.bf16.msra.mxu0 %v902
      %1209 = vmatprep.subr.bf16.mxu0 0
      %1210 = vmatpush2.bf16.msra.mxu0 %v917
      %1211 = vmatprep.subr.bf16.mxu0 0
      %1212 = vmatpush2.bf16.msra.mxu0 %v916
      %1213 = vmatprep.subr.bf16.mxu0 0
      %1214 = vmatpush2.bf16.msra.mxu0 %v915
      %1215 = vmatprep.subr.bf16.mxu0 0
      %1216 = vmatpush2.bf16.msra.mxu0 %v914
      %1217 = vmatprep.subr.bf16.mxu0 0
      %1218 = vmatpush2.bf16.msra.mxu0 %v913
      %1219 = vmatprep.subr.bf16.mxu0 0
      %1220 = vmatpush2.bf16.msra.mxu0 %v912
      %1221 = vmatprep.subr.bf16.mxu0 0
      %1222 = vmatpush2.bf16.msra.mxu0 %v911
      %1223 = vmatprep.subr.bf16.mxu0 0
      %1224 = vmatpush2.bf16.msra.mxu0 %v910
      %1225 = vmatprep.mubr.bf16.mxu0 %v393
      %1226 = vmatmul.mubr.bf16.gmra.mxu0 %v392
      %v1227 = vpop.f32.mrf.mxu0
      %v1228 = vadd.f32 %v1163, %v1227
      %v1229 = vpop.f32.mrf.mxu0
      %v1230 = vpop.f32.mrf.mxu0
      %v1231 = vadd.f32 %v1166, %v1230
      %v1232 = vpop.f32.mrf.mxu0
      %1233 = vmatprep.mubr.bf16.mxu0 %v402
      %1234 = vmatmul.mubr.bf16.gmra.mxu0 %v401
      %v1235 = vpop.f32.mrf.mxu0
      %v1236 = vadd.f32 %v1171, %v1235
      %v1237 = vpop.f32.mrf.mxu0
      %v1238 = vpop.f32.mrf.mxu0
      %v1239 = vadd.f32 %v1174, %v1238
      %v1240 = vpop.f32.mrf.mxu0
      %1241 = vmatprep.mubr.bf16.mxu0 %v411
      %1242 = vmatmul.mubr.bf16.gmra.mxu0 %v410
      %v1243 = vpop.f32.mrf.mxu0
      %v1244 = vadd.f32 %v1179, %v1243
      %v1245 = vpop.f32.mrf.mxu0
      %v1246 = vpop.f32.mrf.mxu0
      %v1247 = vadd.f32 %v1182, %v1246
      %v1248 = vpop.f32.mrf.mxu0
      %1249 = vmatprep.mubr.bf16.mxu0 %v420
      %1250 = vmatmul.mubr.bf16.gmra.mxu0 %v419
      %v1251 = vpop.f32.mrf.mxu0
      %v1252 = vadd.f32 %v1187, %v1251
      %v1253 = vpop.f32.mrf.mxu0
      %v1254 = vpop.f32.mrf.mxu0
      %v1255 = vadd.f32 %v1190, %v1254
      %v1256 = vpop.f32.mrf.mxu0
      %1257 = vdwg.mxu0
      %1258 = vmatprep.subr.bf16.mxu0 0
      %1259 = vmatpush1.bf16.msra.mxu0 %v925
      %1260 = vmatprep.subr.bf16.mxu0 0
      %1261 = vmatpush1.bf16.msra.mxu0 %v924
      %1262 = vmatprep.subr.bf16.mxu0 0
      %1263 = vmatpush1.bf16.msra.mxu0 %v923
      %1264 = vmatprep.subr.bf16.mxu0 0
      %1265 = vmatpush1.bf16.msra.mxu0 %v922
      %1266 = vmatprep.subr.bf16.mxu0 0
      %1267 = vmatpush1.bf16.msra.mxu0 %v921
      %1268 = vmatprep.subr.bf16.mxu0 0
      %1269 = vmatpush1.bf16.msra.mxu0 %v920
      %1270 = vmatprep.subr.bf16.mxu0 0
      %1271 = vmatpush1.bf16.msra.mxu0 %v919
      %1272 = vmatprep.subr.bf16.mxu0 0
      %1273 = vmatpush1.bf16.msra.mxu0 %v918
      %1274 = vmatprep.subr.bf16.mxu0 0
      %1275 = vmatpush2.bf16.msra.mxu0 0
      %1276 = vmatprep.subr.bf16.mxu0 0
      %1277 = vmatpush2.bf16.msra.mxu0 0
      %1278 = vmatprep.subr.bf16.mxu0 0
      %1279 = vmatpush2.bf16.msra.mxu0 0
      %1280 = vmatprep.subr.bf16.mxu0 0
      %1281 = vmatpush2.bf16.msra.mxu0 0
      %1282 = vmatprep.subr.bf16.mxu0 0
      %1283 = vmatpush2.bf16.msra.mxu0 0
      %1284 = vmatprep.subr.bf16.mxu0 0
      %1285 = vmatpush2.bf16.msra.mxu0 0
      %1286 = vmatprep.subr.bf16.mxu0 0
      %1287 = vmatpush2.bf16.msra.mxu0 0
      %1288 = vmatprep.subr.bf16.mxu0 0
      %1289 = vmatpush2.bf16.msra.mxu0 0
      %1290 = vmatprep.mubr.bf16.mxu0 0
      %1291 = vmatmul.mubr.bf16.gmra.mxu0 %v394
      %v1292 = vpop.f32.mrf.mxu0
      %v1293 = vadd.f32 %v1228, %v1292
      %v1294 = vpop.f32.mrf.mxu0
      %v1295 = vpop.f32.mrf.mxu0
      %v1296 = vadd.f32 %v1231, %v1295
      %v1297 = vpop.f32.mrf.mxu0
      %1298 = vmatprep.mubr.bf16.mxu0 0
      %1299 = vmatmul.mubr.bf16.gmra.mxu0 %v403
      %v1300 = vpop.f32.mrf.mxu0
      %v1301 = vadd.f32 %v1236, %v1300
      %v1302 = vpop.f32.mrf.mxu0
      %v1303 = vpop.f32.mrf.mxu0
      %v1304 = vadd.f32 %v1239, %v1303
      %v1305 = vpop.f32.mrf.mxu0
      %1306 = vmatprep.mubr.bf16.mxu0 0
      %1307 = vmatmul.mubr.bf16.gmra.mxu0 %v412
      %v1308 = vpop.f32.mrf.mxu0
      %v1309 = vadd.f32 %v1244, %v1308
      %v1310 = vpop.f32.mrf.mxu0
      %v1311 = vpop.f32.mrf.mxu0
      %v1312 = vadd.f32 %v1247, %v1311
      %v1313 = vpop.f32.mrf.mxu0
      %1314 = vmatprep.mubr.bf16.mxu0 0
      %1315 = vmatmul.mubr.bf16.gmra.mxu0 %v421
      %v1316 = vpop.f32.mrf.mxu0
      %v1317 = vadd.f32 %v1252, %v1316
      %v1318 = vpop.f32.mrf.mxu0
      %v1319 = vpop.f32.mrf.mxu0
      %v1320 = vadd.f32 %v1255, %v1319
      %v1321 = vpop.f32.mrf.mxu0
      %1322 = vdwg.mxu0
      %1323 = vst [vmem:[%s231] sm:$0xff] %v1293
      %1324 = vst [vmem:[%s231 + $0x8] sm:$0xff] %v1296
      %1325 = vst [vmem:[%s231 + $0x10] sm:$0xff] %v1301
      %1326 = vst [vmem:[%s231 + $0x18] sm:$0xff] %v1304
      %1327 = vst [vmem:[%s231 + $0x20] sm:$0xff] %v1309
      %1328 = vst [vmem:[%s231 + $0x28] sm:$0xff] %v1312
      %1329 = vst [vmem:[%s231 + $0x30] sm:$0xff] %v1317
      %1330 = vst [vmem:[%s231 + $0x38] sm:$0xff] %v1320
      %v1331 = vadd.f32 %v1293, %v1296
      %v1332 = vadd.f32 %v1331, %v1301
      %v1333 = vadd.f32 %v1332, %v1304
      %v1334 = vadd.f32 %v1333, %v1309
      %v1335 = vadd.f32 %v1334, %v1312
      %v1336 = vadd.f32 %v1335, %v1317
      %v1337 = vadd.f32 %v1336, %v1320
      %v1338 = vrot.slane %v1337, 4
      %v1339 = vadd.f32 %v1337, %v1338
      %v1340 = vrot.slane %v1339, 2
      %v1341 = vadd.f32 %v1339, %v1340
      %v1342 = vrot.slane %v1341, 1
      %v1343 = vadd.f32 %v1341, %v1342
      %v1344 = vmul.f32 %v1293, %v1293
      %v1345 = vmul.f32 %v1296, %v1296
      %v1346 = vmul.f32 %v1301, %v1301
      %v1347 = vmul.f32 %v1304, %v1304
      %v1348 = vmul.f32 %v1309, %v1309
      %v1349 = vmul.f32 %v1312, %v1312
      %v1350 = vmul.f32 %v1317, %v1317
      %v1351 = vmul.f32 %v1320, %v1320
      %v1352 = vadd.f32 %v1344, %v1345
      %v1353 = vadd.f32 %v1352, %v1346
      %v1354 = vadd.f32 %v1353, %v1347
      %v1355 = vadd.f32 %v1354, %v1348
      %v1356 = vadd.f32 %v1355, %v1349
      %v1357 = vadd.f32 %v1356, %v1350
      %v1358 = vadd.f32 %v1357, %v1351
      %v1359 = vrot.slane %v1358, 4
      %v1360 = vadd.f32 %v1358, %v1359
      %v1361 = vrot.slane %v1360, 2
      %v1362 = vadd.f32 %v1360, %v1361
      %v1363 = vrot.slane %v1362, 1
      %v1364 = vadd.f32 %v1362, %v1363
      %vm1365 = vcmask 1040384
      %v1366 = vsel %vm1365, %v1343, %v1364
      %vm1367 = vcmask 1041408
      %v1368 = vsel %vm1367, %v1366, 0.0
      %1369 = vst [vmem:[%s235] sm:$0xff] %v1368
      %p1370 = scmp.lt.s32.totalorder %s17, 1
      %s1371 = scalar_select %p1370, %s17, 1
      %s1372 = smul.addr %s1371, 8
      %s1373 = smul.addr %s1372, 8
      %s1374 = scalar_lea.vmem %s4, %s1373
      %p1375 = scmp.lt.s32.totalorder %s17, 1
      %s1376 = scalar_select %p1375, %s17, 1
      %s1377 = smul.addr %s1376, 8
      %s1378 = scalar_lea.vmem %s5, %s1377
      // Predicated region
      $region37: #{res_block_forward.4} parent=35 // pred_check
        %p1379 = pneg %p124
      $region38: #{res_block_forward.4} parent=35 // pred_check_branch
        %1381 = sbr.rel (%p1379) target = $region40
      $region39: #{res_block_forward.4} parent=35 // pred_region
        _
      $region40: #{res_block_forward.4} parent=35 // pred_fallthru
        _
      // Predicated region
      $region41: #{res_block_forward.4} parent=35 // pred_check
        %p1382 = pneg %p150
      $region42: #{res_block_forward.4} parent=35 // pred_check_branch
        %1384 = sbr.rel (%p1382) target = $region44
      $region43: #{res_block_forward.4} parent=35 // pred_region
        _
      $region44: #{res_block_forward.4} parent=35 // pred_fallthru
        _
    $region36: #{res_block_forward.4} parent=5 // pred_fallthru
      _
    %p1385 = scmp.le.s32.totalorder 2, %s12
    // Predicated region
    $region45: #{res_block_forward.4} parent=5 // pred_check
      %p1386 = pneg %p1385
    $region46: #{res_block_forward.4} parent=5 // pred_check_branch
      %1388 = sbr.rel (%p1386) target = $region48
    $region47: #{res_block_forward.4} parent=5 // pred_region
      %s1389 = ssub.s32 %s12, 2
      // Predicated region
      $region49: #{res_block_forward.4} parent=47 // pred_check
        %p1390 = pneg %p130
      $region50: #{res_block_forward.4} parent=47 // pred_check_branch
        %1392 = sbr.rel (%p1390) target = $region52
      $region51: #{res_block_forward.4} parent=47 // pred_region
        %p1393 = scmp.lt.s32.totalorder %s18, 1
        %s1394 = scalar_select %p1393, %s18, 1
        %s1395 = smul.addr %s1394, 8
        %s1396 = smul.addr %s1395, 8
        %s1397 = scalar_lea.vmem %s4, %s1396
      $region52: #{res_block_forward.4} parent=47 // pred_fallthru
        _
      // Predicated region
      $region53: #{res_block_forward.4} parent=47 // pred_check
        %p1398 = pneg %p156
      $region54: #{res_block_forward.4} parent=47 // pred_check_branch
        %1400 = sbr.rel (%p1398) target = $region56
      $region55: #{res_block_forward.4} parent=47 // pred_region
        %p1401 = scmp.lt.s32.totalorder %s18, 1
        %s1402 = scalar_select %p1401, %s18, 1
        %s1403 = smul.addr %s1402, 8
        %s1404 = scalar_lea.vmem %s5, %s1403
      $region56: #{res_block_forward.4} parent=47 // pred_fallthru
        _
    $region48: #{res_block_forward.4} parent=5 // pred_fallthru
      _
  $region6: #{res_block_forward.4} parent=0 // loop_footer
    %s16 = sadd.s32 1, %s12
  $region7: #{res_block_forward.4} parent=0 // loop_footer_branch
    %11 = sbr.rel target = $region3
  $region8: #{res_block_forward.4} parent=0 // loop_exit
    _

</llo_original>
